<compile_context>
chip_gen: v5e
topology: v5e:2x2
jax: 0.10.0
libtpu: 0.0.40
codegen_flags: <defaults>
</compile_context>

<pallas_src>
import functools

import jax
import jax.numpy as jnp
from jax.experimental import pallas as pl
from jax.experimental.pallas import tpu as pltpu


def _zsl_fused_kernel(x_ref, ffn_wt_ref, att_wt_ref, att_b_ref, img_ref, out_ref):
    """Fused PointwiseFFN pooling + attention head for one block of TC classes.

    x_ref:      (W, D, TC)     bf16 text features, classes on the lane axis
    ffn_wt_ref: (K, D)         bf16 cluster-logit weight, transposed (bias dropped:
                               a per-cluster bias cancels exactly in the word softmax)
    att_wt_ref: (DIMG, K*D)    f32 attention projection weight, transposed (resident)
    att_b_ref:  (DIMG, 1)      f32 attention projection bias
    img_ref:    (B, DIMG)      f32 image features (resident)
    out_ref:    (B, TC)        scores for this class block (lane-dense store)
    """
    W, D, TC = x_ref.shape
    K = ffn_wt_ref.shape[0]

    x = x_ref[...]                              # (W, D, TC) bf16
    xf = x.astype(jnp.float32)                  # f32 copy for the VPU weighted sum

    # Cluster logits with classes on the lane axis: per word, (K, D) @ (D, TC) -> (K, TC).
    # W is tiny & static, so a Python loop of small MXU matmuls is fine.
    logit_planes = [
        jnp.dot(ffn_wt_ref[...], x[w], preferred_element_type=jnp.float32)
        for w in range(W)
    ]                                           # W x (K, TC) f32, dense-ish vregs

    # Softmax over the word axis.  Words are separate planes -> max / exp / sum are
    # plane-wise VPU/EUP ops on ~1 vreg each; no XLU sublane reductions anywhere.
    m = logit_planes[0]
    for w in range(1, W):
        m = jnp.maximum(m, logit_planes[w])
    e_planes = [jnp.exp(lp - m) for lp in logit_planes]     # W x (K, TC)
    s = e_planes[0]
    for w in range(1, W):
        s = s + e_planes[w]
    r = pl.reciprocal(s, approx=True)           # (K, TC); normalization deferred below

    # Cluster weighted sum, transposed: acc_k[d, c] = sum_w e[w, k, c] * x[w, d, c].
    # (1, TC) * (D, TC) broadcasts along sublanes -> pure VPU multiply-accumulate.
    cluster_blocks = []
    for k in range(K):                          # K static & small
        acc = xf[0] * e_planes[0][k:k + 1, :]
        for w in range(1, W):
            acc = acc + xf[w] * e_planes[w][k:k + 1, :]
        cluster_blocks.append(acc * r[k:k + 1, :])          # (D, TC), normalized
    clusters_t = jnp.concatenate(cluster_blocks, axis=0)    # (K*D, TC)

    # Attention projection, transposed: (DIMG, K*D) @ (K*D, TC) + b -> (DIMG, TC).
    # Keeps the (C, K*D) pooled tensor entirely in VMEM (no HBM round trip).
    proj_t = jnp.dot(att_wt_ref[...], clusters_t,
                     preferred_element_type=jnp.float32) + att_b_ref[...]

    # scores[b, c] = img[b] . proj[c]:  plain (B, DIMG) @ (DIMG, TC) -> lane-dense (B, TC).
    out_ref[...] = jnp.dot(img_ref[...].astype(jnp.float32), proj_t,
                           preferred_element_type=jnp.float32).astype(out_ref.dtype)


def zsl_forward(params, img_ft, txt_ft, nclusters, *, class_block=128):
    """ZSL.forward with txt_ft given (no embedder), tf=None.

    txt_ft: (C, W, D), img_ft: (B, DIMG). Returns (B, C) compatibility scores.
    """
    C, W, D = txt_ft.shape
    B, DIMG = img_ft.shape
    K = nclusters
    assert params["ffn_w"].shape == (D, K)
    assert params["att_w"].shape == (K * D, DIMG)

    # Class-block size: TC is the lane dim of the streamed block and of the output block,
    # so keep it a multiple of 128.  Pad C up to a multiple of TC (padded rows are zero,
    # produce harmless scores, and are sliced off) so pipelining / 2-TC sharding survive
    # any C.
    TC = max(128, (int(class_block) // 128) * 128)
    C_pad = pl.cdiv(C, TC) * TC

    txt_p = txt_ft
    if C_pad != C:
        txt_p = jnp.pad(txt_ft, ((0, C_pad - C), (0, 0), (0, 0)))

    # One-time pre-transforms (in deployment the class text features are static, so the
    # bf16 cast + transpose would be precomputed once and amortized over image batches).
    x_t = jnp.transpose(txt_p.astype(jnp.bfloat16), (1, 2, 0))      # (W, D, C_pad) bf16
    ffn_wt = params["ffn_w"].T.astype(jnp.bfloat16)                 # (K, D)
    att_wt = params["att_w"].T.astype(jnp.float32)                  # (DIMG, K*D)
    att_b = params["att_b"].reshape(DIMG, 1).astype(jnp.float32)    # (DIMG, 1)
    img_f = img_ft.astype(jnp.float32)

    # TODO(synk): the `Attention` class definition is not provided in the source; it is
    # implemented here as a linear-compatibility head: score[b,c] = img[b].(txt[c]@W+b).
    scores = pl.pallas_call(
        _zsl_fused_kernel,
        out_shape=jax.ShapeDtypeStruct((B, C_pad), jnp.float32),
        grid_spec=pltpu.PrefetchScalarGridSpec(
            num_scalar_prefetch=0,
            grid=(C_pad // TC,),
            in_specs=[
                pl.BlockSpec((W, D, TC), lambda c: (0, 0, c)),      # streamed class block
                pl.BlockSpec((K, D), lambda c: (0, 0)),             # resident weight
                pl.BlockSpec((DIMG, K * D), lambda c: (0, 0)),      # resident weight
                pl.BlockSpec((DIMG, 1), lambda c: (0, 0)),          # resident bias
                pl.BlockSpec((B, DIMG), lambda c: (0, 0)),          # resident image feats
            ],
            out_specs=pl.BlockSpec((B, TC), lambda c: (0, c)),      # lane-dense output
        ),
        compiler_params=pltpu.CompilerParams(
            dimension_semantics=("parallel",)),                     # classes independent
    )(x_t, ffn_wt, att_wt, att_b, img_f)

    return scores[:, :C].astype(img_ft.dtype)


def _reference(params, img_ft, txt_ft, K):
    """Pure-JAX reference mirroring the PyTorch forward (including the ffn bias)."""
    C, W, D = txt_ft.shape
    x = txt_ft.reshape(C * W, D)
    logits = x @ params["ffn_w"] + params["ffn_b"]
    logits = logits.reshape(C, W, K).transpose(0, 2, 1)             # (C, K, W)
    p = jax.nn.softmax(logits, axis=-1)
    clusters = jnp.einsum("ckw,cwd->ckd", p, txt_ft).reshape(C, K * D)
    proj = clusters @ params["att_w"] + params["att_b"]
    return img_ft @ proj.T


if __name__ == "__main__":
    # Small shapes: 200 classes (pads to 256 -> 2 class blocks), 8 words/class,
    # embed_dim 128, 4 clusters, 8 images of dim 128.
    C, W, D, K = 200, 8, 128, 4
    B, DIMG = 8, 128

    key = jax.random.PRNGKey(0)
    k0, k1, k2, k3, k4, k5 = jax.random.split(key, 6)
    txt_ft = jax.random.normal(k0, (C, W, D), jnp.float32)
    img_ft = jax.random.normal(k1, (B, DIMG), jnp.float32)

    # Deterministic parameter init (torch-Linear-style uniform bounds).
    bf = 1.0 / (D ** 0.5)
    ba = 1.0 / ((K * D) ** 0.5)
    params = {
        "ffn_w": jax.random.uniform(k2, (D, K), jnp.float32, -bf, bf),
        "ffn_b": jax.random.uniform(k3, (K,), jnp.float32, -bf, bf),
        "att_w": jax.random.uniform(k4, (K * D, DIMG), jnp.float32, -ba, ba),
        "att_b": jax.random.uniform(k5, (DIMG,), jnp.float32, -ba, ba),
    }

    fwd = jax.jit(functools.partial(zsl_forward, nclusters=K, class_block=128))
    out = jax.block_until_ready(fwd(params, img_ft, txt_ft))

    # Reference on bf16-rounded txt/ffn_w inputs (the kernel streams those in bf16);
    # tolerance loosened accordingly (bf16 stream + approximate EUP reciprocal).
    txt_bf = txt_ft.astype(jnp.bfloat16).astype(jnp.float32)
    params_bf = dict(params,
                     ffn_w=params["ffn_w"].astype(jnp.bfloat16).astype(jnp.float32))
    ref = _reference(params_bf, img_ft, txt_bf, K)

    assert out.shape == (B, C), out.shape
    assert jnp.allclose(out, ref, atol=3e-2, rtol=3e-2), float(jnp.max(jnp.abs(out - ref)))
    print("KERNEL_OK")
</pallas_src>

<mosaic_0001>
module attributes {stable_mosaic.version = 11 : i64} {
  func.func @_zsl_fused_kernel(%arg0: i32, %arg1: memref<8x128x128xbf16, #tpu.memory_space<vmem>>, %arg2: memref<4x128xbf16, #tpu.memory_space<vmem>>, %arg3: memref<128x512xf32, #tpu.memory_space<vmem>>, %arg4: memref<128x1xf32, #tpu.memory_space<vmem>>, %arg5: memref<8x128xf32, #tpu.memory_space<vmem>>, %arg6: memref<8x128xf32, #tpu.memory_space<vmem>>) attributes {dimension_semantics = [#tpu.dimension_semantics<parallel>], iteration_bounds = array<i64: 2>, scalar_prefetch = 0 : i64, scratch_operands = 0 : i64, tpu.core_type = #tpu.core_type<tc>, window_params = [{transform_indices = @transform_0, window_bounds = array<i64: 8, 128, 128>}, {pipeline_mode = #tpu.pipeline_mode<synchronous>, transform_indices = @transform_1, window_bounds = array<i64: 4, 128>}, {pipeline_mode = #tpu.pipeline_mode<synchronous>, transform_indices = @transform_2, window_bounds = array<i64: 128, 512>}, {pipeline_mode = #tpu.pipeline_mode<synchronous>, transform_indices = @transform_3, window_bounds = array<i64: 128, 1>}, {pipeline_mode = #tpu.pipeline_mode<synchronous>, transform_indices = @transform_4, window_bounds = array<i64: 8, 128>}, {transform_indices = @transform_5, window_bounds = array<i64: 8, 128>}]} {
    %c0 = arith.constant 0 : index
    %c0_0 = arith.constant 0 : index
    %c0_1 = arith.constant 0 : index
    %0 = vector.load %arg1[%c0, %c0_0, %c0_1] : memref<8x128x128xbf16, #tpu.memory_space<vmem>>, vector<8x128x128xbf16>
    %1 = arith.extf %0 : vector<8x128x128xbf16> to vector<8x128x128xf32>
    %c0_2 = arith.constant 0 : index
    %c0_3 = arith.constant 0 : index
    %2 = vector.load %arg2[%c0_2, %c0_3] : memref<4x128xbf16, #tpu.memory_space<vmem>>, vector<4x128xbf16>
    %3 = vector.extract_strided_slice %0 {offsets = [0, 0, 0], sizes = [1, 128, 128], strides = [1, 1, 1]} : vector<8x128x128xbf16> to vector<1x128x128xbf16>
    %4 = vector.shape_cast %3 : vector<1x128x128xbf16> to vector<128x128xbf16>
    %cst = arith.constant dense<0.000000e+00> : vector<4x128xf32>
    %5 = tpu.matmul %2, %4, %cst {dimension_numbers = #tpu.dot_dimension_numbers<[1], [0], [0], [1], [0, 0, 1, 1], [], []>} : vector<4x128xbf16>, vector<128x128xbf16>, vector<4x128xf32> -> vector<4x128xf32>
    %c0_4 = arith.constant 0 : index
    %c0_5 = arith.constant 0 : index
    %6 = vector.load %arg2[%c0_4, %c0_5] : memref<4x128xbf16, #tpu.memory_space<vmem>>, vector<4x128xbf16>
    %7 = vector.extract_strided_slice %0 {offsets = [1, 0, 0], sizes = [1, 128, 128], strides = [1, 1, 1]} : vector<8x128x128xbf16> to vector<1x128x128xbf16>
    %8 = vector.shape_cast %7 : vector<1x128x128xbf16> to vector<128x128xbf16>
    %cst_6 = arith.constant dense<0.000000e+00> : vector<4x128xf32>
    %9 = tpu.matmul %6, %8, %cst_6 {dimension_numbers = #tpu.dot_dimension_numbers<[1], [0], [0], [1], [0, 0, 1, 1], [], []>} : vector<4x128xbf16>, vector<128x128xbf16>, vector<4x128xf32> -> vector<4x128xf32>
    %c0_7 = arith.constant 0 : index
    %c0_8 = arith.constant 0 : index
    %10 = vector.load %arg2[%c0_7, %c0_8] : memref<4x128xbf16, #tpu.memory_space<vmem>>, vector<4x128xbf16>
    %11 = vector.extract_strided_slice %0 {offsets = [2, 0, 0], sizes = [1, 128, 128], strides = [1, 1, 1]} : vector<8x128x128xbf16> to vector<1x128x128xbf16>
    %12 = vector.shape_cast %11 : vector<1x128x128xbf16> to vector<128x128xbf16>
    %cst_9 = arith.constant dense<0.000000e+00> : vector<4x128xf32>
    %13 = tpu.matmul %10, %12, %cst_9 {dimension_numbers = #tpu.dot_dimension_numbers<[1], [0], [0], [1], [0, 0, 1, 1], [], []>} : vector<4x128xbf16>, vector<128x128xbf16>, vector<4x128xf32> -> vector<4x128xf32>
    %c0_10 = arith.constant 0 : index
    %c0_11 = arith.constant 0 : index
    %14 = vector.load %arg2[%c0_10, %c0_11] : memref<4x128xbf16, #tpu.memory_space<vmem>>, vector<4x128xbf16>
    %15 = vector.extract_strided_slice %0 {offsets = [3, 0, 0], sizes = [1, 128, 128], strides = [1, 1, 1]} : vector<8x128x128xbf16> to vector<1x128x128xbf16>
    %16 = vector.shape_cast %15 : vector<1x128x128xbf16> to vector<128x128xbf16>
    %cst_12 = arith.constant dense<0.000000e+00> : vector<4x128xf32>
    %17 = tpu.matmul %14, %16, %cst_12 {dimension_numbers = #tpu.dot_dimension_numbers<[1], [0], [0], [1], [0, 0, 1, 1], [], []>} : vector<4x128xbf16>, vector<128x128xbf16>, vector<4x128xf32> -> vector<4x128xf32>
    %c0_13 = arith.constant 0 : index
    %c0_14 = arith.constant 0 : index
    %18 = vector.load %arg2[%c0_13, %c0_14] : memref<4x128xbf16, #tpu.memory_space<vmem>>, vector<4x128xbf16>
    %19 = vector.extract_strided_slice %0 {offsets = [4, 0, 0], sizes = [1, 128, 128], strides = [1, 1, 1]} : vector<8x128x128xbf16> to vector<1x128x128xbf16>
    %20 = vector.shape_cast %19 : vector<1x128x128xbf16> to vector<128x128xbf16>
    %cst_15 = arith.constant dense<0.000000e+00> : vector<4x128xf32>
    %21 = tpu.matmul %18, %20, %cst_15 {dimension_numbers = #tpu.dot_dimension_numbers<[1], [0], [0], [1], [0, 0, 1, 1], [], []>} : vector<4x128xbf16>, vector<128x128xbf16>, vector<4x128xf32> -> vector<4x128xf32>
    %c0_16 = arith.constant 0 : index
    %c0_17 = arith.constant 0 : index
    %22 = vector.load %arg2[%c0_16, %c0_17] : memref<4x128xbf16, #tpu.memory_space<vmem>>, vector<4x128xbf16>
    %23 = vector.extract_strided_slice %0 {offsets = [5, 0, 0], sizes = [1, 128, 128], strides = [1, 1, 1]} : vector<8x128x128xbf16> to vector<1x128x128xbf16>
    %24 = vector.shape_cast %23 : vector<1x128x128xbf16> to vector<128x128xbf16>
    %cst_18 = arith.constant dense<0.000000e+00> : vector<4x128xf32>
    %25 = tpu.matmul %22, %24, %cst_18 {dimension_numbers = #tpu.dot_dimension_numbers<[1], [0], [0], [1], [0, 0, 1, 1], [], []>} : vector<4x128xbf16>, vector<128x128xbf16>, vector<4x128xf32> -> vector<4x128xf32>
    %c0_19 = arith.constant 0 : index
    %c0_20 = arith.constant 0 : index
    %26 = vector.load %arg2[%c0_19, %c0_20] : memref<4x128xbf16, #tpu.memory_space<vmem>>, vector<4x128xbf16>
    %27 = vector.extract_strided_slice %0 {offsets = [6, 0, 0], sizes = [1, 128, 128], strides = [1, 1, 1]} : vector<8x128x128xbf16> to vector<1x128x128xbf16>
    %28 = vector.shape_cast %27 : vector<1x128x128xbf16> to vector<128x128xbf16>
    %cst_21 = arith.constant dense<0.000000e+00> : vector<4x128xf32>
    %29 = tpu.matmul %26, %28, %cst_21 {dimension_numbers = #tpu.dot_dimension_numbers<[1], [0], [0], [1], [0, 0, 1, 1], [], []>} : vector<4x128xbf16>, vector<128x128xbf16>, vector<4x128xf32> -> vector<4x128xf32>
    %c0_22 = arith.constant 0 : index
    %c0_23 = arith.constant 0 : index
    %30 = vector.load %arg2[%c0_22, %c0_23] : memref<4x128xbf16, #tpu.memory_space<vmem>>, vector<4x128xbf16>
    %31 = vector.extract_strided_slice %0 {offsets = [7, 0, 0], sizes = [1, 128, 128], strides = [1, 1, 1]} : vector<8x128x128xbf16> to vector<1x128x128xbf16>
    %32 = vector.shape_cast %31 : vector<1x128x128xbf16> to vector<128x128xbf16>
    %cst_24 = arith.constant dense<0.000000e+00> : vector<4x128xf32>
    %33 = tpu.matmul %30, %32, %cst_24 {dimension_numbers = #tpu.dot_dimension_numbers<[1], [0], [0], [1], [0, 0, 1, 1], [], []>} : vector<4x128xbf16>, vector<128x128xbf16>, vector<4x128xf32> -> vector<4x128xf32>
    %34 = arith.maximumf %5, %9 : vector<4x128xf32>
    %35 = arith.maximumf %34, %13 : vector<4x128xf32>
    %36 = arith.maximumf %35, %17 : vector<4x128xf32>
    %37 = arith.maximumf %36, %21 : vector<4x128xf32>
    %38 = arith.maximumf %37, %25 : vector<4x128xf32>
    %39 = arith.maximumf %38, %29 : vector<4x128xf32>
    %40 = arith.maximumf %39, %33 : vector<4x128xf32>
    %41 = arith.subf %5, %40 : vector<4x128xf32>
    %42 = math.exp %41 : vector<4x128xf32>
    %43 = arith.subf %9, %40 : vector<4x128xf32>
    %44 = math.exp %43 : vector<4x128xf32>
    %45 = arith.subf %13, %40 : vector<4x128xf32>
    %46 = math.exp %45 : vector<4x128xf32>
    %47 = arith.subf %17, %40 : vector<4x128xf32>
    %48 = math.exp %47 : vector<4x128xf32>
    %49 = arith.subf %21, %40 : vector<4x128xf32>
    %50 = math.exp %49 : vector<4x128xf32>
    %51 = arith.subf %25, %40 : vector<4x128xf32>
    %52 = math.exp %51 : vector<4x128xf32>
    %53 = arith.subf %29, %40 : vector<4x128xf32>
    %54 = math.exp %53 : vector<4x128xf32>
    %55 = arith.subf %33, %40 : vector<4x128xf32>
    %56 = math.exp %55 : vector<4x128xf32>
    %57 = arith.addf %42, %44 : vector<4x128xf32>
    %58 = arith.addf %57, %46 : vector<4x128xf32>
    %59 = arith.addf %58, %48 : vector<4x128xf32>
    %60 = arith.addf %59, %50 : vector<4x128xf32>
    %61 = arith.addf %60, %52 : vector<4x128xf32>
    %62 = arith.addf %61, %54 : vector<4x128xf32>
    %63 = arith.addf %62, %56 : vector<4x128xf32>
    %64 = tpu.reciprocal %63 {approx = true} : vector<4x128xf32> -> vector<4x128xf32>
    %65 = vector.extract_strided_slice %1 {offsets = [0, 0, 0], sizes = [1, 128, 128], strides = [1, 1, 1]} : vector<8x128x128xf32> to vector<1x128x128xf32>
    %66 = vector.shape_cast %65 : vector<1x128x128xf32> to vector<128x128xf32>
    %67 = vector.extract_strided_slice %42 {offsets = [0, 0], sizes = [1, 128], strides = [1, 1]} : vector<4x128xf32> to vector<1x128xf32>
    %68 = vector.broadcast %67 : vector<1x128xf32> to vector<128x128xf32>
    %69 = arith.mulf %66, %68 : vector<128x128xf32>
    %70 = vector.extract_strided_slice %1 {offsets = [1, 0, 0], sizes = [1, 128, 128], strides = [1, 1, 1]} : vector<8x128x128xf32> to vector<1x128x128xf32>
    %71 = vector.shape_cast %70 : vector<1x128x128xf32> to vector<128x128xf32>
    %72 = vector.extract_strided_slice %44 {offsets = [0, 0], sizes = [1, 128], strides = [1, 1]} : vector<4x128xf32> to vector<1x128xf32>
    %73 = vector.broadcast %72 : vector<1x128xf32> to vector<128x128xf32>
    %74 = arith.mulf %71, %73 : vector<128x128xf32>
    %75 = arith.addf %69, %74 : vector<128x128xf32>
    %76 = vector.extract_strided_slice %1 {offsets = [2, 0, 0], sizes = [1, 128, 128], strides = [1, 1, 1]} : vector<8x128x128xf32> to vector<1x128x128xf32>
    %77 = vector.shape_cast %76 : vector<1x128x128xf32> to vector<128x128xf32>
    %78 = vector.extract_strided_slice %46 {offsets = [0, 0], sizes = [1, 128], strides = [1, 1]} : vector<4x128xf32> to vector<1x128xf32>
    %79 = vector.broadcast %78 : vector<1x128xf32> to vector<128x128xf32>
    %80 = arith.mulf %77, %79 : vector<128x128xf32>
    %81 = arith.addf %75, %80 : vector<128x128xf32>
    %82 = vector.extract_strided_slice %1 {offsets = [3, 0, 0], sizes = [1, 128, 128], strides = [1, 1, 1]} : vector<8x128x128xf32> to vector<1x128x128xf32>
    %83 = vector.shape_cast %82 : vector<1x128x128xf32> to vector<128x128xf32>
    %84 = vector.extract_strided_slice %48 {offsets = [0, 0], sizes = [1, 128], strides = [1, 1]} : vector<4x128xf32> to vector<1x128xf32>
    %85 = vector.broadcast %84 : vector<1x128xf32> to vector<128x128xf32>
    %86 = arith.mulf %83, %85 : vector<128x128xf32>
    %87 = arith.addf %81, %86 : vector<128x128xf32>
    %88 = vector.extract_strided_slice %1 {offsets = [4, 0, 0], sizes = [1, 128, 128], strides = [1, 1, 1]} : vector<8x128x128xf32> to vector<1x128x128xf32>
    %89 = vector.shape_cast %88 : vector<1x128x128xf32> to vector<128x128xf32>
    %90 = vector.extract_strided_slice %50 {offsets = [0, 0], sizes = [1, 128], strides = [1, 1]} : vector<4x128xf32> to vector<1x128xf32>
    %91 = vector.broadcast %90 : vector<1x128xf32> to vector<128x128xf32>
    %92 = arith.mulf %89, %91 : vector<128x128xf32>
    %93 = arith.addf %87, %92 : vector<128x128xf32>
    %94 = vector.extract_strided_slice %1 {offsets = [5, 0, 0], sizes = [1, 128, 128], strides = [1, 1, 1]} : vector<8x128x128xf32> to vector<1x128x128xf32>
    %95 = vector.shape_cast %94 : vector<1x128x128xf32> to vector<128x128xf32>
    %96 = vector.extract_strided_slice %52 {offsets = [0, 0], sizes = [1, 128], strides = [1, 1]} : vector<4x128xf32> to vector<1x128xf32>
    %97 = vector.broadcast %96 : vector<1x128xf32> to vector<128x128xf32>
    %98 = arith.mulf %95, %97 : vector<128x128xf32>
    %99 = arith.addf %93, %98 : vector<128x128xf32>
    %100 = vector.extract_strided_slice %1 {offsets = [6, 0, 0], sizes = [1, 128, 128], strides = [1, 1, 1]} : vector<8x128x128xf32> to vector<1x128x128xf32>
    %101 = vector.shape_cast %100 : vector<1x128x128xf32> to vector<128x128xf32>
    %102 = vector.extract_strided_slice %54 {offsets = [0, 0], sizes = [1, 128], strides = [1, 1]} : vector<4x128xf32> to vector<1x128xf32>
    %103 = vector.broadcast %102 : vector<1x128xf32> to vector<128x128xf32>
    %104 = arith.mulf %101, %103 : vector<128x128xf32>
    %105 = arith.addf %99, %104 : vector<128x128xf32>
    %106 = vector.extract_strided_slice %1 {offsets = [7, 0, 0], sizes = [1, 128, 128], strides = [1, 1, 1]} : vector<8x128x128xf32> to vector<1x128x128xf32>
    %107 = vector.shape_cast %106 : vector<1x128x128xf32> to vector<128x128xf32>
    %108 = vector.extract_strided_slice %56 {offsets = [0, 0], sizes = [1, 128], strides = [1, 1]} : vector<4x128xf32> to vector<1x128xf32>
    %109 = vector.broadcast %108 : vector<1x128xf32> to vector<128x128xf32>
    %110 = arith.mulf %107, %109 : vector<128x128xf32>
    %111 = arith.addf %105, %110 : vector<128x128xf32>
    %112 = vector.extract_strided_slice %64 {offsets = [0, 0], sizes = [1, 128], strides = [1, 1]} : vector<4x128xf32> to vector<1x128xf32>
    %113 = vector.broadcast %112 : vector<1x128xf32> to vector<128x128xf32>
    %114 = arith.mulf %111, %113 : vector<128x128xf32>
    %115 = vector.extract_strided_slice %1 {offsets = [0, 0, 0], sizes = [1, 128, 128], strides = [1, 1, 1]} : vector<8x128x128xf32> to vector<1x128x128xf32>
    %116 = vector.shape_cast %115 : vector<1x128x128xf32> to vector<128x128xf32>
    %117 = vector.extract_strided_slice %42 {offsets = [1, 0], sizes = [1, 128], strides = [1, 1]} : vector<4x128xf32> to vector<1x128xf32>
    %118 = vector.broadcast %117 : vector<1x128xf32> to vector<128x128xf32>
    %119 = arith.mulf %116, %118 : vector<128x128xf32>
    %120 = vector.extract_strided_slice %1 {offsets = [1, 0, 0], sizes = [1, 128, 128], strides = [1, 1, 1]} : vector<8x128x128xf32> to vector<1x128x128xf32>
    %121 = vector.shape_cast %120 : vector<1x128x128xf32> to vector<128x128xf32>
    %122 = vector.extract_strided_slice %44 {offsets = [1, 0], sizes = [1, 128], strides = [1, 1]} : vector<4x128xf32> to vector<1x128xf32>
    %123 = vector.broadcast %122 : vector<1x128xf32> to vector<128x128xf32>
    %124 = arith.mulf %121, %123 : vector<128x128xf32>
    %125 = arith.addf %119, %124 : vector<128x128xf32>
    %126 = vector.extract_strided_slice %1 {offsets = [2, 0, 0], sizes = [1, 128, 128], strides = [1, 1, 1]} : vector<8x128x128xf32> to vector<1x128x128xf32>
    %127 = vector.shape_cast %126 : vector<1x128x128xf32> to vector<128x128xf32>
    %128 = vector.extract_strided_slice %46 {offsets = [1, 0], sizes = [1, 128], strides = [1, 1]} : vector<4x128xf32> to vector<1x128xf32>
    %129 = vector.broadcast %128 : vector<1x128xf32> to vector<128x128xf32>
    %130 = arith.mulf %127, %129 : vector<128x128xf32>
    %131 = arith.addf %125, %130 : vector<128x128xf32>
    %132 = vector.extract_strided_slice %1 {offsets = [3, 0, 0], sizes = [1, 128, 128], strides = [1, 1, 1]} : vector<8x128x128xf32> to vector<1x128x128xf32>
    %133 = vector.shape_cast %132 : vector<1x128x128xf32> to vector<128x128xf32>
    %134 = vector.extract_strided_slice %48 {offsets = [1, 0], sizes = [1, 128], strides = [1, 1]} : vector<4x128xf32> to vector<1x128xf32>
    %135 = vector.broadcast %134 : vector<1x128xf32> to vector<128x128xf32>
    %136 = arith.mulf %133, %135 : vector<128x128xf32>
    %137 = arith.addf %131, %136 : vector<128x128xf32>
    %138 = vector.extract_strided_slice %1 {offsets = [4, 0, 0], sizes = [1, 128, 128], strides = [1, 1, 1]} : vector<8x128x128xf32> to vector<1x128x128xf32>
    %139 = vector.shape_cast %138 : vector<1x128x128xf32> to vector<128x128xf32>
    %140 = vector.extract_strided_slice %50 {offsets = [1, 0], sizes = [1, 128], strides = [1, 1]} : vector<4x128xf32> to vector<1x128xf32>
    %141 = vector.broadcast %140 : vector<1x128xf32> to vector<128x128xf32>
    %142 = arith.mulf %139, %141 : vector<128x128xf32>
    %143 = arith.addf %137, %142 : vector<128x128xf32>
    %144 = vector.extract_strided_slice %1 {offsets = [5, 0, 0], sizes = [1, 128, 128], strides = [1, 1, 1]} : vector<8x128x128xf32> to vector<1x128x128xf32>
    %145 = vector.shape_cast %144 : vector<1x128x128xf32> to vector<128x128xf32>
    %146 = vector.extract_strided_slice %52 {offsets = [1, 0], sizes = [1, 128], strides = [1, 1]} : vector<4x128xf32> to vector<1x128xf32>
    %147 = vector.broadcast %146 : vector<1x128xf32> to vector<128x128xf32>
    %148 = arith.mulf %145, %147 : vector<128x128xf32>
    %149 = arith.addf %143, %148 : vector<128x128xf32>
    %150 = vector.extract_strided_slice %1 {offsets = [6, 0, 0], sizes = [1, 128, 128], strides = [1, 1, 1]} : vector<8x128x128xf32> to vector<1x128x128xf32>
    %151 = vector.shape_cast %150 : vector<1x128x128xf32> to vector<128x128xf32>
    %152 = vector.extract_strided_slice %54 {offsets = [1, 0], sizes = [1, 128], strides = [1, 1]} : vector<4x128xf32> to vector<1x128xf32>
    %153 = vector.broadcast %152 : vector<1x128xf32> to vector<128x128xf32>
    %154 = arith.mulf %151, %153 : vector<128x128xf32>
    %155 = arith.addf %149, %154 : vector<128x128xf32>
    %156 = vector.extract_strided_slice %1 {offsets = [7, 0, 0], sizes = [1, 128, 128], strides = [1, 1, 1]} : vector<8x128x128xf32> to vector<1x128x128xf32>
    %157 = vector.shape_cast %156 : vector<1x128x128xf32> to vector<128x128xf32>
    %158 = vector.extract_strided_slice %56 {offsets = [1, 0], sizes = [1, 128], strides = [1, 1]} : vector<4x128xf32> to vector<1x128xf32>
    %159 = vector.broadcast %158 : vector<1x128xf32> to vector<128x128xf32>
    %160 = arith.mulf %157, %159 : vector<128x128xf32>
    %161 = arith.addf %155, %160 : vector<128x128xf32>
    %162 = vector.extract_strided_slice %64 {offsets = [1, 0], sizes = [1, 128], strides = [1, 1]} : vector<4x128xf32> to vector<1x128xf32>
    %163 = vector.broadcast %162 : vector<1x128xf32> to vector<128x128xf32>
    %164 = arith.mulf %161, %163 : vector<128x128xf32>
    %165 = vector.extract_strided_slice %1 {offsets = [0, 0, 0], sizes = [1, 128, 128], strides = [1, 1, 1]} : vector<8x128x128xf32> to vector<1x128x128xf32>
    %166 = vector.shape_cast %165 : vector<1x128x128xf32> to vector<128x128xf32>
    %167 = vector.extract_strided_slice %42 {offsets = [2, 0], sizes = [1, 128], strides = [1, 1]} : vector<4x128xf32> to vector<1x128xf32>
    %168 = vector.broadcast %167 : vector<1x128xf32> to vector<128x128xf32>
    %169 = arith.mulf %166, %168 : vector<128x128xf32>
    %170 = vector.extract_strided_slice %1 {offsets = [1, 0, 0], sizes = [1, 128, 128], strides = [1, 1, 1]} : vector<8x128x128xf32> to vector<1x128x128xf32>
    %171 = vector.shape_cast %170 : vector<1x128x128xf32> to vector<128x128xf32>
    %172 = vector.extract_strided_slice %44 {offsets = [2, 0], sizes = [1, 128], strides = [1, 1]} : vector<4x128xf32> to vector<1x128xf32>
    %173 = vector.broadcast %172 : vector<1x128xf32> to vector<128x128xf32>
    %174 = arith.mulf %171, %173 : vector<128x128xf32>
    %175 = arith.addf %169, %174 : vector<128x128xf32>
    %176 = vector.extract_strided_slice %1 {offsets = [2, 0, 0], sizes = [1, 128, 128], strides = [1, 1, 1]} : vector<8x128x128xf32> to vector<1x128x128xf32>
    %177 = vector.shape_cast %176 : vector<1x128x128xf32> to vector<128x128xf32>
    %178 = vector.extract_strided_slice %46 {offsets = [2, 0], sizes = [1, 128], strides = [1, 1]} : vector<4x128xf32> to vector<1x128xf32>
    %179 = vector.broadcast %178 : vector<1x128xf32> to vector<128x128xf32>
    %180 = arith.mulf %177, %179 : vector<128x128xf32>
    %181 = arith.addf %175, %180 : vector<128x128xf32>
    %182 = vector.extract_strided_slice %1 {offsets = [3, 0, 0], sizes = [1, 128, 128], strides = [1, 1, 1]} : vector<8x128x128xf32> to vector<1x128x128xf32>
    %183 = vector.shape_cast %182 : vector<1x128x128xf32> to vector<128x128xf32>
    %184 = vector.extract_strided_slice %48 {offsets = [2, 0], sizes = [1, 128], strides = [1, 1]} : vector<4x128xf32> to vector<1x128xf32>
    %185 = vector.broadcast %184 : vector<1x128xf32> to vector<128x128xf32>
    %186 = arith.mulf %183, %185 : vector<128x128xf32>
    %187 = arith.addf %181, %186 : vector<128x128xf32>
    %188 = vector.extract_strided_slice %1 {offsets = [4, 0, 0], sizes = [1, 128, 128], strides = [1, 1, 1]} : vector<8x128x128xf32> to vector<1x128x128xf32>
    %189 = vector.shape_cast %188 : vector<1x128x128xf32> to vector<128x128xf32>
    %190 = vector.extract_strided_slice %50 {offsets = [2, 0], sizes = [1, 128], strides = [1, 1]} : vector<4x128xf32> to vector<1x128xf32>
    %191 = vector.broadcast %190 : vector<1x128xf32> to vector<128x128xf32>
    %192 = arith.mulf %189, %191 : vector<128x128xf32>
    %193 = arith.addf %187, %192 : vector<128x128xf32>
    %194 = vector.extract_strided_slice %1 {offsets = [5, 0, 0], sizes = [1, 128, 128], strides = [1, 1, 1]} : vector<8x128x128xf32> to vector<1x128x128xf32>
    %195 = vector.shape_cast %194 : vector<1x128x128xf32> to vector<128x128xf32>
    %196 = vector.extract_strided_slice %52 {offsets = [2, 0], sizes = [1, 128], strides = [1, 1]} : vector<4x128xf32> to vector<1x128xf32>
    %197 = vector.broadcast %196 : vector<1x128xf32> to vector<128x128xf32>
    %198 = arith.mulf %195, %197 : vector<128x128xf32>
    %199 = arith.addf %193, %198 : vector<128x128xf32>
    %200 = vector.extract_strided_slice %1 {offsets = [6, 0, 0], sizes = [1, 128, 128], strides = [1, 1, 1]} : vector<8x128x128xf32> to vector<1x128x128xf32>
    %201 = vector.shape_cast %200 : vector<1x128x128xf32> to vector<128x128xf32>
    %202 = vector.extract_strided_slice %54 {offsets = [2, 0], sizes = [1, 128], strides = [1, 1]} : vector<4x128xf32> to vector<1x128xf32>
    %203 = vector.broadcast %202 : vector<1x128xf32> to vector<128x128xf32>
    %204 = arith.mulf %201, %203 : vector<128x128xf32>
    %205 = arith.addf %199, %204 : vector<128x128xf32>
    %206 = vector.extract_strided_slice %1 {offsets = [7, 0, 0], sizes = [1, 128, 128], strides = [1, 1, 1]} : vector<8x128x128xf32> to vector<1x128x128xf32>
    %207 = vector.shape_cast %206 : vector<1x128x128xf32> to vector<128x128xf32>
    %208 = vector.extract_strided_slice %56 {offsets = [2, 0], sizes = [1, 128], strides = [1, 1]} : vector<4x128xf32> to vector<1x128xf32>
    %209 = vector.broadcast %208 : vector<1x128xf32> to vector<128x128xf32>
    %210 = arith.mulf %207, %209 : vector<128x128xf32>
    %211 = arith.addf %205, %210 : vector<128x128xf32>
    %212 = vector.extract_strided_slice %64 {offsets = [2, 0], sizes = [1, 128], strides = [1, 1]} : vector<4x128xf32> to vector<1x128xf32>
    %213 = vector.broadcast %212 : vector<1x128xf32> to vector<128x128xf32>
    %214 = arith.mulf %211, %213 : vector<128x128xf32>
    %215 = vector.extract_strided_slice %1 {offsets = [0, 0, 0], sizes = [1, 128, 128], strides = [1, 1, 1]} : vector<8x128x128xf32> to vector<1x128x128xf32>
    %216 = vector.shape_cast %215 : vector<1x128x128xf32> to vector<128x128xf32>
    %217 = vector.extract_strided_slice %42 {offsets = [3, 0], sizes = [1, 128], strides = [1, 1]} : vector<4x128xf32> to vector<1x128xf32>
    %218 = vector.broadcast %217 : vector<1x128xf32> to vector<128x128xf32>
    %219 = arith.mulf %216, %218 : vector<128x128xf32>
    %220 = vector.extract_strided_slice %1 {offsets = [1, 0, 0], sizes = [1, 128, 128], strides = [1, 1, 1]} : vector<8x128x128xf32> to vector<1x128x128xf32>
    %221 = vector.shape_cast %220 : vector<1x128x128xf32> to vector<128x128xf32>
    %222 = vector.extract_strided_slice %44 {offsets = [3, 0], sizes = [1, 128], strides = [1, 1]} : vector<4x128xf32> to vector<1x128xf32>
    %223 = vector.broadcast %222 : vector<1x128xf32> to vector<128x128xf32>
    %224 = arith.mulf %221, %223 : vector<128x128xf32>
    %225 = arith.addf %219, %224 : vector<128x128xf32>
    %226 = vector.extract_strided_slice %1 {offsets = [2, 0, 0], sizes = [1, 128, 128], strides = [1, 1, 1]} : vector<8x128x128xf32> to vector<1x128x128xf32>
    %227 = vector.shape_cast %226 : vector<1x128x128xf32> to vector<128x128xf32>
    %228 = vector.extract_strided_slice %46 {offsets = [3, 0], sizes = [1, 128], strides = [1, 1]} : vector<4x128xf32> to vector<1x128xf32>
    %229 = vector.broadcast %228 : vector<1x128xf32> to vector<128x128xf32>
    %230 = arith.mulf %227, %229 : vector<128x128xf32>
    %231 = arith.addf %225, %230 : vector<128x128xf32>
    %232 = vector.extract_strided_slice %1 {offsets = [3, 0, 0], sizes = [1, 128, 128], strides = [1, 1, 1]} : vector<8x128x128xf32> to vector<1x128x128xf32>
    %233 = vector.shape_cast %232 : vector<1x128x128xf32> to vector<128x128xf32>
    %234 = vector.extract_strided_slice %48 {offsets = [3, 0], sizes = [1, 128], strides = [1, 1]} : vector<4x128xf32> to vector<1x128xf32>
    %235 = vector.broadcast %234 : vector<1x128xf32> to vector<128x128xf32>
    %236 = arith.mulf %233, %235 : vector<128x128xf32>
    %237 = arith.addf %231, %236 : vector<128x128xf32>
    %238 = vector.extract_strided_slice %1 {offsets = [4, 0, 0], sizes = [1, 128, 128], strides = [1, 1, 1]} : vector<8x128x128xf32> to vector<1x128x128xf32>
    %239 = vector.shape_cast %238 : vector<1x128x128xf32> to vector<128x128xf32>
    %240 = vector.extract_strided_slice %50 {offsets = [3, 0], sizes = [1, 128], strides = [1, 1]} : vector<4x128xf32> to vector<1x128xf32>
    %241 = vector.broadcast %240 : vector<1x128xf32> to vector<128x128xf32>
    %242 = arith.mulf %239, %241 : vector<128x128xf32>
    %243 = arith.addf %237, %242 : vector<128x128xf32>
    %244 = vector.extract_strided_slice %1 {offsets = [5, 0, 0], sizes = [1, 128, 128], strides = [1, 1, 1]} : vector<8x128x128xf32> to vector<1x128x128xf32>
    %245 = vector.shape_cast %244 : vector<1x128x128xf32> to vector<128x128xf32>
    %246 = vector.extract_strided_slice %52 {offsets = [3, 0], sizes = [1, 128], strides = [1, 1]} : vector<4x128xf32> to vector<1x128xf32>
    %247 = vector.broadcast %246 : vector<1x128xf32> to vector<128x128xf32>
    %248 = arith.mulf %245, %247 : vector<128x128xf32>
    %249 = arith.addf %243, %248 : vector<128x128xf32>
    %250 = vector.extract_strided_slice %1 {offsets = [6, 0, 0], sizes = [1, 128, 128], strides = [1, 1, 1]} : vector<8x128x128xf32> to vector<1x128x128xf32>
    %251 = vector.shape_cast %250 : vector<1x128x128xf32> to vector<128x128xf32>
    %252 = vector.extract_strided_slice %54 {offsets = [3, 0], sizes = [1, 128], strides = [1, 1]} : vector<4x128xf32> to vector<1x128xf32>
    %253 = vector.broadcast %252 : vector<1x128xf32> to vector<128x128xf32>
    %254 = arith.mulf %251, %253 : vector<128x128xf32>
    %255 = arith.addf %249, %254 : vector<128x128xf32>
    %256 = vector.extract_strided_slice %1 {offsets = [7, 0, 0], sizes = [1, 128, 128], strides = [1, 1, 1]} : vector<8x128x128xf32> to vector<1x128x128xf32>
    %257 = vector.shape_cast %256 : vector<1x128x128xf32> to vector<128x128xf32>
    %258 = vector.extract_strided_slice %56 {offsets = [3, 0], sizes = [1, 128], strides = [1, 1]} : vector<4x128xf32> to vector<1x128xf32>
    %259 = vector.broadcast %258 : vector<1x128xf32> to vector<128x128xf32>
    %260 = arith.mulf %257, %259 : vector<128x128xf32>
    %261 = arith.addf %255, %260 : vector<128x128xf32>
    %262 = vector.extract_strided_slice %64 {offsets = [3, 0], sizes = [1, 128], strides = [1, 1]} : vector<4x128xf32> to vector<1x128xf32>
    %263 = vector.broadcast %262 : vector<1x128xf32> to vector<128x128xf32>
    %264 = arith.mulf %261, %263 : vector<128x128xf32>
    %265 = tpu.concatenate %114, %164, %214, %264 in 0 : vector<128x128xf32>, vector<128x128xf32>, vector<128x128xf32>, vector<128x128xf32> -> vector<512x128xf32>
    %c0_25 = arith.constant 0 : index
    %c0_26 = arith.constant 0 : index
    %266 = vector.load %arg3[%c0_25, %c0_26] : memref<128x512xf32, #tpu.memory_space<vmem>>, vector<128x512xf32>
    %cst_27 = arith.constant dense<0.000000e+00> : vector<128x128xf32>
    %267 = tpu.matmul %266, %265, %cst_27 {dimension_numbers = #tpu.dot_dimension_numbers<[1], [0], [0], [1], [0, 0, 1, 1], [], []>} : vector<128x512xf32>, vector<512x128xf32>, vector<128x128xf32> -> vector<128x128xf32>
    %c0_28 = arith.constant 0 : index
    %c0_29 = arith.constant 0 : index
    %268 = vector.load %arg4[%c0_28, %c0_29] : memref<128x1xf32, #tpu.memory_space<vmem>>, vector<128x1xf32>
    %269 = vector.broadcast %268 : vector<128x1xf32> to vector<128x128xf32>
    %270 = arith.addf %267, %269 : vector<128x128xf32>
    %c0_30 = arith.constant 0 : index
    %c0_31 = arith.constant 0 : index
    %271 = vector.load %arg5[%c0_30, %c0_31] : memref<8x128xf32, #tpu.memory_space<vmem>>, vector<8x128xf32>
    %cst_32 = arith.constant dense<0.000000e+00> : vector<8x128xf32>
    %272 = tpu.matmul %271, %270, %cst_32 {dimension_numbers = #tpu.dot_dimension_numbers<[1], [0], [0], [1], [0, 0, 1, 1], [], []>} : vector<8x128xf32>, vector<128x128xf32>, vector<8x128xf32> -> vector<8x128xf32>
    %c0_33 = arith.constant 0 : index
    %c0_34 = arith.constant 0 : index
    %273 = vector.load %arg6[%c0_33, %c0_34] : memref<8x128xf32, #tpu.memory_space<vmem>>, vector<8x128xf32>
    tpu.vector_store %arg6[%c0_33, %c0_34], %272 {strides = array<i32>} : memref<8x128xf32, #tpu.memory_space<vmem>>, vector<8x128xf32>,
    return
  }
  func.func @transform_0(%arg0: i32) -> (i32, i32, i32) {
    %c0_i32 = arith.constant 0 : i32
    %c0_i32_0 = arith.constant 0 : i32
    %c0_i32_1 = arith.constant 0 : i32
    return %c0_i32, %c0_i32_0, %arg0 : i32, i32, i32
  }
  func.func @transform_1(%arg0: i32) -> (i32, i32) {
    %c0_i32 = arith.constant 0 : i32
    %c0_i32_0 = arith.constant 0 : i32
    %c0_i32_1 = arith.constant 0 : i32
    return %c0_i32, %c0_i32_0 : i32, i32
  }
  func.func @transform_2(%arg0: i32) -> (i32, i32) {
    %c0_i32 = arith.constant 0 : i32
    %c0_i32_0 = arith.constant 0 : i32
    %c0_i32_1 = arith.constant 0 : i32
    return %c0_i32, %c0_i32_0 : i32, i32
  }
  func.func @transform_3(%arg0: i32) -> (i32, i32) {
    %c0_i32 = arith.constant 0 : i32
    %c0_i32_0 = arith.constant 0 : i32
    %c0_i32_1 = arith.constant 0 : i32
    return %c0_i32, %c0_i32_0 : i32, i32
  }
  func.func @transform_4(%arg0: i32) -> (i32, i32) {
    %c0_i32 = arith.constant 0 : i32
    %c0_i32_0 = arith.constant 0 : i32
    %c0_i32_1 = arith.constant 0 : i32
    return %c0_i32, %c0_i32_0 : i32, i32
  }
  func.func @transform_5(%arg0: i32) -> (i32, i32) {
    %c0_i32 = arith.constant 0 : i32
    %c0_i32_0 = arith.constant 0 : i32
    return %c0_i32, %arg0 : i32, i32
  }
}

</mosaic_0001>

<llo_original>
// kernel: zsl_forward.1
$region0: #{zsl_forward.1}
  #allocation0 [shape = 'u32[]', space=smem, size = 0x4, offset = 0x4, fixed_abs, tag = 'smem constant byte address 0x4 - core index']
  #allocation1 [shape = 'u32[72,128]{1,0:T(1,128)}', space=vmem, size = 0x9000, scoped, tag = 'internal scratch']
  %s0 = inlined_call_operand.vmem [shape: bf16[8,128,256], index: 0, kind: input, shape index: {}]
  %s1 = inlined_call_operand.vmem [shape: bf16[4,128], index: 1, kind: input, shape index: {}]
  %s2 = inlined_call_operand.vmem [shape: f32[128,512], index: 2, kind: input, shape index: {}]
  %s3 = inlined_call_operand.vmem [shape: f32[128,1], index: 3, kind: input, shape index: {}]
  %s4 = inlined_call_operand.vmem [shape: f32[8,128], index: 4, kind: input, shape index: {}]
  %s5 = inlined_call_operand.hbm [shape: f32[8,256], index: 5, kind: output, shape index: {}]
  %s6 = sld [smem:[#allocation0]]
  $region94: #{zsl_forward.1} parent=0
    _
  %s8 = ssub.s32 1, %s6
  %s9 = scalar_select 0, %s8, %s6
  $region1: #{zsl_forward.1} parent=0
    #allocation2 [shape = 'u8[524288]{0}', space=vmem, size = 0x80000, scoped, tag = 'input window, operand 0']
    #allocation3 [shape = 'u8[8192]{0}', space=vmem, size = 0x2000, scoped, tag = 'output window, operand 0']
    #allocation4 [shape = 's32[2]{0}', space=sflag, size = 0x8, scoped, tag = 'scoped memory for zsl_forward.1']
    %10 = vsyncpa [#allocation4], 0
    %s11 = scalar_lea.sflag [#allocation4], 1
    %12 = vsyncpa %s11, 0
    loop: start=0, step=1, limit=4
    $region2: #{zsl_forward.1} parent=1 // loop_pre_header
      _
    $region3: #{zsl_forward.1} parent=1 // loop_header
      %s14 = sphi 0, %s18
      %p15 = scmp.ge.s32.totalorder %s14, 4
      %s24 = sphi 0, %s26
      %s27 = sphi 0, %s24
      %s28 = sphi 0, %s27
      %s44 = sphi 0, %s28
      %s48 = sphi 0, %s48
      %s50 = sphi 0, %s48
      %s51 = sphi 0, %s50
      %s65 = sphi 0, %s51
      %s69 = sphi 0, %s69
      %s71 = sphi 0, %s69
      %s72 = sphi 0, %s71
      %s86 = sphi 0, %s72
      %s90 = sphi 0, %s90
      %s92 = sphi 0, %s90
      %s93 = sphi 0, %s92
      %s107 = sphi 0, %s93
      %s111 = sphi 0, %s111
      %s113 = sphi 0, %s111
      %s114 = sphi 0, %s113
      %s128 = sphi 0, %s114
      %s134 = sphi 0, %s136
      %s137 = sphi 0, %s134
      %s138 = sphi 0, %s137
      %s154 = sphi 0, %s138
    $region4: #{zsl_forward.1} parent=1 // loop_header_branch
      %17 = sbr.rel (%p15) target = $region8
    $region5: #{zsl_forward.1} parent=1 // loop_body
      %s19 = ssub.s32 %s14, 1
      %s20 = ssub.s32 %s14, 2
      %s21 = sadd.s32 %s14, 1
      %s22 = ssub.s32 %s14, %s21
      %p23 = scmp.eq.s32.totalorder %s22, 0
      %s25 = sadd.s32 %s24, 1
      %s26 = scalar_select %p23, %s24, %s25
      %p29 = pneg %p23
      %p30 = scmp.eq.s32.totalorder %s14, 1
      %p31 = por %p29, %p30
      %p32 = scmp.ne.s32.totalorder %s24, %s27
      %p33 = scmp.eq.s32.totalorder %s14, 0
      %p34 = por %p32, %p33
      %p35 = scmp.ne.s32.totalorder %s24, %s27
      %p36 = scmp.eq.s32.totalorder %s19, 1
      %p37 = por %p35, %p36
      %p38 = scmp.ne.s32.totalorder %s27, %s28
      %p39 = scmp.eq.s32.totalorder %s19, 0
      %p40 = por %p38, %p39
      %p41 = scmp.ne.s32.totalorder %s27, %s28
      %p42 = scmp.eq.s32.totalorder %s20, 1
      %p43 = por %p41, %p42
      %p45 = scmp.ne.s32.totalorder %s28, %s44
      %p46 = scmp.eq.s32.totalorder %s20, 0
      %p47 = por %p45, %p46
      %s49 = sadd.s32 %s48, 1
      %p52 = scmp.eq.s32.totalorder %s14, 1
      %p53 = scmp.ne.s32.totalorder %s48, %s50
      %p54 = scmp.eq.s32.totalorder %s14, 0
      %p55 = por %p53, %p54
      %p56 = scmp.ne.s32.totalorder %s48, %s50
      %p57 = scmp.eq.s32.totalorder %s19, 1
      %p58 = por %p56, %p57
      %p59 = scmp.ne.s32.totalorder %s50, %s51
      %p60 = scmp.eq.s32.totalorder %s19, 0
      %p61 = por %p59, %p60
      %p62 = scmp.ne.s32.totalorder %s50, %s51
      %p63 = scmp.eq.s32.totalorder %s20, 1
      %p64 = por %p62, %p63
      %p66 = scmp.ne.s32.totalorder %s51, %s65
      %p67 = scmp.eq.s32.totalorder %s20, 0
      %p68 = por %p66, %p67
      %s70 = sadd.s32 %s69, 1
      %p73 = scmp.eq.s32.totalorder %s14, 1
      %p74 = scmp.ne.s32.totalorder %s69, %s71
      %p75 = scmp.eq.s32.totalorder %s14, 0
      %p76 = por %p74, %p75
      %p77 = scmp.ne.s32.totalorder %s69, %s71
      %p78 = scmp.eq.s32.totalorder %s19, 1
      %p79 = por %p77, %p78
      %p80 = scmp.ne.s32.totalorder %s71, %s72
      %p81 = scmp.eq.s32.totalorder %s19, 0
      %p82 = por %p80, %p81
      %p83 = scmp.ne.s32.totalorder %s71, %s72
      %p84 = scmp.eq.s32.totalorder %s20, 1
      %p85 = por %p83, %p84
      %p87 = scmp.ne.s32.totalorder %s72, %s86
      %p88 = scmp.eq.s32.totalorder %s20, 0
      %p89 = por %p87, %p88
      %s91 = sadd.s32 %s90, 1
      %p94 = scmp.eq.s32.totalorder %s14, 1
      %p95 = scmp.ne.s32.totalorder %s90, %s92
      %p96 = scmp.eq.s32.totalorder %s14, 0
      %p97 = por %p95, %p96
      %p98 = scmp.ne.s32.totalorder %s90, %s92
      %p99 = scmp.eq.s32.totalorder %s19, 1
      %p100 = por %p98, %p99
      %p101 = scmp.ne.s32.totalorder %s92, %s93
      %p102 = scmp.eq.s32.totalorder %s19, 0
      %p103 = por %p101, %p102
      %p104 = scmp.ne.s32.totalorder %s92, %s93
      %p105 = scmp.eq.s32.totalorder %s20, 1
      %p106 = por %p104, %p105
      %p108 = scmp.ne.s32.totalorder %s93, %s107
      %p109 = scmp.eq.s32.totalorder %s20, 0
      %p110 = por %p108, %p109
      %s112 = sadd.s32 %s111, 1
      %p115 = scmp.eq.s32.totalorder %s14, 1
      %p116 = scmp.ne.s32.totalorder %s111, %s113
      %p117 = scmp.eq.s32.totalorder %s14, 0
      %p118 = por %p116, %p117
      %p119 = scmp.ne.s32.totalorder %s111, %s113
      %p120 = scmp.eq.s32.totalorder %s19, 1
      %p121 = por %p119, %p120
      %p122 = scmp.ne.s32.totalorder %s113, %s114
      %p123 = scmp.eq.s32.totalorder %s19, 0
      %p124 = por %p122, %p123
      %p125 = scmp.ne.s32.totalorder %s113, %s114
      %p126 = scmp.eq.s32.totalorder %s20, 1
      %p127 = por %p125, %p126
      %p129 = scmp.ne.s32.totalorder %s114, %s128
      %p130 = scmp.eq.s32.totalorder %s20, 0
      %p131 = por %p129, %p130
      %s132 = ssub.s32 %s14, %s21
      %p133 = scmp.eq.s32.totalorder %s132, 0
      %s135 = sadd.s32 %s134, 1
      %s136 = scalar_select %p133, %s134, %s135
      %p139 = pneg %p133
      %p140 = scmp.eq.s32.totalorder %s14, 1
      %p141 = por %p139, %p140
      %p142 = scmp.ne.s32.totalorder %s134, %s137
      %p143 = scmp.eq.s32.totalorder %s14, 0
      %p144 = por %p142, %p143
      %p145 = scmp.ne.s32.totalorder %s134, %s137
      %p146 = scmp.eq.s32.totalorder %s19, 1
      %p147 = por %p145, %p146
      %p148 = scmp.ne.s32.totalorder %s137, %s138
      %p149 = scmp.eq.s32.totalorder %s19, 0
      %p150 = por %p148, %p149
      %p151 = scmp.ne.s32.totalorder %s137, %s138
      %p152 = scmp.eq.s32.totalorder %s20, 1
      %p153 = por %p151, %p152
      %p155 = scmp.ne.s32.totalorder %s138, %s154
      %p156 = scmp.eq.s32.totalorder %s20, 0
      %p157 = por %p155, %p156
      %p158 = scmp.le.s32.totalorder 1, %s14
      %p159 = scmp.lt.s32.totalorder %s14, 3
      %p160 = pnand %p158, %p159
      %p161 = pneg %p160
      // Predicated region
      $region9: #{zsl_forward.1} parent=5 // pred_check
        _
      $region10: #{zsl_forward.1} parent=5 // pred_check_branch
        %163 = sbr.rel (%p160) target = $region12
      $region11: #{zsl_forward.1} parent=5 // pred_region
        %s164 = ssub.s32 %s14, 1
        // Predicated region
        $region13: #{zsl_forward.1} parent=11 // pred_check
          %p165 = pneg %p61
        $region14: #{zsl_forward.1} parent=11 // pred_check_branch
          %167 = sbr.rel (%p165) target = $region16
        $region15: #{zsl_forward.1} parent=11 // pred_region
          _
        $region16: #{zsl_forward.1} parent=11 // pred_fallthru
          _
        // Predicated region
        $region17: #{zsl_forward.1} parent=11 // pred_check
          %p168 = pneg %p82
        $region18: #{zsl_forward.1} parent=11 // pred_check_branch
          %170 = sbr.rel (%p168) target = $region20
        $region19: #{zsl_forward.1} parent=11 // pred_region
          _
        $region20: #{zsl_forward.1} parent=11 // pred_fallthru
          _
        // Predicated region
        $region21: #{zsl_forward.1} parent=11 // pred_check
          %p171 = pneg %p103
        $region22: #{zsl_forward.1} parent=11 // pred_check_branch
          %173 = sbr.rel (%p171) target = $region24
        $region23: #{zsl_forward.1} parent=11 // pred_region
          _
        $region24: #{zsl_forward.1} parent=11 // pred_fallthru
          _
        // Predicated region
        $region25: #{zsl_forward.1} parent=11 // pred_check
          %p174 = pneg %p124
        $region26: #{zsl_forward.1} parent=11 // pred_check_branch
          %176 = sbr.rel (%p174) target = $region28
        $region27: #{zsl_forward.1} parent=11 // pred_region
          _
        $region28: #{zsl_forward.1} parent=11 // pred_fallthru
          _
      $region12: #{zsl_forward.1} parent=5 // pred_fallthru
        _
      %p177 = scmp.lt.s32.totalorder %s14, 2
      // Predicated region
      $region29: #{zsl_forward.1} parent=5 // pred_check
        %p178 = pneg %p177
      $region30: #{zsl_forward.1} parent=5 // pred_check_branch
        %180 = sbr.rel (%p178) target = $region32
      $region31: #{zsl_forward.1} parent=5 // pred_region
        // Predicated region
        $region33: #{zsl_forward.1} parent=31 // pred_check
          %p181 = pneg %p34
        $region34: #{zsl_forward.1} parent=31 // pred_check_branch
          %183 = sbr.rel (%p181) target = $region36
        $region35: #{zsl_forward.1} parent=31 // pred_region
          %s184 = sand.u32 %s24, 1
          %s185 = sand.u32 %s24, 1
          %s186 = smul.addr %s185, 512
          %s187 = scalar_lea.vmem [#allocation2], %s186
          %s188 = smul.addr %s14, 4
          %s189 = scalar_lea.vmem %s0, %s188
          // Predicated region
          $region37: #{zsl_forward.1} parent=35 // pred_check
            _
          $region38: #{zsl_forward.1} parent=35 // pred_check_branch
            %191 = sbr.rel (0) target = $region40
          $region39: #{zsl_forward.1} parent=35 // pred_region
            // Predicated region
            $region41: #{zsl_forward.1} parent=39 // pred_check
              _
            $region42: #{zsl_forward.1} parent=39 // pred_check_branch
              %193 = sbr.rel target = $region44
            $region43: #{zsl_forward.1} parent=39 // pred_region
              // Predicated region
              $region56: #{zsl_forward.1} parent=43 // pred_check
                _
              $region57: #{zsl_forward.1} parent=43 // pred_check_branch
                %463 = sbr.rel (0) target = $region59
              $region58: #{zsl_forward.1} parent=43 // pred_region
                loop: start=0, step=1, limit=1
                $region60: #{zsl_forward.1} parent=58 // loop_pre_header
                  _
                $region61: #{zsl_forward.1} parent=58 // loop_header
                  %s465 = sphi 0, %s469
                  %p466 = scmp.ge.s32.totalorder %s465, 1
                  %s470 = sphi %s189, %s189
                  %s471 = sphi %s187, %s187
                $region62: #{zsl_forward.1} parent=58 // loop_header_branch
                  %468 = sbr.rel (%p466) target = $region66
                $region63: #{zsl_forward.1} parent=58 // loop_body
                  _
                $region64: #{zsl_forward.1} parent=58 // loop_footer
                  %s469 = sadd.s32 1, %s465
                $region65: #{zsl_forward.1} parent=58 // loop_footer_branch
                  %464 = sbr.rel target = $region61
                $region66: #{zsl_forward.1} parent=58 // loop_exit
                  _
                %s473 = ssub.s32 16, 1
                loop: start=0, step=1, limit=1
                $region67: #{zsl_forward.1} parent=58 // loop_pre_header
                  _
                $region68: #{zsl_forward.1} parent=58 // loop_header
                  %s475 = sphi 0, %s479
                  %p476 = scmp.ge.s32.totalorder %s475, 1
                  %s480 = sphi %s189, %s189
                  %s481 = sphi %s187, %s187
                $region69: #{zsl_forward.1} parent=58 // loop_header_branch
                  %478 = sbr.rel (%p476) target = $region73
                $region70: #{zsl_forward.1} parent=58 // loop_body
                  %v482 = vld [vmem:[%s480] sm:%s473]
                  %483 = vst [vmem:[%s481] sm:%s473] %v482
                  %v484 = vld [vmem:[%s480 + $0x8] sm:%s473]
                  %485 = vst [vmem:[%s481 + $0x4] sm:%s473] %v484
                  %v486 = vld [vmem:[%s480 + $0x10] sm:%s473]
                  %487 = vst [vmem:[%s481 + $0x8] sm:%s473] %v486
                  %v488 = vld [vmem:[%s480 + $0x18] sm:%s473]
                  %489 = vst [vmem:[%s481 + $0xc] sm:%s473] %v488
                  %v490 = vld [vmem:[%s480 + $0x20] sm:%s473]
                  %491 = vst [vmem:[%s481 + $0x10] sm:%s473] %v490
                  %v492 = vld [vmem:[%s480 + $0x28] sm:%s473]
                  %493 = vst [vmem:[%s481 + $0x14] sm:%s473] %v492
                  %v494 = vld [vmem:[%s480 + $0x30] sm:%s473]
                  %495 = vst [vmem:[%s481 + $0x18] sm:%s473] %v494
                  %v496 = vld [vmem:[%s480 + $0x38] sm:%s473]
                  %497 = vst [vmem:[%s481 + $0x1c] sm:%s473] %v496
                  %v498 = vld [vmem:[%s480 + $0x40] sm:%s473]
                  %499 = vst [vmem:[%s481 + $0x20] sm:%s473] %v498
                  %v500 = vld [vmem:[%s480 + $0x48] sm:%s473]
                  %501 = vst [vmem:[%s481 + $0x24] sm:%s473] %v500
                  %v502 = vld [vmem:[%s480 + $0x50] sm:%s473]
                  %503 = vst [vmem:[%s481 + $0x28] sm:%s473] %v502
                  %v504 = vld [vmem:[%s480 + $0x58] sm:%s473]
                  %505 = vst [vmem:[%s481 + $0x2c] sm:%s473] %v504
                  %v506 = vld [vmem:[%s480 + $0x60] sm:%s473]
                  %507 = vst [vmem:[%s481 + $0x30] sm:%s473] %v506
                  %v508 = vld [vmem:[%s480 + $0x68] sm:%s473]
                  %509 = vst [vmem:[%s481 + $0x34] sm:%s473] %v508
                  %v510 = vld [vmem:[%s480 + $0x70] sm:%s473]
                  %511 = vst [vmem:[%s481 + $0x38] sm:%s473] %v510
                  %v512 = vld [vmem:[%s480 + $0x78] sm:%s473]
                  %513 = vst [vmem:[%s481 + $0x3c] sm:%s473] %v512
                  %v514 = vld [vmem:[%s480 + $0x80] sm:%s473]
                  %515 = vst [vmem:[%s481 + $0x40] sm:%s473] %v514
                  %v516 = vld [vmem:[%s480 + $0x88] sm:%s473]
                  %517 = vst [vmem:[%s481 + $0x44] sm:%s473] %v516
                  %v518 = vld [vmem:[%s480 + $0x90] sm:%s473]
                  %519 = vst [vmem:[%s481 + $0x48] sm:%s473] %v518
                  %v520 = vld [vmem:[%s480 + $0x98] sm:%s473]
                  %521 = vst [vmem:[%s481 + $0x4c] sm:%s473] %v520
                  %v522 = vld [vmem:[%s480 + $0xa0] sm:%s473]
                  %523 = vst [vmem:[%s481 + $0x50] sm:%s473] %v522
                  %v524 = vld [vmem:[%s480 + $0xa8] sm:%s473]
                  %525 = vst [vmem:[%s481 + $0x54] sm:%s473] %v524
                  %v526 = vld [vmem:[%s480 + $0xb0] sm:%s473]
                  %527 = vst [vmem:[%s481 + $0x58] sm:%s473] %v526
                  %v528 = vld [vmem:[%s480 + $0xb8] sm:%s473]
                  %529 = vst [vmem:[%s481 + $0x5c] sm:%s473] %v528
                  %v530 = vld [vmem:[%s480 + $0xc0] sm:%s473]
                  %531 = vst [vmem:[%s481 + $0x60] sm:%s473] %v530
                  %v532 = vld [vmem:[%s480 + $0xc8] sm:%s473]
                  %533 = vst [vmem:[%s481 + $0x64] sm:%s473] %v532
                  %v534 = vld [vmem:[%s480 + $0xd0] sm:%s473]
                  %535 = vst [vmem:[%s481 + $0x68] sm:%s473] %v534
                  %v536 = vld [vmem:[%s480 + $0xd8] sm:%s473]
                  %537 = vst [vmem:[%s481 + $0x6c] sm:%s473] %v536
                  %v538 = vld [vmem:[%s480 + $0xe0] sm:%s473]
                  %539 = vst [vmem:[%s481 + $0x70] sm:%s473] %v538
                  %v540 = vld [vmem:[%s480 + $0xe8] sm:%s473]
                  %541 = vst [vmem:[%s481 + $0x74] sm:%s473] %v540
                  %v542 = vld [vmem:[%s480 + $0xf0] sm:%s473]
                  %543 = vst [vmem:[%s481 + $0x78] sm:%s473] %v542
                  %v544 = vld [vmem:[%s480 + $0xf8] sm:%s473]
                  %545 = vst [vmem:[%s481 + $0x7c] sm:%s473] %v544
                  %v546 = vld [vmem:[%s480 + $0x100] sm:%s473]
                  %547 = vst [vmem:[%s481 + $0x80] sm:%s473] %v546
                  %v548 = vld [vmem:[%s480 + $0x108] sm:%s473]
                  %549 = vst [vmem:[%s481 + $0x84] sm:%s473] %v548
                  %v550 = vld [vmem:[%s480 + $0x110] sm:%s473]
                  %551 = vst [vmem:[%s481 + $0x88] sm:%s473] %v550
                  %v552 = vld [vmem:[%s480 + $0x118] sm:%s473]
                  %553 = vst [vmem:[%s481 + $0x8c] sm:%s473] %v552
                  %v554 = vld [vmem:[%s480 + $0x120] sm:%s473]
                  %555 = vst [vmem:[%s481 + $0x90] sm:%s473] %v554
                  %v556 = vld [vmem:[%s480 + $0x128] sm:%s473]
                  %557 = vst [vmem:[%s481 + $0x94] sm:%s473] %v556
                  %v558 = vld [vmem:[%s480 + $0x130] sm:%s473]
                  %559 = vst [vmem:[%s481 + $0x98] sm:%s473] %v558
                  %v560 = vld [vmem:[%s480 + $0x138] sm:%s473]
                  %561 = vst [vmem:[%s481 + $0x9c] sm:%s473] %v560
                  %v562 = vld [vmem:[%s480 + $0x140] sm:%s473]
                  %563 = vst [vmem:[%s481 + $0xa0] sm:%s473] %v562
                  %v564 = vld [vmem:[%s480 + $0x148] sm:%s473]
                  %565 = vst [vmem:[%s481 + $0xa4] sm:%s473] %v564
                  %v566 = vld [vmem:[%s480 + $0x150] sm:%s473]
                  %567 = vst [vmem:[%s481 + $0xa8] sm:%s473] %v566
                  %v568 = vld [vmem:[%s480 + $0x158] sm:%s473]
                  %569 = vst [vmem:[%s481 + $0xac] sm:%s473] %v568
                  %v570 = vld [vmem:[%s480 + $0x160] sm:%s473]
                  %571 = vst [vmem:[%s481 + $0xb0] sm:%s473] %v570
                  %v572 = vld [vmem:[%s480 + $0x168] sm:%s473]
                  %573 = vst [vmem:[%s481 + $0xb4] sm:%s473] %v572
                  %v574 = vld [vmem:[%s480 + $0x170] sm:%s473]
                  %575 = vst [vmem:[%s481 + $0xb8] sm:%s473] %v574
                  %v576 = vld [vmem:[%s480 + $0x178] sm:%s473]
                  %577 = vst [vmem:[%s481 + $0xbc] sm:%s473] %v576
                  %v578 = vld [vmem:[%s480 + $0x180] sm:%s473]
                  %579 = vst [vmem:[%s481 + $0xc0] sm:%s473] %v578
                  %v580 = vld [vmem:[%s480 + $0x188] sm:%s473]
                  %581 = vst [vmem:[%s481 + $0xc4] sm:%s473] %v580
                  %v582 = vld [vmem:[%s480 + $0x190] sm:%s473]
                  %583 = vst [vmem:[%s481 + $0xc8] sm:%s473] %v582
                  %v584 = vld [vmem:[%s480 + $0x198] sm:%s473]
                  %585 = vst [vmem:[%s481 + $0xcc] sm:%s473] %v584
                  %v586 = vld [vmem:[%s480 + $0x1a0] sm:%s473]
                  %587 = vst [vmem:[%s481 + $0xd0] sm:%s473] %v586
                  %v588 = vld [vmem:[%s480 + $0x1a8] sm:%s473]
                  %589 = vst [vmem:[%s481 + $0xd4] sm:%s473] %v588
                  %v590 = vld [vmem:[%s480 + $0x1b0] sm:%s473]
                  %591 = vst [vmem:[%s481 + $0xd8] sm:%s473] %v590
                  %v592 = vld [vmem:[%s480 + $0x1b8] sm:%s473]
                  %593 = vst [vmem:[%s481 + $0xdc] sm:%s473] %v592
                  %v594 = vld [vmem:[%s480 + $0x1c0] sm:%s473]
                  %595 = vst [vmem:[%s481 + $0xe0] sm:%s473] %v594
                  %v596 = vld [vmem:[%s480 + $0x1c8] sm:%s473]
                  %597 = vst [vmem:[%s481 + $0xe4] sm:%s473] %v596
                  %v598 = vld [vmem:[%s480 + $0x1d0] sm:%s473]
                  %599 = vst [vmem:[%s481 + $0xe8] sm:%s473] %v598
                  %v600 = vld [vmem:[%s480 + $0x1d8] sm:%s473]
                  %601 = vst [vmem:[%s481 + $0xec] sm:%s473] %v600
                  %v602 = vld [vmem:[%s480 + $0x1e0] sm:%s473]
                  %603 = vst [vmem:[%s481 + $0xf0] sm:%s473] %v602
                  %v604 = vld [vmem:[%s480 + $0x1e8] sm:%s473]
                  %605 = vst [vmem:[%s481 + $0xf4] sm:%s473] %v604
                  %v606 = vld [vmem:[%s480 + $0x1f0] sm:%s473]
                  %607 = vst [vmem:[%s481 + $0xf8] sm:%s473] %v606
                  %v608 = vld [vmem:[%s480 + $0x1f8] sm:%s473]
                  %609 = vst [vmem:[%s481 + $0xfc] sm:%s473] %v608
                  %v610 = vld [vmem:[%s480 + $0x200] sm:%s473]
                  %611 = vst [vmem:[%s481 + $0x100] sm:%s473] %v610
                  %v612 = vld [vmem:[%s480 + $0x208] sm:%s473]
                  %613 = vst [vmem:[%s481 + $0x104] sm:%s473] %v612
                  %v614 = vld [vmem:[%s480 + $0x210] sm:%s473]
                  %615 = vst [vmem:[%s481 + $0x108] sm:%s473] %v614
                  %v616 = vld [vmem:[%s480 + $0x218] sm:%s473]
                  %617 = vst [vmem:[%s481 + $0x10c] sm:%s473] %v616
                  %v618 = vld [vmem:[%s480 + $0x220] sm:%s473]
                  %619 = vst [vmem:[%s481 + $0x110] sm:%s473] %v618
                  %v620 = vld [vmem:[%s480 + $0x228] sm:%s473]
                  %621 = vst [vmem:[%s481 + $0x114] sm:%s473] %v620
                  %v622 = vld [vmem:[%s480 + $0x230] sm:%s473]
                  %623 = vst [vmem:[%s481 + $0x118] sm:%s473] %v622
                  %v624 = vld [vmem:[%s480 + $0x238] sm:%s473]
                  %625 = vst [vmem:[%s481 + $0x11c] sm:%s473] %v624
                  %v626 = vld [vmem:[%s480 + $0x240] sm:%s473]
                  %627 = vst [vmem:[%s481 + $0x120] sm:%s473] %v626
                  %v628 = vld [vmem:[%s480 + $0x248] sm:%s473]
                  %629 = vst [vmem:[%s481 + $0x124] sm:%s473] %v628
                  %v630 = vld [vmem:[%s480 + $0x250] sm:%s473]
                  %631 = vst [vmem:[%s481 + $0x128] sm:%s473] %v630
                  %v632 = vld [vmem:[%s480 + $0x258] sm:%s473]
                  %633 = vst [vmem:[%s481 + $0x12c] sm:%s473] %v632
                  %v634 = vld [vmem:[%s480 + $0x260] sm:%s473]
                  %635 = vst [vmem:[%s481 + $0x130] sm:%s473] %v634
                  %v636 = vld [vmem:[%s480 + $0x268] sm:%s473]
                  %637 = vst [vmem:[%s481 + $0x134] sm:%s473] %v636
                  %v638 = vld [vmem:[%s480 + $0x270] sm:%s473]
                  %639 = vst [vmem:[%s481 + $0x138] sm:%s473] %v638
                  %v640 = vld [vmem:[%s480 + $0x278] sm:%s473]
                  %641 = vst [vmem:[%s481 + $0x13c] sm:%s473] %v640
                  %v642 = vld [vmem:[%s480 + $0x280] sm:%s473]
                  %643 = vst [vmem:[%s481 + $0x140] sm:%s473] %v642
                  %v644 = vld [vmem:[%s480 + $0x288] sm:%s473]
                  %645 = vst [vmem:[%s481 + $0x144] sm:%s473] %v644
                  %v646 = vld [vmem:[%s480 + $0x290] sm:%s473]
                  %647 = vst [vmem:[%s481 + $0x148] sm:%s473] %v646
                  %v648 = vld [vmem:[%s480 + $0x298] sm:%s473]
                  %649 = vst [vmem:[%s481 + $0x14c] sm:%s473] %v648
                  %v650 = vld [vmem:[%s480 + $0x2a0] sm:%s473]
                  %651 = vst [vmem:[%s481 + $0x150] sm:%s473] %v650
                  %v652 = vld [vmem:[%s480 + $0x2a8] sm:%s473]
                  %653 = vst [vmem:[%s481 + $0x154] sm:%s473] %v652
                  %v654 = vld [vmem:[%s480 + $0x2b0] sm:%s473]
                  %655 = vst [vmem:[%s481 + $0x158] sm:%s473] %v654
                  %v656 = vld [vmem:[%s480 + $0x2b8] sm:%s473]
                  %657 = vst [vmem:[%s481 + $0x15c] sm:%s473] %v656
                  %v658 = vld [vmem:[%s480 + $0x2c0] sm:%s473]
                  %659 = vst [vmem:[%s481 + $0x160] sm:%s473] %v658
                  %v660 = vld [vmem:[%s480 + $0x2c8] sm:%s473]
                  %661 = vst [vmem:[%s481 + $0x164] sm:%s473] %v660
                  %v662 = vld [vmem:[%s480 + $0x2d0] sm:%s473]
                  %663 = vst [vmem:[%s481 + $0x168] sm:%s473] %v662
                  %v664 = vld [vmem:[%s480 + $0x2d8] sm:%s473]
                  %665 = vst [vmem:[%s481 + $0x16c] sm:%s473] %v664
                  %v666 = vld [vmem:[%s480 + $0x2e0] sm:%s473]
                  %667 = vst [vmem:[%s481 + $0x170] sm:%s473] %v666
                  %v668 = vld [vmem:[%s480 + $0x2e8] sm:%s473]
                  %669 = vst [vmem:[%s481 + $0x174] sm:%s473] %v668
                  %v670 = vld [vmem:[%s480 + $0x2f0] sm:%s473]
                  %671 = vst [vmem:[%s481 + $0x178] sm:%s473] %v670
                  %v672 = vld [vmem:[%s480 + $0x2f8] sm:%s473]
                  %673 = vst [vmem:[%s481 + $0x17c] sm:%s473] %v672
                  %v674 = vld [vmem:[%s480 + $0x300] sm:%s473]
                  %675 = vst [vmem:[%s481 + $0x180] sm:%s473] %v674
                  %v676 = vld [vmem:[%s480 + $0x308] sm:%s473]
                  %677 = vst [vmem:[%s481 + $0x184] sm:%s473] %v676
                  %v678 = vld [vmem:[%s480 + $0x310] sm:%s473]
                  %679 = vst [vmem:[%s481 + $0x188] sm:%s473] %v678
                  %v680 = vld [vmem:[%s480 + $0x318] sm:%s473]
                  %681 = vst [vmem:[%s481 + $0x18c] sm:%s473] %v680
                  %v682 = vld [vmem:[%s480 + $0x320] sm:%s473]
                  %683 = vst [vmem:[%s481 + $0x190] sm:%s473] %v682
                  %v684 = vld [vmem:[%s480 + $0x328] sm:%s473]
                  %685 = vst [vmem:[%s481 + $0x194] sm:%s473] %v684
                  %v686 = vld [vmem:[%s480 + $0x330] sm:%s473]
                  %687 = vst [vmem:[%s481 + $0x198] sm:%s473] %v686
                  %v688 = vld [vmem:[%s480 + $0x338] sm:%s473]
                  %689 = vst [vmem:[%s481 + $0x19c] sm:%s473] %v688
                  %v690 = vld [vmem:[%s480 + $0x340] sm:%s473]
                  %691 = vst [vmem:[%s481 + $0x1a0] sm:%s473] %v690
                  %v692 = vld [vmem:[%s480 + $0x348] sm:%s473]
                  %693 = vst [vmem:[%s481 + $0x1a4] sm:%s473] %v692
                  %v694 = vld [vmem:[%s480 + $0x350] sm:%s473]
                  %695 = vst [vmem:[%s481 + $0x1a8] sm:%s473] %v694
                  %v696 = vld [vmem:[%s480 + $0x358] sm:%s473]
                  %697 = vst [vmem:[%s481 + $0x1ac] sm:%s473] %v696
                  %v698 = vld [vmem:[%s480 + $0x360] sm:%s473]
                  %699 = vst [vmem:[%s481 + $0x1b0] sm:%s473] %v698
                  %v700 = vld [vmem:[%s480 + $0x368] sm:%s473]
                  %701 = vst [vmem:[%s481 + $0x1b4] sm:%s473] %v700
                  %v702 = vld [vmem:[%s480 + $0x370] sm:%s473]
                  %703 = vst [vmem:[%s481 + $0x1b8] sm:%s473] %v702
                  %v704 = vld [vmem:[%s480 + $0x378] sm:%s473]
                  %705 = vst [vmem:[%s481 + $0x1bc] sm:%s473] %v704
                  %v706 = vld [vmem:[%s480 + $0x380] sm:%s473]
                  %707 = vst [vmem:[%s481 + $0x1c0] sm:%s473] %v706
                  %v708 = vld [vmem:[%s480 + $0x388] sm:%s473]
                  %709 = vst [vmem:[%s481 + $0x1c4] sm:%s473] %v708
                  %v710 = vld [vmem:[%s480 + $0x390] sm:%s473]
                  %711 = vst [vmem:[%s481 + $0x1c8] sm:%s473] %v710
                  %v712 = vld [vmem:[%s480 + $0x398] sm:%s473]
                  %713 = vst [vmem:[%s481 + $0x1cc] sm:%s473] %v712
                  %v714 = vld [vmem:[%s480 + $0x3a0] sm:%s473]
                  %715 = vst [vmem:[%s481 + $0x1d0] sm:%s473] %v714
                  %v716 = vld [vmem:[%s480 + $0x3a8] sm:%s473]
                  %717 = vst [vmem:[%s481 + $0x1d4] sm:%s473] %v716
                  %v718 = vld [vmem:[%s480 + $0x3b0] sm:%s473]
                  %719 = vst [vmem:[%s481 + $0x1d8] sm:%s473] %v718
                  %v720 = vld [vmem:[%s480 + $0x3b8] sm:%s473]
                  %721 = vst [vmem:[%s481 + $0x1dc] sm:%s473] %v720
                  %v722 = vld [vmem:[%s480 + $0x3c0] sm:%s473]
                  %723 = vst [vmem:[%s481 + $0x1e0] sm:%s473] %v722
                  %v724 = vld [vmem:[%s480 + $0x3c8] sm:%s473]
                  %725 = vst [vmem:[%s481 + $0x1e4] sm:%s473] %v724
                  %v726 = vld [vmem:[%s480 + $0x3d0] sm:%s473]
                  %727 = vst [vmem:[%s481 + $0x1e8] sm:%s473] %v726
                  %v728 = vld [vmem:[%s480 + $0x3d8] sm:%s473]
                  %729 = vst [vmem:[%s481 + $0x1ec] sm:%s473] %v728
                  %v730 = vld [vmem:[%s480 + $0x3e0] sm:%s473]
                  %731 = vst [vmem:[%s481 + $0x1f0] sm:%s473] %v730
                  %v732 = vld [vmem:[%s480 + $0x3e8] sm:%s473]
                  %733 = vst [vmem:[%s481 + $0x1f4] sm:%s473] %v732
                  %v734 = vld [vmem:[%s480 + $0x3f0] sm:%s473]
                  %735 = vst [vmem:[%s481 + $0x1f8] sm:%s473] %v734
                  %v736 = vld [vmem:[%s480 + $0x3f8] sm:%s473]
                  %737 = vst [vmem:[%s481 + $0x1fc] sm:%s473] %v736
                $region71: #{zsl_forward.1} parent=58 // loop_footer
                  %s479 = sadd.s32 1, %s475
                $region72: #{zsl_forward.1} parent=58 // loop_footer_branch
                  %474 = sbr.rel target = $region68
                $region73: #{zsl_forward.1} parent=58 // loop_exit
                  _
              $region59: #{zsl_forward.1} parent=43 // pred_fallthru
                _
            $region44: #{zsl_forward.1} parent=39 // pred_fallthru
              _
            // Predicated region
            $region45: #{zsl_forward.1} parent=39 // pred_check
              _
            $region46: #{zsl_forward.1} parent=39 // pred_check_branch
              %195 = sbr.rel (0) target = $region48
            $region47: #{zsl_forward.1} parent=39 // pred_region
              %s197 = ssub.s32 16, 1
              loop: start=0, step=1, limit=1
              $region49: #{zsl_forward.1} parent=47 // loop_pre_header
                _
              $region50: #{zsl_forward.1} parent=47 // loop_header
                %s199 = sphi 0, %s203
                %p200 = scmp.ge.s32.totalorder %s199, 1
                %s204 = sphi %s189, %s189
                %s205 = sphi %s187, %s187
              $region51: #{zsl_forward.1} parent=47 // loop_header_branch
                %202 = sbr.rel (%p200) target = $region55
              $region52: #{zsl_forward.1} parent=47 // loop_body
                %v206 = vld [vmem:[%s204] sm:%s197]
                %207 = vst [vmem:[%s205] sm:%s197] %v206
                %v208 = vld [vmem:[%s204 + $0x8] sm:%s197]
                %209 = vst [vmem:[%s205 + $0x4] sm:%s197] %v208
                %v210 = vld [vmem:[%s204 + $0x10] sm:%s197]
                %211 = vst [vmem:[%s205 + $0x8] sm:%s197] %v210
                %v212 = vld [vmem:[%s204 + $0x18] sm:%s197]
                %213 = vst [vmem:[%s205 + $0xc] sm:%s197] %v212
                %v214 = vld [vmem:[%s204 + $0x20] sm:%s197]
                %215 = vst [vmem:[%s205 + $0x10] sm:%s197] %v214
                %v216 = vld [vmem:[%s204 + $0x28] sm:%s197]
                %217 = vst [vmem:[%s205 + $0x14] sm:%s197] %v216
                %v218 = vld [vmem:[%s204 + $0x30] sm:%s197]
                %219 = vst [vmem:[%s205 + $0x18] sm:%s197] %v218
                %v220 = vld [vmem:[%s204 + $0x38] sm:%s197]
                %221 = vst [vmem:[%s205 + $0x1c] sm:%s197] %v220
                %v222 = vld [vmem:[%s204 + $0x40] sm:%s197]
                %223 = vst [vmem:[%s205 + $0x20] sm:%s197] %v222
                %v224 = vld [vmem:[%s204 + $0x48] sm:%s197]
                %225 = vst [vmem:[%s205 + $0x24] sm:%s197] %v224
                %v226 = vld [vmem:[%s204 + $0x50] sm:%s197]
                %227 = vst [vmem:[%s205 + $0x28] sm:%s197] %v226
                %v228 = vld [vmem:[%s204 + $0x58] sm:%s197]
                %229 = vst [vmem:[%s205 + $0x2c] sm:%s197] %v228
                %v230 = vld [vmem:[%s204 + $0x60] sm:%s197]
                %231 = vst [vmem:[%s205 + $0x30] sm:%s197] %v230
                %v232 = vld [vmem:[%s204 + $0x68] sm:%s197]
                %233 = vst [vmem:[%s205 + $0x34] sm:%s197] %v232
                %v234 = vld [vmem:[%s204 + $0x70] sm:%s197]
                %235 = vst [vmem:[%s205 + $0x38] sm:%s197] %v234
                %v236 = vld [vmem:[%s204 + $0x78] sm:%s197]
                %237 = vst [vmem:[%s205 + $0x3c] sm:%s197] %v236
                %v238 = vld [vmem:[%s204 + $0x80] sm:%s197]
                %239 = vst [vmem:[%s205 + $0x40] sm:%s197] %v238
                %v240 = vld [vmem:[%s204 + $0x88] sm:%s197]
                %241 = vst [vmem:[%s205 + $0x44] sm:%s197] %v240
                %v242 = vld [vmem:[%s204 + $0x90] sm:%s197]
                %243 = vst [vmem:[%s205 + $0x48] sm:%s197] %v242
                %v244 = vld [vmem:[%s204 + $0x98] sm:%s197]
                %245 = vst [vmem:[%s205 + $0x4c] sm:%s197] %v244
                %v246 = vld [vmem:[%s204 + $0xa0] sm:%s197]
                %247 = vst [vmem:[%s205 + $0x50] sm:%s197] %v246
                %v248 = vld [vmem:[%s204 + $0xa8] sm:%s197]
                %249 = vst [vmem:[%s205 + $0x54] sm:%s197] %v248
                %v250 = vld [vmem:[%s204 + $0xb0] sm:%s197]
                %251 = vst [vmem:[%s205 + $0x58] sm:%s197] %v250
                %v252 = vld [vmem:[%s204 + $0xb8] sm:%s197]
                %253 = vst [vmem:[%s205 + $0x5c] sm:%s197] %v252
                %v254 = vld [vmem:[%s204 + $0xc0] sm:%s197]
                %255 = vst [vmem:[%s205 + $0x60] sm:%s197] %v254
                %v256 = vld [vmem:[%s204 + $0xc8] sm:%s197]
                %257 = vst [vmem:[%s205 + $0x64] sm:%s197] %v256
                %v258 = vld [vmem:[%s204 + $0xd0] sm:%s197]
                %259 = vst [vmem:[%s205 + $0x68] sm:%s197] %v258
                %v260 = vld [vmem:[%s204 + $0xd8] sm:%s197]
                %261 = vst [vmem:[%s205 + $0x6c] sm:%s197] %v260
                %v262 = vld [vmem:[%s204 + $0xe0] sm:%s197]
                %263 = vst [vmem:[%s205 + $0x70] sm:%s197] %v262
                %v264 = vld [vmem:[%s204 + $0xe8] sm:%s197]
                %265 = vst [vmem:[%s205 + $0x74] sm:%s197] %v264
                %v266 = vld [vmem:[%s204 + $0xf0] sm:%s197]
                %267 = vst [vmem:[%s205 + $0x78] sm:%s197] %v266
                %v268 = vld [vmem:[%s204 + $0xf8] sm:%s197]
                %269 = vst [vmem:[%s205 + $0x7c] sm:%s197] %v268
                %v270 = vld [vmem:[%s204 + $0x100] sm:%s197]
                %271 = vst [vmem:[%s205 + $0x80] sm:%s197] %v270
                %v272 = vld [vmem:[%s204 + $0x108] sm:%s197]
                %273 = vst [vmem:[%s205 + $0x84] sm:%s197] %v272
                %v274 = vld [vmem:[%s204 + $0x110] sm:%s197]
                %275 = vst [vmem:[%s205 + $0x88] sm:%s197] %v274
                %v276 = vld [vmem:[%s204 + $0x118] sm:%s197]
                %277 = vst [vmem:[%s205 + $0x8c] sm:%s197] %v276
                %v278 = vld [vmem:[%s204 + $0x120] sm:%s197]
                %279 = vst [vmem:[%s205 + $0x90] sm:%s197] %v278
                %v280 = vld [vmem:[%s204 + $0x128] sm:%s197]
                %281 = vst [vmem:[%s205 + $0x94] sm:%s197] %v280
                %v282 = vld [vmem:[%s204 + $0x130] sm:%s197]
                %283 = vst [vmem:[%s205 + $0x98] sm:%s197] %v282
                %v284 = vld [vmem:[%s204 + $0x138] sm:%s197]
                %285 = vst [vmem:[%s205 + $0x9c] sm:%s197] %v284
                %v286 = vld [vmem:[%s204 + $0x140] sm:%s197]
                %287 = vst [vmem:[%s205 + $0xa0] sm:%s197] %v286
                %v288 = vld [vmem:[%s204 + $0x148] sm:%s197]
                %289 = vst [vmem:[%s205 + $0xa4] sm:%s197] %v288
                %v290 = vld [vmem:[%s204 + $0x150] sm:%s197]
                %291 = vst [vmem:[%s205 + $0xa8] sm:%s197] %v290
                %v292 = vld [vmem:[%s204 + $0x158] sm:%s197]
                %293 = vst [vmem:[%s205 + $0xac] sm:%s197] %v292
                %v294 = vld [vmem:[%s204 + $0x160] sm:%s197]
                %295 = vst [vmem:[%s205 + $0xb0] sm:%s197] %v294
                %v296 = vld [vmem:[%s204 + $0x168] sm:%s197]
                %297 = vst [vmem:[%s205 + $0xb4] sm:%s197] %v296
                %v298 = vld [vmem:[%s204 + $0x170] sm:%s197]
                %299 = vst [vmem:[%s205 + $0xb8] sm:%s197] %v298
                %v300 = vld [vmem:[%s204 + $0x178] sm:%s197]
                %301 = vst [vmem:[%s205 + $0xbc] sm:%s197] %v300
                %v302 = vld [vmem:[%s204 + $0x180] sm:%s197]
                %303 = vst [vmem:[%s205 + $0xc0] sm:%s197] %v302
                %v304 = vld [vmem:[%s204 + $0x188] sm:%s197]
                %305 = vst [vmem:[%s205 + $0xc4] sm:%s197] %v304
                %v306 = vld [vmem:[%s204 + $0x190] sm:%s197]
                %307 = vst [vmem:[%s205 + $0xc8] sm:%s197] %v306
                %v308 = vld [vmem:[%s204 + $0x198] sm:%s197]
                %309 = vst [vmem:[%s205 + $0xcc] sm:%s197] %v308
                %v310 = vld [vmem:[%s204 + $0x1a0] sm:%s197]
                %311 = vst [vmem:[%s205 + $0xd0] sm:%s197] %v310
                %v312 = vld [vmem:[%s204 + $0x1a8] sm:%s197]
                %313 = vst [vmem:[%s205 + $0xd4] sm:%s197] %v312
                %v314 = vld [vmem:[%s204 + $0x1b0] sm:%s197]
                %315 = vst [vmem:[%s205 + $0xd8] sm:%s197] %v314
                %v316 = vld [vmem:[%s204 + $0x1b8] sm:%s197]
                %317 = vst [vmem:[%s205 + $0xdc] sm:%s197] %v316
                %v318 = vld [vmem:[%s204 + $0x1c0] sm:%s197]
                %319 = vst [vmem:[%s205 + $0xe0] sm:%s197] %v318
                %v320 = vld [vmem:[%s204 + $0x1c8] sm:%s197]
                %321 = vst [vmem:[%s205 + $0xe4] sm:%s197] %v320
                %v322 = vld [vmem:[%s204 + $0x1d0] sm:%s197]
                %323 = vst [vmem:[%s205 + $0xe8] sm:%s197] %v322
                %v324 = vld [vmem:[%s204 + $0x1d8] sm:%s197]
                %325 = vst [vmem:[%s205 + $0xec] sm:%s197] %v324
                %v326 = vld [vmem:[%s204 + $0x1e0] sm:%s197]
                %327 = vst [vmem:[%s205 + $0xf0] sm:%s197] %v326
                %v328 = vld [vmem:[%s204 + $0x1e8] sm:%s197]
                %329 = vst [vmem:[%s205 + $0xf4] sm:%s197] %v328
                %v330 = vld [vmem:[%s204 + $0x1f0] sm:%s197]
                %331 = vst [vmem:[%s205 + $0xf8] sm:%s197] %v330
                %v332 = vld [vmem:[%s204 + $0x1f8] sm:%s197]
                %333 = vst [vmem:[%s205 + $0xfc] sm:%s197] %v332
                %v334 = vld [vmem:[%s204 + $0x200] sm:%s197]
                %335 = vst [vmem:[%s205 + $0x100] sm:%s197] %v334
                %v336 = vld [vmem:[%s204 + $0x208] sm:%s197]
                %337 = vst [vmem:[%s205 + $0x104] sm:%s197] %v336
                %v338 = vld [vmem:[%s204 + $0x210] sm:%s197]
                %339 = vst [vmem:[%s205 + $0x108] sm:%s197] %v338
                %v340 = vld [vmem:[%s204 + $0x218] sm:%s197]
                %341 = vst [vmem:[%s205 + $0x10c] sm:%s197] %v340
                %v342 = vld [vmem:[%s204 + $0x220] sm:%s197]
                %343 = vst [vmem:[%s205 + $0x110] sm:%s197] %v342
                %v344 = vld [vmem:[%s204 + $0x228] sm:%s197]
                %345 = vst [vmem:[%s205 + $0x114] sm:%s197] %v344
                %v346 = vld [vmem:[%s204 + $0x230] sm:%s197]
                %347 = vst [vmem:[%s205 + $0x118] sm:%s197] %v346
                %v348 = vld [vmem:[%s204 + $0x238] sm:%s197]
                %349 = vst [vmem:[%s205 + $0x11c] sm:%s197] %v348
                %v350 = vld [vmem:[%s204 + $0x240] sm:%s197]
                %351 = vst [vmem:[%s205 + $0x120] sm:%s197] %v350
                %v352 = vld [vmem:[%s204 + $0x248] sm:%s197]
                %353 = vst [vmem:[%s205 + $0x124] sm:%s197] %v352
                %v354 = vld [vmem:[%s204 + $0x250] sm:%s197]
                %355 = vst [vmem:[%s205 + $0x128] sm:%s197] %v354
                %v356 = vld [vmem:[%s204 + $0x258] sm:%s197]
                %357 = vst [vmem:[%s205 + $0x12c] sm:%s197] %v356
                %v358 = vld [vmem:[%s204 + $0x260] sm:%s197]
                %359 = vst [vmem:[%s205 + $0x130] sm:%s197] %v358
                %v360 = vld [vmem:[%s204 + $0x268] sm:%s197]
                %361 = vst [vmem:[%s205 + $0x134] sm:%s197] %v360
                %v362 = vld [vmem:[%s204 + $0x270] sm:%s197]
                %363 = vst [vmem:[%s205 + $0x138] sm:%s197] %v362
                %v364 = vld [vmem:[%s204 + $0x278] sm:%s197]
                %365 = vst [vmem:[%s205 + $0x13c] sm:%s197] %v364
                %v366 = vld [vmem:[%s204 + $0x280] sm:%s197]
                %367 = vst [vmem:[%s205 + $0x140] sm:%s197] %v366
                %v368 = vld [vmem:[%s204 + $0x288] sm:%s197]
                %369 = vst [vmem:[%s205 + $0x144] sm:%s197] %v368
                %v370 = vld [vmem:[%s204 + $0x290] sm:%s197]
                %371 = vst [vmem:[%s205 + $0x148] sm:%s197] %v370
                %v372 = vld [vmem:[%s204 + $0x298] sm:%s197]
                %373 = vst [vmem:[%s205 + $0x14c] sm:%s197] %v372
                %v374 = vld [vmem:[%s204 + $0x2a0] sm:%s197]
                %375 = vst [vmem:[%s205 + $0x150] sm:%s197] %v374
                %v376 = vld [vmem:[%s204 + $0x2a8] sm:%s197]
                %377 = vst [vmem:[%s205 + $0x154] sm:%s197] %v376
                %v378 = vld [vmem:[%s204 + $0x2b0] sm:%s197]
                %379 = vst [vmem:[%s205 + $0x158] sm:%s197] %v378
                %v380 = vld [vmem:[%s204 + $0x2b8] sm:%s197]
                %381 = vst [vmem:[%s205 + $0x15c] sm:%s197] %v380
                %v382 = vld [vmem:[%s204 + $0x2c0] sm:%s197]
                %383 = vst [vmem:[%s205 + $0x160] sm:%s197] %v382
                %v384 = vld [vmem:[%s204 + $0x2c8] sm:%s197]
                %385 = vst [vmem:[%s205 + $0x164] sm:%s197] %v384
                %v386 = vld [vmem:[%s204 + $0x2d0] sm:%s197]
                %387 = vst [vmem:[%s205 + $0x168] sm:%s197] %v386
                %v388 = vld [vmem:[%s204 + $0x2d8] sm:%s197]
                %389 = vst [vmem:[%s205 + $0x16c] sm:%s197] %v388
                %v390 = vld [vmem:[%s204 + $0x2e0] sm:%s197]
                %391 = vst [vmem:[%s205 + $0x170] sm:%s197] %v390
                %v392 = vld [vmem:[%s204 + $0x2e8] sm:%s197]
                %393 = vst [vmem:[%s205 + $0x174] sm:%s197] %v392
                %v394 = vld [vmem:[%s204 + $0x2f0] sm:%s197]
                %395 = vst [vmem:[%s205 + $0x178] sm:%s197] %v394
                %v396 = vld [vmem:[%s204 + $0x2f8] sm:%s197]
                %397 = vst [vmem:[%s205 + $0x17c] sm:%s197] %v396
                %v398 = vld [vmem:[%s204 + $0x300] sm:%s197]
                %399 = vst [vmem:[%s205 + $0x180] sm:%s197] %v398
                %v400 = vld [vmem:[%s204 + $0x308] sm:%s197]
                %401 = vst [vmem:[%s205 + $0x184] sm:%s197] %v400
                %v402 = vld [vmem:[%s204 + $0x310] sm:%s197]
                %403 = vst [vmem:[%s205 + $0x188] sm:%s197] %v402
                %v404 = vld [vmem:[%s204 + $0x318] sm:%s197]
                %405 = vst [vmem:[%s205 + $0x18c] sm:%s197] %v404
                %v406 = vld [vmem:[%s204 + $0x320] sm:%s197]
                %407 = vst [vmem:[%s205 + $0x190] sm:%s197] %v406
                %v408 = vld [vmem:[%s204 + $0x328] sm:%s197]
                %409 = vst [vmem:[%s205 + $0x194] sm:%s197] %v408
                %v410 = vld [vmem:[%s204 + $0x330] sm:%s197]
                %411 = vst [vmem:[%s205 + $0x198] sm:%s197] %v410
                %v412 = vld [vmem:[%s204 + $0x338] sm:%s197]
                %413 = vst [vmem:[%s205 + $0x19c] sm:%s197] %v412
                %v414 = vld [vmem:[%s204 + $0x340] sm:%s197]
                %415 = vst [vmem:[%s205 + $0x1a0] sm:%s197] %v414
                %v416 = vld [vmem:[%s204 + $0x348] sm:%s197]
                %417 = vst [vmem:[%s205 + $0x1a4] sm:%s197] %v416
                %v418 = vld [vmem:[%s204 + $0x350] sm:%s197]
                %419 = vst [vmem:[%s205 + $0x1a8] sm:%s197] %v418
                %v420 = vld [vmem:[%s204 + $0x358] sm:%s197]
                %421 = vst [vmem:[%s205 + $0x1ac] sm:%s197] %v420
                %v422 = vld [vmem:[%s204 + $0x360] sm:%s197]
                %423 = vst [vmem:[%s205 + $0x1b0] sm:%s197] %v422
                %v424 = vld [vmem:[%s204 + $0x368] sm:%s197]
                %425 = vst [vmem:[%s205 + $0x1b4] sm:%s197] %v424
                %v426 = vld [vmem:[%s204 + $0x370] sm:%s197]
                %427 = vst [vmem:[%s205 + $0x1b8] sm:%s197] %v426
                %v428 = vld [vmem:[%s204 + $0x378] sm:%s197]
                %429 = vst [vmem:[%s205 + $0x1bc] sm:%s197] %v428
                %v430 = vld [vmem:[%s204 + $0x380] sm:%s197]
                %431 = vst [vmem:[%s205 + $0x1c0] sm:%s197] %v430
                %v432 = vld [vmem:[%s204 + $0x388] sm:%s197]
                %433 = vst [vmem:[%s205 + $0x1c4] sm:%s197] %v432
                %v434 = vld [vmem:[%s204 + $0x390] sm:%s197]
                %435 = vst [vmem:[%s205 + $0x1c8] sm:%s197] %v434
                %v436 = vld [vmem:[%s204 + $0x398] sm:%s197]
                %437 = vst [vmem:[%s205 + $0x1cc] sm:%s197] %v436
                %v438 = vld [vmem:[%s204 + $0x3a0] sm:%s197]
                %439 = vst [vmem:[%s205 + $0x1d0] sm:%s197] %v438
                %v440 = vld [vmem:[%s204 + $0x3a8] sm:%s197]
                %441 = vst [vmem:[%s205 + $0x1d4] sm:%s197] %v440
                %v442 = vld [vmem:[%s204 + $0x3b0] sm:%s197]
                %443 = vst [vmem:[%s205 + $0x1d8] sm:%s197] %v442
                %v444 = vld [vmem:[%s204 + $0x3b8] sm:%s197]
                %445 = vst [vmem:[%s205 + $0x1dc] sm:%s197] %v444
                %v446 = vld [vmem:[%s204 + $0x3c0] sm:%s197]
                %447 = vst [vmem:[%s205 + $0x1e0] sm:%s197] %v446
                %v448 = vld [vmem:[%s204 + $0x3c8] sm:%s197]
                %449 = vst [vmem:[%s205 + $0x1e4] sm:%s197] %v448
                %v450 = vld [vmem:[%s204 + $0x3d0] sm:%s197]
                %451 = vst [vmem:[%s205 + $0x1e8] sm:%s197] %v450
                %v452 = vld [vmem:[%s204 + $0x3d8] sm:%s197]
                %453 = vst [vmem:[%s205 + $0x1ec] sm:%s197] %v452
                %v454 = vld [vmem:[%s204 + $0x3e0] sm:%s197]
                %455 = vst [vmem:[%s205 + $0x1f0] sm:%s197] %v454
                %v456 = vld [vmem:[%s204 + $0x3e8] sm:%s197]
                %457 = vst [vmem:[%s205 + $0x1f4] sm:%s197] %v456
                %v458 = vld [vmem:[%s204 + $0x3f0] sm:%s197]
                %459 = vst [vmem:[%s205 + $0x1f8] sm:%s197] %v458
                %v460 = vld [vmem:[%s204 + $0x3f8] sm:%s197]
                %461 = vst [vmem:[%s205 + $0x1fc] sm:%s197] %v460
              $region53: #{zsl_forward.1} parent=47 // loop_footer
                %s203 = sadd.s32 1, %s199
              $region54: #{zsl_forward.1} parent=47 // loop_footer_branch
                %198 = sbr.rel target = $region50
              $region55: #{zsl_forward.1} parent=47 // loop_exit
                _
            $region48: #{zsl_forward.1} parent=39 // pred_fallthru
              _
          $region40: #{zsl_forward.1} parent=35 // pred_fallthru
            _
          %738 = vnop
        $region36: #{zsl_forward.1} parent=31 // pred_fallthru
          _
      $region32: #{zsl_forward.1} parent=5 // pred_fallthru
        _
      %p739 = scmp.le.s32.totalorder 1, %s14
      %p740 = scmp.lt.s32.totalorder %s14, 3
      %p741 = pnand %p739, %p740
      %p742 = pneg %p741
      // Predicated region
      $region74: #{zsl_forward.1} parent=5 // pred_check
        _
      $region75: #{zsl_forward.1} parent=5 // pred_check_branch
        %744 = sbr.rel (%p741) target = $region77
      $region76: #{zsl_forward.1} parent=5 // pred_region
        %s745 = ssub.s32 %s14, 1
        %s746 = sand.u32 %s27, 1
        %s747 = sand.u32 %s27, 1
        %s748 = smul.addr %s747, 512
        %s749 = scalar_lea.vmem [#allocation2], %s748
        // Predicated region
        $region78: #{zsl_forward.1} parent=76 // pred_check
          %p750 = pneg %p40
        $region79: #{zsl_forward.1} parent=76 // pred_check_branch
          %752 = sbr.rel (%p750) target = $region81
        $region80: #{zsl_forward.1} parent=76 // pred_region
          _
        $region81: #{zsl_forward.1} parent=76 // pred_fallthru
          _
        %s753 = sand.u32 %s27, 1
        %s754 = sand.u32 %s27, 1
        %s755 = smul.addr %s754, 512
        %s756 = scalar_lea.vmem [#allocation2], %s755
        %p757 = pneg %p40
        %p758 = pneg %p37
        %p759 = pneg %p61
        %p760 = pneg %p58
        %p761 = pneg %p82
        %p762 = pneg %p79
        %p763 = pneg %p103
        %p764 = pneg %p100
        %p765 = pneg %p124
        %p766 = pneg %p121
        %p767 = pneg %p150
        %p768 = pneg %p147
        %s769 = sand.u32 %s137, 1
        %s770 = scalar_lea.sflag [#allocation4], %s769
        %s771 = sand.u32 %s137, 1
        %s772 = smul.addr %s771, 8
        %s773 = scalar_lea.vmem [#allocation3], %s772
        %v774 = vld [vmem:[%s749] sm:$0xf]
        %v775 = vld [vmem:[%s749 + $0x4] sm:$0xf]
        %v776 = vld [vmem:[%s749 + $0x8] sm:$0xf]
        %v777 = vld [vmem:[%s749 + $0xc] sm:$0xf]
        %v778 = vld [vmem:[%s749 + $0x10] sm:$0xf]
        %v779 = vld [vmem:[%s749 + $0x14] sm:$0xf]
        %v780 = vld [vmem:[%s749 + $0x18] sm:$0xf]
        %v781 = vld [vmem:[%s749 + $0x1c] sm:$0xf]
        %v782 = vld [vmem:[%s749 + $0x20] sm:$0xf]
        %v783 = vld [vmem:[%s749 + $0x24] sm:$0xf]
        %v784 = vld [vmem:[%s749 + $0x28] sm:$0xf]
        %v785 = vld [vmem:[%s749 + $0x2c] sm:$0xf]
        %v786 = vld [vmem:[%s749 + $0x30] sm:$0xf]
        %v787 = vld [vmem:[%s749 + $0x34] sm:$0xf]
        %v788 = vld [vmem:[%s749 + $0x38] sm:$0xf]
        %v789 = vld [vmem:[%s749 + $0x3c] sm:$0xf]
        %v790 = vld [vmem:[%s749 + $0x40] sm:$0xf]
        %v791 = vld [vmem:[%s749 + $0x44] sm:$0xf]
        %v792 = vld [vmem:[%s749 + $0x48] sm:$0xf]
        %v793 = vld [vmem:[%s749 + $0x4c] sm:$0xf]
        %v794 = vld [vmem:[%s749 + $0x50] sm:$0xf]
        %v795 = vld [vmem:[%s749 + $0x54] sm:$0xf]
        %v796 = vld [vmem:[%s749 + $0x58] sm:$0xf]
        %v797 = vld [vmem:[%s749 + $0x5c] sm:$0xf]
        %v798 = vld [vmem:[%s749 + $0x60] sm:$0xf]
        %v799 = vld [vmem:[%s749 + $0x64] sm:$0xf]
        %v800 = vld [vmem:[%s749 + $0x68] sm:$0xf]
        %v801 = vld [vmem:[%s749 + $0x6c] sm:$0xf]
        %v802 = vld [vmem:[%s749 + $0x70] sm:$0xf]
        %v803 = vld [vmem:[%s749 + $0x74] sm:$0xf]
        %v804 = vld [vmem:[%s749 + $0x78] sm:$0xf]
        %v805 = vld [vmem:[%s749 + $0x7c] sm:$0xf]
        %v806 = vld [vmem:[%s749 + $0x80] sm:$0xf]
        %v807 = vld [vmem:[%s749 + $0x84] sm:$0xf]
        %v808 = vld [vmem:[%s749 + $0x88] sm:$0xf]
        %v809 = vld [vmem:[%s749 + $0x8c] sm:$0xf]
        %v810 = vld [vmem:[%s749 + $0x90] sm:$0xf]
        %v811 = vld [vmem:[%s749 + $0x94] sm:$0xf]
        %v812 = vld [vmem:[%s749 + $0x98] sm:$0xf]
        %v813 = vld [vmem:[%s749 + $0x9c] sm:$0xf]
        %v814 = vld [vmem:[%s749 + $0xa0] sm:$0xf]
        %v815 = vld [vmem:[%s749 + $0xa4] sm:$0xf]
        %v816 = vld [vmem:[%s749 + $0xa8] sm:$0xf]
        %v817 = vld [vmem:[%s749 + $0xac] sm:$0xf]
        %v818 = vld [vmem:[%s749 + $0xb0] sm:$0xf]
        %v819 = vld [vmem:[%s749 + $0xb4] sm:$0xf]
        %v820 = vld [vmem:[%s749 + $0xb8] sm:$0xf]
        %v821 = vld [vmem:[%s749 + $0xbc] sm:$0xf]
        %v822 = vld [vmem:[%s749 + $0xc0] sm:$0xf]
        %v823 = vld [vmem:[%s749 + $0xc4] sm:$0xf]
        %v824 = vld [vmem:[%s749 + $0xc8] sm:$0xf]
        %v825 = vld [vmem:[%s749 + $0xcc] sm:$0xf]
        %v826 = vld [vmem:[%s749 + $0xd0] sm:$0xf]
        %v827 = vld [vmem:[%s749 + $0xd4] sm:$0xf]
        %v828 = vld [vmem:[%s749 + $0xd8] sm:$0xf]
        %v829 = vld [vmem:[%s749 + $0xdc] sm:$0xf]
        %v830 = vld [vmem:[%s749 + $0xe0] sm:$0xf]
        %v831 = vld [vmem:[%s749 + $0xe4] sm:$0xf]
        %v832 = vld [vmem:[%s749 + $0xe8] sm:$0xf]
        %v833 = vld [vmem:[%s749 + $0xec] sm:$0xf]
        %v834 = vld [vmem:[%s749 + $0xf0] sm:$0xf]
        %v835 = vld [vmem:[%s749 + $0xf4] sm:$0xf]
        %v836 = vld [vmem:[%s749 + $0xf8] sm:$0xf]
        %v837 = vld [vmem:[%s749 + $0xfc] sm:$0xf]
        %v838 = vld [vmem:[%s749 + $0x100] sm:$0xf]
        %v839 = vld [vmem:[%s749 + $0x104] sm:$0xf]
        %v840 = vld [vmem:[%s749 + $0x108] sm:$0xf]
        %v841 = vld [vmem:[%s749 + $0x10c] sm:$0xf]
        %v842 = vld [vmem:[%s749 + $0x110] sm:$0xf]
        %v843 = vld [vmem:[%s749 + $0x114] sm:$0xf]
        %v844 = vld [vmem:[%s749 + $0x118] sm:$0xf]
        %v845 = vld [vmem:[%s749 + $0x11c] sm:$0xf]
        %v846 = vld [vmem:[%s749 + $0x120] sm:$0xf]
        %v847 = vld [vmem:[%s749 + $0x124] sm:$0xf]
        %v848 = vld [vmem:[%s749 + $0x128] sm:$0xf]
        %v849 = vld [vmem:[%s749 + $0x12c] sm:$0xf]
        %v850 = vld [vmem:[%s749 + $0x130] sm:$0xf]
        %v851 = vld [vmem:[%s749 + $0x134] sm:$0xf]
        %v852 = vld [vmem:[%s749 + $0x138] sm:$0xf]
        %v853 = vld [vmem:[%s749 + $0x13c] sm:$0xf]
        %v854 = vld [vmem:[%s749 + $0x140] sm:$0xf]
        %v855 = vld [vmem:[%s749 + $0x144] sm:$0xf]
        %v856 = vld [vmem:[%s749 + $0x148] sm:$0xf]
        %v857 = vld [vmem:[%s749 + $0x14c] sm:$0xf]
        %v858 = vld [vmem:[%s749 + $0x150] sm:$0xf]
        %v859 = vld [vmem:[%s749 + $0x154] sm:$0xf]
        %v860 = vld [vmem:[%s749 + $0x158] sm:$0xf]
        %v861 = vld [vmem:[%s749 + $0x15c] sm:$0xf]
        %v862 = vld [vmem:[%s749 + $0x160] sm:$0xf]
        %v863 = vld [vmem:[%s749 + $0x164] sm:$0xf]
        %v864 = vld [vmem:[%s749 + $0x168] sm:$0xf]
        %v865 = vld [vmem:[%s749 + $0x16c] sm:$0xf]
        %v866 = vld [vmem:[%s749 + $0x170] sm:$0xf]
        %v867 = vld [vmem:[%s749 + $0x174] sm:$0xf]
        %v868 = vld [vmem:[%s749 + $0x178] sm:$0xf]
        %v869 = vld [vmem:[%s749 + $0x17c] sm:$0xf]
        %v870 = vld [vmem:[%s749 + $0x180] sm:$0xf]
        %v871 = vld [vmem:[%s749 + $0x184] sm:$0xf]
        %v872 = vld [vmem:[%s749 + $0x188] sm:$0xf]
        %v873 = vld [vmem:[%s749 + $0x18c] sm:$0xf]
        %v874 = vld [vmem:[%s749 + $0x190] sm:$0xf]
        %v875 = vld [vmem:[%s749 + $0x194] sm:$0xf]
        %v876 = vld [vmem:[%s749 + $0x198] sm:$0xf]
        %v877 = vld [vmem:[%s749 + $0x19c] sm:$0xf]
        %v878 = vld [vmem:[%s749 + $0x1a0] sm:$0xf]
        %v879 = vld [vmem:[%s749 + $0x1a4] sm:$0xf]
        %v880 = vld [vmem:[%s749 + $0x1a8] sm:$0xf]
        %v881 = vld [vmem:[%s749 + $0x1ac] sm:$0xf]
        %v882 = vld [vmem:[%s749 + $0x1b0] sm:$0xf]
        %v883 = vld [vmem:[%s749 + $0x1b4] sm:$0xf]
        %v884 = vld [vmem:[%s749 + $0x1b8] sm:$0xf]
        %v885 = vld [vmem:[%s749 + $0x1bc] sm:$0xf]
        %v886 = vld [vmem:[%s749 + $0x1c0] sm:$0xf]
        %v887 = vld [vmem:[%s749 + $0x1c4] sm:$0xf]
        %v888 = vld [vmem:[%s749 + $0x1c8] sm:$0xf]
        %v889 = vld [vmem:[%s749 + $0x1cc] sm:$0xf]
        %v890 = vld [vmem:[%s749 + $0x1d0] sm:$0xf]
        %v891 = vld [vmem:[%s749 + $0x1d4] sm:$0xf]
        %v892 = vld [vmem:[%s749 + $0x1d8] sm:$0xf]
        %v893 = vld [vmem:[%s749 + $0x1dc] sm:$0xf]
        %v894 = vld [vmem:[%s749 + $0x1e0] sm:$0xf]
        %v895 = vld [vmem:[%s749 + $0x1e4] sm:$0xf]
        %v896 = vld [vmem:[%s749 + $0x1e8] sm:$0xf]
        %v897 = vld [vmem:[%s749 + $0x1ec] sm:$0xf]
        %v898 = vld [vmem:[%s749 + $0x1f0] sm:$0xf]
        %v899 = vld [vmem:[%s749 + $0x1f4] sm:$0xf]
        %v900 = vld [vmem:[%s749 + $0x1f8] sm:$0xf]
        %v901 = vld [vmem:[%s749 + $0x1fc] sm:$0xf]
        %v902 = vunpack.c.l.bf16 %v774
        %v903 = vunpack.c.l.bf16 %v775
        %v904 = vunpack.c.l.bf16 %v776
        %v905 = vunpack.c.l.bf16 %v777
        %v906 = vunpack.c.l.bf16 %v778
        %v907 = vunpack.c.l.bf16 %v779
        %v908 = vunpack.c.l.bf16 %v780
        %v909 = vunpack.c.l.bf16 %v781
        %v910 = vunpack.c.l.bf16 %v782
        %v911 = vunpack.c.l.bf16 %v783
        %v912 = vunpack.c.l.bf16 %v784
        %v913 = vunpack.c.l.bf16 %v785
        %v914 = vunpack.c.l.bf16 %v786
        %v915 = vunpack.c.l.bf16 %v787
        %v916 = vunpack.c.l.bf16 %v788
        %v917 = vunpack.c.l.bf16 %v789
        %v918 = vunpack.c.l.bf16 %v790
        %v919 = vunpack.c.l.bf16 %v791
        %v920 = vunpack.c.l.bf16 %v792
        %v921 = vunpack.c.l.bf16 %v793
        %v922 = vunpack.c.l.bf16 %v794
        %v923 = vunpack.c.l.bf16 %v795
        %v924 = vunpack.c.l.bf16 %v796
        %v925 = vunpack.c.l.bf16 %v797
        %v926 = vunpack.c.l.bf16 %v798
        %v927 = vunpack.c.l.bf16 %v799
        %v928 = vunpack.c.l.bf16 %v800
        %v929 = vunpack.c.l.bf16 %v801
        %v930 = vunpack.c.l.bf16 %v802
        %v931 = vunpack.c.l.bf16 %v803
        %v932 = vunpack.c.l.bf16 %v804
        %v933 = vunpack.c.l.bf16 %v805
        %v934 = vunpack.c.l.bf16 %v806
        %v935 = vunpack.c.l.bf16 %v807
        %v936 = vunpack.c.l.bf16 %v808
        %v937 = vunpack.c.l.bf16 %v809
        %v938 = vunpack.c.l.bf16 %v810
        %v939 = vunpack.c.l.bf16 %v811
        %v940 = vunpack.c.l.bf16 %v812
        %v941 = vunpack.c.l.bf16 %v813
        %v942 = vunpack.c.l.bf16 %v814
        %v943 = vunpack.c.l.bf16 %v815
        %v944 = vunpack.c.l.bf16 %v816
        %v945 = vunpack.c.l.bf16 %v817
        %v946 = vunpack.c.l.bf16 %v818
        %v947 = vunpack.c.l.bf16 %v819
        %v948 = vunpack.c.l.bf16 %v820
        %v949 = vunpack.c.l.bf16 %v821
        %v950 = vunpack.c.l.bf16 %v822
        %v951 = vunpack.c.l.bf16 %v823
        %v952 = vunpack.c.l.bf16 %v824
        %v953 = vunpack.c.l.bf16 %v825
        %v954 = vunpack.c.l.bf16 %v826
        %v955 = vunpack.c.l.bf16 %v827
        %v956 = vunpack.c.l.bf16 %v828
        %v957 = vunpack.c.l.bf16 %v829
        %v958 = vunpack.c.l.bf16 %v830
        %v959 = vunpack.c.l.bf16 %v831
        %v960 = vunpack.c.l.bf16 %v832
        %v961 = vunpack.c.l.bf16 %v833
        %v962 = vunpack.c.l.bf16 %v834
        %v963 = vunpack.c.l.bf16 %v835
        %v964 = vunpack.c.l.bf16 %v836
        %v965 = vunpack.c.l.bf16 %v837
        %v966 = vunpack.c.l.bf16 %v838
        %v967 = vunpack.c.l.bf16 %v839
        %v968 = vunpack.c.l.bf16 %v840
        %v969 = vunpack.c.l.bf16 %v841
        %v970 = vunpack.c.l.bf16 %v842
        %v971 = vunpack.c.l.bf16 %v843
        %v972 = vunpack.c.l.bf16 %v844
        %v973 = vunpack.c.l.bf16 %v845
        %v974 = vunpack.c.l.bf16 %v846
        %v975 = vunpack.c.l.bf16 %v847
        %v976 = vunpack.c.l.bf16 %v848
        %v977 = vunpack.c.l.bf16 %v849
        %v978 = vunpack.c.l.bf16 %v850
        %v979 = vunpack.c.l.bf16 %v851
        %v980 = vunpack.c.l.bf16 %v852
        %v981 = vunpack.c.l.bf16 %v853
        %v982 = vunpack.c.l.bf16 %v854
        %v983 = vunpack.c.l.bf16 %v855
        %v984 = vunpack.c.l.bf16 %v856
        %v985 = vunpack.c.l.bf16 %v857
        %v986 = vunpack.c.l.bf16 %v858
        %v987 = vunpack.c.l.bf16 %v859
        %v988 = vunpack.c.l.bf16 %v860
        %v989 = vunpack.c.l.bf16 %v861
        %v990 = vunpack.c.l.bf16 %v862
        %v991 = vunpack.c.l.bf16 %v863
        %v992 = vunpack.c.l.bf16 %v864
        %v993 = vunpack.c.l.bf16 %v865
        %v994 = vunpack.c.l.bf16 %v866
        %v995 = vunpack.c.l.bf16 %v867
        %v996 = vunpack.c.l.bf16 %v868
        %v997 = vunpack.c.l.bf16 %v869
        %v998 = vunpack.c.l.bf16 %v870
        %v999 = vunpack.c.l.bf16 %v871
        %v1000 = vunpack.c.l.bf16 %v872
        %v1001 = vunpack.c.l.bf16 %v873
        %v1002 = vunpack.c.l.bf16 %v874
        %v1003 = vunpack.c.l.bf16 %v875
        %v1004 = vunpack.c.l.bf16 %v876
        %v1005 = vunpack.c.l.bf16 %v877
        %v1006 = vunpack.c.l.bf16 %v878
        %v1007 = vunpack.c.l.bf16 %v879
        %v1008 = vunpack.c.l.bf16 %v880
        %v1009 = vunpack.c.l.bf16 %v881
        %v1010 = vunpack.c.l.bf16 %v882
        %v1011 = vunpack.c.l.bf16 %v883
        %v1012 = vunpack.c.l.bf16 %v884
        %v1013 = vunpack.c.l.bf16 %v885
        %v1014 = vunpack.c.l.bf16 %v886
        %v1015 = vunpack.c.l.bf16 %v887
        %v1016 = vunpack.c.l.bf16 %v888
        %v1017 = vunpack.c.l.bf16 %v889
        %v1018 = vunpack.c.l.bf16 %v890
        %v1019 = vunpack.c.l.bf16 %v891
        %v1020 = vunpack.c.l.bf16 %v892
        %v1021 = vunpack.c.l.bf16 %v893
        %v1022 = vunpack.c.l.bf16 %v894
        %v1023 = vunpack.c.l.bf16 %v895
        %v1024 = vunpack.c.l.bf16 %v896
        %v1025 = vunpack.c.l.bf16 %v897
        %v1026 = vunpack.c.l.bf16 %v898
        %v1027 = vunpack.c.l.bf16 %v899
        %v1028 = vunpack.c.l.bf16 %v900
        %v1029 = vunpack.c.l.bf16 %v901
        %v1030 = vld [vmem:[%s1] sm:$0x3]
        %v1047 = vunpack.c.l.b16 %v774
        %v1048 = vunpack.c.l.b16 %v775
        %v1049 = vunpack.c.l.b16 %v776
        %v1050 = vunpack.c.l.b16 %v777
        %v1051 = vunpack.c.l.b16 %v778
        %v1052 = vunpack.c.l.b16 %v779
        %v1053 = vunpack.c.l.b16 %v780
        %v1054 = vunpack.c.l.b16 %v781
        %v1055 = vunpack.c.l.b16 %v782
        %v1056 = vunpack.c.l.b16 %v783
        %v1057 = vunpack.c.l.b16 %v784
        %v1058 = vunpack.c.l.b16 %v785
        %v1059 = vunpack.c.l.b16 %v786
        %v1060 = vunpack.c.l.b16 %v787
        %v1061 = vunpack.c.l.b16 %v788
        %v1062 = vunpack.c.l.b16 %v789
        %v1063 = vpack.c.b16 %v1048, %v1047
        %v1064 = vpack.c.b16 %v1050, %v1049
        %v1065 = vpack.c.b16 %v1052, %v1051
        %v1066 = vpack.c.b16 %v1054, %v1053
        %v1067 = vpack.c.b16 %v1056, %v1055
        %v1068 = vpack.c.b16 %v1058, %v1057
        %v1069 = vpack.c.b16 %v1060, %v1059
        %v1070 = vpack.c.b16 %v1062, %v1061
        %1079 = vmatpush.bf16.msra.mxu0 %v1070
        %1080 = vmatpush.bf16.msra.mxu0 %v1069
        %1081 = vmatpush.bf16.msra.mxu0 %v1068
        %1082 = vmatpush.bf16.msra.mxu0 %v1067
        %1083 = vmatpush.bf16.msra.mxu0 %v1066
        %1084 = vmatpush.bf16.msra.mxu0 %v1065
        %1085 = vmatpush.bf16.msra.mxu0 %v1064
        %1086 = vmatpush.bf16.msra.mxu0 %v1063
        %1087 = vmatmul.bf16.gmra.mxu0 %v1030
        %v1088 = vpop.f32.mrf.mxu0
        %v1089 = vadd.f32 0.0, %v1088
        %v1090 = vpop.f32.mrf.mxu0
        %1091 = vdwg.mxu0
        %v1108 = vunpack.c.l.b16 %v790
        %v1109 = vunpack.c.l.b16 %v791
        %v1110 = vunpack.c.l.b16 %v792
        %v1111 = vunpack.c.l.b16 %v793
        %v1112 = vunpack.c.l.b16 %v794
        %v1113 = vunpack.c.l.b16 %v795
        %v1114 = vunpack.c.l.b16 %v796
        %v1115 = vunpack.c.l.b16 %v797
        %v1116 = vunpack.c.l.b16 %v798
        %v1117 = vunpack.c.l.b16 %v799
        %v1118 = vunpack.c.l.b16 %v800
        %v1119 = vunpack.c.l.b16 %v801
        %v1120 = vunpack.c.l.b16 %v802
        %v1121 = vunpack.c.l.b16 %v803
        %v1122 = vunpack.c.l.b16 %v804
        %v1123 = vunpack.c.l.b16 %v805
        %v1124 = vpack.c.b16 %v1109, %v1108
        %v1125 = vpack.c.b16 %v1111, %v1110
        %v1126 = vpack.c.b16 %v1113, %v1112
        %v1127 = vpack.c.b16 %v1115, %v1114
        %v1128 = vpack.c.b16 %v1117, %v1116
        %v1129 = vpack.c.b16 %v1119, %v1118
        %v1130 = vpack.c.b16 %v1121, %v1120
        %v1131 = vpack.c.b16 %v1123, %v1122
        %1140 = vmatpush.bf16.msra.mxu0 %v1131
        %1141 = vmatpush.bf16.msra.mxu0 %v1130
        %1142 = vmatpush.bf16.msra.mxu0 %v1129
        %1143 = vmatpush.bf16.msra.mxu0 %v1128
        %1144 = vmatpush.bf16.msra.mxu0 %v1127
        %1145 = vmatpush.bf16.msra.mxu0 %v1126
        %1146 = vmatpush.bf16.msra.mxu0 %v1125
        %1147 = vmatpush.bf16.msra.mxu0 %v1124
        %1148 = vmatmul.bf16.gmra.mxu0 %v1030
        %v1149 = vpop.f32.mrf.mxu0
        %v1150 = vadd.f32 0.0, %v1149
        %v1151 = vpop.f32.mrf.mxu0
        %1152 = vdwg.mxu0
        %v1169 = vunpack.c.l.b16 %v806
        %v1170 = vunpack.c.l.b16 %v807
        %v1171 = vunpack.c.l.b16 %v808
        %v1172 = vunpack.c.l.b16 %v809
        %v1173 = vunpack.c.l.b16 %v810
        %v1174 = vunpack.c.l.b16 %v811
        %v1175 = vunpack.c.l.b16 %v812
        %v1176 = vunpack.c.l.b16 %v813
        %v1177 = vunpack.c.l.b16 %v814
        %v1178 = vunpack.c.l.b16 %v815
        %v1179 = vunpack.c.l.b16 %v816
        %v1180 = vunpack.c.l.b16 %v817
        %v1181 = vunpack.c.l.b16 %v818
        %v1182 = vunpack.c.l.b16 %v819
        %v1183 = vunpack.c.l.b16 %v820
        %v1184 = vunpack.c.l.b16 %v821
        %v1185 = vpack.c.b16 %v1170, %v1169
        %v1186 = vpack.c.b16 %v1172, %v1171
        %v1187 = vpack.c.b16 %v1174, %v1173
        %v1188 = vpack.c.b16 %v1176, %v1175
        %v1189 = vpack.c.b16 %v1178, %v1177
        %v1190 = vpack.c.b16 %v1180, %v1179
        %v1191 = vpack.c.b16 %v1182, %v1181
        %v1192 = vpack.c.b16 %v1184, %v1183
        %1201 = vmatpush.bf16.msra.mxu0 %v1192
        %1202 = vmatpush.bf16.msra.mxu0 %v1191
        %1203 = vmatpush.bf16.msra.mxu0 %v1190
        %1204 = vmatpush.bf16.msra.mxu0 %v1189
        %1205 = vmatpush.bf16.msra.mxu0 %v1188
        %1206 = vmatpush.bf16.msra.mxu0 %v1187
        %1207 = vmatpush.bf16.msra.mxu0 %v1186
        %1208 = vmatpush.bf16.msra.mxu0 %v1185
        %1209 = vmatmul.bf16.gmra.mxu0 %v1030
        %v1210 = vpop.f32.mrf.mxu0
        %v1211 = vadd.f32 0.0, %v1210
        %v1212 = vpop.f32.mrf.mxu0
        %1213 = vdwg.mxu0
        %v1230 = vunpack.c.l.b16 %v822
        %v1231 = vunpack.c.l.b16 %v823
        %v1232 = vunpack.c.l.b16 %v824
        %v1233 = vunpack.c.l.b16 %v825
        %v1234 = vunpack.c.l.b16 %v826
        %v1235 = vunpack.c.l.b16 %v827
        %v1236 = vunpack.c.l.b16 %v828
        %v1237 = vunpack.c.l.b16 %v829
        %v1238 = vunpack.c.l.b16 %v830
        %v1239 = vunpack.c.l.b16 %v831
        %v1240 = vunpack.c.l.b16 %v832
        %v1241 = vunpack.c.l.b16 %v833
        %v1242 = vunpack.c.l.b16 %v834
        %v1243 = vunpack.c.l.b16 %v835
        %v1244 = vunpack.c.l.b16 %v836
        %v1245 = vunpack.c.l.b16 %v837
        %v1246 = vpack.c.b16 %v1231, %v1230
        %v1247 = vpack.c.b16 %v1233, %v1232
        %v1248 = vpack.c.b16 %v1235, %v1234
        %v1249 = vpack.c.b16 %v1237, %v1236
        %v1250 = vpack.c.b16 %v1239, %v1238
        %v1251 = vpack.c.b16 %v1241, %v1240
        %v1252 = vpack.c.b16 %v1243, %v1242
        %v1253 = vpack.c.b16 %v1245, %v1244
        %1262 = vmatpush.bf16.msra.mxu0 %v1253
        %1263 = vmatpush.bf16.msra.mxu0 %v1252
        %1264 = vmatpush.bf16.msra.mxu0 %v1251
        %1265 = vmatpush.bf16.msra.mxu0 %v1250
        %1266 = vmatpush.bf16.msra.mxu0 %v1249
        %1267 = vmatpush.bf16.msra.mxu0 %v1248
        %1268 = vmatpush.bf16.msra.mxu0 %v1247
        %1269 = vmatpush.bf16.msra.mxu0 %v1246
        %1270 = vmatmul.bf16.gmra.mxu0 %v1030
        %v1271 = vpop.f32.mrf.mxu0
        %v1272 = vadd.f32 0.0, %v1271
        %v1273 = vpop.f32.mrf.mxu0
        %1274 = vdwg.mxu0
        %v1291 = vunpack.c.l.b16 %v838
        %v1292 = vunpack.c.l.b16 %v839
        %v1293 = vunpack.c.l.b16 %v840
        %v1294 = vunpack.c.l.b16 %v841
        %v1295 = vunpack.c.l.b16 %v842
        %v1296 = vunpack.c.l.b16 %v843
        %v1297 = vunpack.c.l.b16 %v844
        %v1298 = vunpack.c.l.b16 %v845
        %v1299 = vunpack.c.l.b16 %v846
        %v1300 = vunpack.c.l.b16 %v847
        %v1301 = vunpack.c.l.b16 %v848
        %v1302 = vunpack.c.l.b16 %v849
        %v1303 = vunpack.c.l.b16 %v850
        %v1304 = vunpack.c.l.b16 %v851
        %v1305 = vunpack.c.l.b16 %v852
        %v1306 = vunpack.c.l.b16 %v853
        %v1307 = vpack.c.b16 %v1292, %v1291
        %v1308 = vpack.c.b16 %v1294, %v1293
        %v1309 = vpack.c.b16 %v1296, %v1295
        %v1310 = vpack.c.b16 %v1298, %v1297
        %v1311 = vpack.c.b16 %v1300, %v1299
        %v1312 = vpack.c.b16 %v1302, %v1301
        %v1313 = vpack.c.b16 %v1304, %v1303
        %v1314 = vpack.c.b16 %v1306, %v1305
        %1323 = vmatpush.bf16.msra.mxu0 %v1314
        %1324 = vmatpush.bf16.msra.mxu0 %v1313
        %1325 = vmatpush.bf16.msra.mxu0 %v1312
        %1326 = vmatpush.bf16.msra.mxu0 %v1311
        %1327 = vmatpush.bf16.msra.mxu0 %v1310
        %1328 = vmatpush.bf16.msra.mxu0 %v1309
        %1329 = vmatpush.bf16.msra.mxu0 %v1308
        %1330 = vmatpush.bf16.msra.mxu0 %v1307
        %1331 = vmatmul.bf16.gmra.mxu0 %v1030
        %v1332 = vpop.f32.mrf.mxu0
        %v1333 = vadd.f32 0.0, %v1332
        %v1334 = vpop.f32.mrf.mxu0
        %1335 = vdwg.mxu0
        %v1352 = vunpack.c.l.b16 %v854
        %v1353 = vunpack.c.l.b16 %v855
        %v1354 = vunpack.c.l.b16 %v856
        %v1355 = vunpack.c.l.b16 %v857
        %v1356 = vunpack.c.l.b16 %v858
        %v1357 = vunpack.c.l.b16 %v859
        %v1358 = vunpack.c.l.b16 %v860
        %v1359 = vunpack.c.l.b16 %v861
        %v1360 = vunpack.c.l.b16 %v862
        %v1361 = vunpack.c.l.b16 %v863
        %v1362 = vunpack.c.l.b16 %v864
        %v1363 = vunpack.c.l.b16 %v865
        %v1364 = vunpack.c.l.b16 %v866
        %v1365 = vunpack.c.l.b16 %v867
        %v1366 = vunpack.c.l.b16 %v868
        %v1367 = vunpack.c.l.b16 %v869
        %v1368 = vpack.c.b16 %v1353, %v1352
        %v1369 = vpack.c.b16 %v1355, %v1354
        %v1370 = vpack.c.b16 %v1357, %v1356
        %v1371 = vpack.c.b16 %v1359, %v1358
        %v1372 = vpack.c.b16 %v1361, %v1360
        %v1373 = vpack.c.b16 %v1363, %v1362
        %v1374 = vpack.c.b16 %v1365, %v1364
        %v1375 = vpack.c.b16 %v1367, %v1366
        %1384 = vmatpush.bf16.msra.mxu0 %v1375
        %1385 = vmatpush.bf16.msra.mxu0 %v1374
        %1386 = vmatpush.bf16.msra.mxu0 %v1373
        %1387 = vmatpush.bf16.msra.mxu0 %v1372
        %1388 = vmatpush.bf16.msra.mxu0 %v1371
        %1389 = vmatpush.bf16.msra.mxu0 %v1370
        %1390 = vmatpush.bf16.msra.mxu0 %v1369
        %1391 = vmatpush.bf16.msra.mxu0 %v1368
        %1392 = vmatmul.bf16.gmra.mxu0 %v1030
        %v1393 = vpop.f32.mrf.mxu0
        %v1394 = vadd.f32 0.0, %v1393
        %v1395 = vpop.f32.mrf.mxu0
        %1396 = vdwg.mxu0
        %v1413 = vunpack.c.l.b16 %v870
        %v1414 = vunpack.c.l.b16 %v871
        %v1415 = vunpack.c.l.b16 %v872
        %v1416 = vunpack.c.l.b16 %v873
        %v1417 = vunpack.c.l.b16 %v874
        %v1418 = vunpack.c.l.b16 %v875
        %v1419 = vunpack.c.l.b16 %v876
        %v1420 = vunpack.c.l.b16 %v877
        %v1421 = vunpack.c.l.b16 %v878
        %v1422 = vunpack.c.l.b16 %v879
        %v1423 = vunpack.c.l.b16 %v880
        %v1424 = vunpack.c.l.b16 %v881
        %v1425 = vunpack.c.l.b16 %v882
        %v1426 = vunpack.c.l.b16 %v883
        %v1427 = vunpack.c.l.b16 %v884
        %v1428 = vunpack.c.l.b16 %v885
        %v1429 = vpack.c.b16 %v1414, %v1413
        %v1430 = vpack.c.b16 %v1416, %v1415
        %v1431 = vpack.c.b16 %v1418, %v1417
        %v1432 = vpack.c.b16 %v1420, %v1419
        %v1433 = vpack.c.b16 %v1422, %v1421
        %v1434 = vpack.c.b16 %v1424, %v1423
        %v1435 = vpack.c.b16 %v1426, %v1425
        %v1436 = vpack.c.b16 %v1428, %v1427
        %1445 = vmatpush.bf16.msra.mxu0 %v1436
        %1446 = vmatpush.bf16.msra.mxu0 %v1435
        %1447 = vmatpush.bf16.msra.mxu0 %v1434
        %1448 = vmatpush.bf16.msra.mxu0 %v1433
        %1449 = vmatpush.bf16.msra.mxu0 %v1432
        %1450 = vmatpush.bf16.msra.mxu0 %v1431
        %1451 = vmatpush.bf16.msra.mxu0 %v1430
        %1452 = vmatpush.bf16.msra.mxu0 %v1429
        %1453 = vmatmul.bf16.gmra.mxu0 %v1030
        %v1454 = vpop.f32.mrf.mxu0
        %v1455 = vadd.f32 0.0, %v1454
        %v1456 = vpop.f32.mrf.mxu0
        %1457 = vdwg.mxu0
        %v1474 = vunpack.c.l.b16 %v886
        %v1475 = vunpack.c.l.b16 %v887
        %v1476 = vunpack.c.l.b16 %v888
        %v1477 = vunpack.c.l.b16 %v889
        %v1478 = vunpack.c.l.b16 %v890
        %v1479 = vunpack.c.l.b16 %v891
        %v1480 = vunpack.c.l.b16 %v892
        %v1481 = vunpack.c.l.b16 %v893
        %v1482 = vunpack.c.l.b16 %v894
        %v1483 = vunpack.c.l.b16 %v895
        %v1484 = vunpack.c.l.b16 %v896
        %v1485 = vunpack.c.l.b16 %v897
        %v1486 = vunpack.c.l.b16 %v898
        %v1487 = vunpack.c.l.b16 %v899
        %v1488 = vunpack.c.l.b16 %v900
        %v1489 = vunpack.c.l.b16 %v901
        %v1490 = vpack.c.b16 %v1475, %v1474
        %v1491 = vpack.c.b16 %v1477, %v1476
        %v1492 = vpack.c.b16 %v1479, %v1478
        %v1493 = vpack.c.b16 %v1481, %v1480
        %v1494 = vpack.c.b16 %v1483, %v1482
        %v1495 = vpack.c.b16 %v1485, %v1484
        %v1496 = vpack.c.b16 %v1487, %v1486
        %v1497 = vpack.c.b16 %v1489, %v1488
        %1506 = vmatpush.bf16.msra.mxu0 %v1497
        %1507 = vmatpush.bf16.msra.mxu0 %v1496
        %1508 = vmatpush.bf16.msra.mxu0 %v1495
        %1509 = vmatpush.bf16.msra.mxu0 %v1494
        %1510 = vmatpush.bf16.msra.mxu0 %v1493
        %1511 = vmatpush.bf16.msra.mxu0 %v1492
        %1512 = vmatpush.bf16.msra.mxu0 %v1491
        %1513 = vmatpush.bf16.msra.mxu0 %v1490
        %1514 = vmatmul.bf16.gmra.mxu0 %v1030
        %v1515 = vpop.f32.mrf.mxu0
        %v1516 = vadd.f32 0.0, %v1515
        %v1517 = vpop.f32.mrf.mxu0
        %1518 = vdwg.mxu0
        %v1519 = vmax.f32 %v1089, %v1150
        %v1520 = vmax.f32 %v1519, %v1211
        %v1521 = vmax.f32 %v1520, %v1272
        %v1522 = vmax.f32 %v1521, %v1333
        %v1523 = vmax.f32 %v1522, %v1394
        %v1524 = vmax.f32 %v1523, %v1455
        %v1525 = vmax.f32 %v1524, %v1516
        %v1526 = vsub.f32 %v1089, %v1525
        %v1527 = vmul.f32 %v1526, 1.442695
        %v1528 = vpow.pop %v1527
        %v1529 = vsub.f32 %v1150, %v1525
        %v1530 = vmul.f32 %v1529, 1.442695
        %v1531 = vpow.pop %v1530
        %v1532 = vsub.f32 %v1211, %v1525
        %v1533 = vmul.f32 %v1532, 1.442695
        %v1534 = vpow.pop %v1533
        %v1535 = vsub.f32 %v1272, %v1525
        %v1536 = vmul.f32 %v1535, 1.442695
        %v1537 = vpow.pop %v1536
        %v1538 = vsub.f32 %v1333, %v1525
        %v1539 = vmul.f32 %v1538, 1.442695
        %v1540 = vpow.pop %v1539
        %v1541 = vsub.f32 %v1394, %v1525
        %v1542 = vmul.f32 %v1541, 1.442695
        %v1543 = vpow.pop %v1542
        %v1544 = vsub.f32 %v1455, %v1525
        %v1545 = vmul.f32 %v1544, 1.442695
        %v1546 = vpow.pop %v1545
        %v1547 = vsub.f32 %v1516, %v1525
        %v1548 = vmul.f32 %v1547, 1.442695
        %v1549 = vpow.pop %v1548
        %v1550 = vadd.f32 %v1528, %v1531
        %v1551 = vadd.f32 %v1550, %v1534
        %v1552 = vadd.f32 %v1551, %v1537
        %v1553 = vadd.f32 %v1552, %v1540
        %v1554 = vadd.f32 %v1553, %v1543
        %v1555 = vadd.f32 %v1554, %v1546
        %v1556 = vadd.f32 %v1555, %v1549
        %v1557 = vrcp.pop %v1556
        %v1558 = vperm.slane %v1528, 0
        %v1559 = vmul.f32 %v902, %v1558
        %v1560 = vmul.f32 %v903, %v1558
        %v1561 = vmul.f32 %v904, %v1558
        %v1562 = vmul.f32 %v905, %v1558
        %v1563 = vmul.f32 %v906, %v1558
        %v1564 = vmul.f32 %v907, %v1558
        %v1565 = vmul.f32 %v908, %v1558
        %v1566 = vmul.f32 %v909, %v1558
        %v1567 = vmul.f32 %v910, %v1558
        %v1568 = vmul.f32 %v911, %v1558
        %v1569 = vmul.f32 %v912, %v1558
        %v1570 = vmul.f32 %v913, %v1558
        %v1571 = vmul.f32 %v914, %v1558
        %v1572 = vmul.f32 %v915, %v1558
        %v1573 = vmul.f32 %v916, %v1558
        %v1574 = vmul.f32 %v917, %v1558
        %v1575 = vperm.slane %v1531, 0
        %v1576 = vmul.f32 %v918, %v1575
        %v1577 = vmul.f32 %v919, %v1575
        %v1578 = vmul.f32 %v920, %v1575
        %v1579 = vmul.f32 %v921, %v1575
        %v1580 = vmul.f32 %v922, %v1575
        %v1581 = vmul.f32 %v923, %v1575
        %v1582 = vmul.f32 %v924, %v1575
        %v1583 = vmul.f32 %v925, %v1575
        %v1584 = vmul.f32 %v926, %v1575
        %v1585 = vmul.f32 %v927, %v1575
        %v1586 = vmul.f32 %v928, %v1575
        %v1587 = vmul.f32 %v929, %v1575
        %v1588 = vmul.f32 %v930, %v1575
        %v1589 = vmul.f32 %v931, %v1575
        %v1590 = vmul.f32 %v932, %v1575
        %v1591 = vmul.f32 %v933, %v1575
        %v1592 = vadd.f32 %v1559, %v1576
        %v1593 = vadd.f32 %v1560, %v1577
        %v1594 = vadd.f32 %v1561, %v1578
        %v1595 = vadd.f32 %v1562, %v1579
        %v1596 = vadd.f32 %v1563, %v1580
        %v1597 = vadd.f32 %v1564, %v1581
        %v1598 = vadd.f32 %v1565, %v1582
        %v1599 = vadd.f32 %v1566, %v1583
        %v1600 = vadd.f32 %v1567, %v1584
        %v1601 = vadd.f32 %v1568, %v1585
        %v1602 = vadd.f32 %v1569, %v1586
        %v1603 = vadd.f32 %v1570, %v1587
        %v1604 = vadd.f32 %v1571, %v1588
        %v1605 = vadd.f32 %v1572, %v1589
        %v1606 = vadd.f32 %v1573, %v1590
        %v1607 = vadd.f32 %v1574, %v1591
        %v1608 = vperm.slane %v1534, 0
        %v1609 = vmul.f32 %v934, %v1608
        %v1610 = vmul.f32 %v935, %v1608
        %v1611 = vmul.f32 %v936, %v1608
        %v1612 = vmul.f32 %v937, %v1608
        %v1613 = vmul.f32 %v938, %v1608
        %v1614 = vmul.f32 %v939, %v1608
        %v1615 = vmul.f32 %v940, %v1608
        %v1616 = vmul.f32 %v941, %v1608
        %v1617 = vmul.f32 %v942, %v1608
        %v1618 = vmul.f32 %v943, %v1608
        %v1619 = vmul.f32 %v944, %v1608
        %v1620 = vmul.f32 %v945, %v1608
        %v1621 = vmul.f32 %v946, %v1608
        %v1622 = vmul.f32 %v947, %v1608
        %v1623 = vmul.f32 %v948, %v1608
        %v1624 = vmul.f32 %v949, %v1608
        %v1625 = vadd.f32 %v1592, %v1609
        %v1626 = vadd.f32 %v1593, %v1610
        %v1627 = vadd.f32 %v1594, %v1611
        %v1628 = vadd.f32 %v1595, %v1612
        %v1629 = vadd.f32 %v1596, %v1613
        %v1630 = vadd.f32 %v1597, %v1614
        %v1631 = vadd.f32 %v1598, %v1615
        %v1632 = vadd.f32 %v1599, %v1616
        %v1633 = vadd.f32 %v1600, %v1617
        %v1634 = vadd.f32 %v1601, %v1618
        %v1635 = vadd.f32 %v1602, %v1619
        %v1636 = vadd.f32 %v1603, %v1620
        %v1637 = vadd.f32 %v1604, %v1621
        %v1638 = vadd.f32 %v1605, %v1622
        %v1639 = vadd.f32 %v1606, %v1623
        %v1640 = vadd.f32 %v1607, %v1624
        %v1641 = vperm.slane %v1537, 0
        %v1642 = vmul.f32 %v950, %v1641
        %v1643 = vmul.f32 %v951, %v1641
        %v1644 = vmul.f32 %v952, %v1641
        %v1645 = vmul.f32 %v953, %v1641
        %v1646 = vmul.f32 %v954, %v1641
        %v1647 = vmul.f32 %v955, %v1641
        %v1648 = vmul.f32 %v956, %v1641
        %v1649 = vmul.f32 %v957, %v1641
        %v1650 = vmul.f32 %v958, %v1641
        %v1651 = vmul.f32 %v959, %v1641
        %v1652 = vmul.f32 %v960, %v1641
        %v1653 = vmul.f32 %v961, %v1641
        %v1654 = vmul.f32 %v962, %v1641
        %v1655 = vmul.f32 %v963, %v1641
        %v1656 = vmul.f32 %v964, %v1641
        %v1657 = vmul.f32 %v965, %v1641
        %v1658 = vadd.f32 %v1625, %v1642
        %v1659 = vadd.f32 %v1626, %v1643
        %v1660 = vadd.f32 %v1627, %v1644
        %v1661 = vadd.f32 %v1628, %v1645
        %v1662 = vadd.f32 %v1629, %v1646
        %v1663 = vadd.f32 %v1630, %v1647
        %v1664 = vadd.f32 %v1631, %v1648
        %v1665 = vadd.f32 %v1632, %v1649
        %v1666 = vadd.f32 %v1633, %v1650
        %v1667 = vadd.f32 %v1634, %v1651
        %v1668 = vadd.f32 %v1635, %v1652
        %v1669 = vadd.f32 %v1636, %v1653
        %v1670 = vadd.f32 %v1637, %v1654
        %v1671 = vadd.f32 %v1638, %v1655
        %v1672 = vadd.f32 %v1639, %v1656
        %v1673 = vadd.f32 %v1640, %v1657
        %v1674 = vperm.slane %v1540, 0
        %v1675 = vmul.f32 %v966, %v1674
        %v1676 = vmul.f32 %v967, %v1674
        %v1677 = vmul.f32 %v968, %v1674
        %v1678 = vmul.f32 %v969, %v1674
        %v1679 = vmul.f32 %v970, %v1674
        %v1680 = vmul.f32 %v971, %v1674
        %v1681 = vmul.f32 %v972, %v1674
        %v1682 = vmul.f32 %v973, %v1674
        %v1683 = vmul.f32 %v974, %v1674
        %v1684 = vmul.f32 %v975, %v1674
        %v1685 = vmul.f32 %v976, %v1674
        %v1686 = vmul.f32 %v977, %v1674
        %v1687 = vmul.f32 %v978, %v1674
        %v1688 = vmul.f32 %v979, %v1674
        %v1689 = vmul.f32 %v980, %v1674
        %v1690 = vmul.f32 %v981, %v1674
        %v1691 = vadd.f32 %v1658, %v1675
        %v1692 = vadd.f32 %v1659, %v1676
        %v1693 = vadd.f32 %v1660, %v1677
        %v1694 = vadd.f32 %v1661, %v1678
        %v1695 = vadd.f32 %v1662, %v1679
        %v1696 = vadd.f32 %v1663, %v1680
        %v1697 = vadd.f32 %v1664, %v1681
        %v1698 = vadd.f32 %v1665, %v1682
        %v1699 = vadd.f32 %v1666, %v1683
        %v1700 = vadd.f32 %v1667, %v1684
        %v1701 = vadd.f32 %v1668, %v1685
        %v1702 = vadd.f32 %v1669, %v1686
        %v1703 = vadd.f32 %v1670, %v1687
        %v1704 = vadd.f32 %v1671, %v1688
        %v1705 = vadd.f32 %v1672, %v1689
        %v1706 = vadd.f32 %v1673, %v1690
        %v1707 = vperm.slane %v1543, 0
        %v1708 = vmul.f32 %v982, %v1707
        %v1709 = vmul.f32 %v983, %v1707
        %v1710 = vmul.f32 %v984, %v1707
        %v1711 = vmul.f32 %v985, %v1707
        %v1712 = vmul.f32 %v986, %v1707
        %v1713 = vmul.f32 %v987, %v1707
        %v1714 = vmul.f32 %v988, %v1707
        %v1715 = vmul.f32 %v989, %v1707
        %v1716 = vmul.f32 %v990, %v1707
        %v1717 = vmul.f32 %v991, %v1707
        %v1718 = vmul.f32 %v992, %v1707
        %v1719 = vmul.f32 %v993, %v1707
        %v1720 = vmul.f32 %v994, %v1707
        %v1721 = vmul.f32 %v995, %v1707
        %v1722 = vmul.f32 %v996, %v1707
        %v1723 = vmul.f32 %v997, %v1707
        %v1724 = vadd.f32 %v1691, %v1708
        %v1725 = vadd.f32 %v1692, %v1709
        %v1726 = vadd.f32 %v1693, %v1710
        %v1727 = vadd.f32 %v1694, %v1711
        %v1728 = vadd.f32 %v1695, %v1712
        %v1729 = vadd.f32 %v1696, %v1713
        %v1730 = vadd.f32 %v1697, %v1714
        %v1731 = vadd.f32 %v1698, %v1715
        %v1732 = vadd.f32 %v1699, %v1716
        %v1733 = vadd.f32 %v1700, %v1717
        %v1734 = vadd.f32 %v1701, %v1718
        %v1735 = vadd.f32 %v1702, %v1719
        %v1736 = vadd.f32 %v1703, %v1720
        %v1737 = vadd.f32 %v1704, %v1721
        %v1738 = vadd.f32 %v1705, %v1722
        %v1739 = vadd.f32 %v1706, %v1723
        %v1740 = vperm.slane %v1546, 0
        %v1741 = vmul.f32 %v998, %v1740
        %v1742 = vmul.f32 %v999, %v1740
        %v1743 = vmul.f32 %v1000, %v1740
        %v1744 = vmul.f32 %v1001, %v1740
        %v1745 = vmul.f32 %v1002, %v1740
        %v1746 = vmul.f32 %v1003, %v1740
        %v1747 = vmul.f32 %v1004, %v1740
        %v1748 = vmul.f32 %v1005, %v1740
        %v1749 = vmul.f32 %v1006, %v1740
        %v1750 = vmul.f32 %v1007, %v1740
        %v1751 = vmul.f32 %v1008, %v1740
        %v1752 = vmul.f32 %v1009, %v1740
        %v1753 = vmul.f32 %v1010, %v1740
        %v1754 = vmul.f32 %v1011, %v1740
        %v1755 = vmul.f32 %v1012, %v1740
        %v1756 = vmul.f32 %v1013, %v1740
        %v1757 = vadd.f32 %v1724, %v1741
        %v1758 = vadd.f32 %v1725, %v1742
        %v1759 = vadd.f32 %v1726, %v1743
        %v1760 = vadd.f32 %v1727, %v1744
        %v1761 = vadd.f32 %v1728, %v1745
        %v1762 = vadd.f32 %v1729, %v1746
        %v1763 = vadd.f32 %v1730, %v1747
        %v1764 = vadd.f32 %v1731, %v1748
        %v1765 = vadd.f32 %v1732, %v1749
        %v1766 = vadd.f32 %v1733, %v1750
        %v1767 = vadd.f32 %v1734, %v1751
        %v1768 = vadd.f32 %v1735, %v1752
        %v1769 = vadd.f32 %v1736, %v1753
        %v1770 = vadd.f32 %v1737, %v1754
        %v1771 = vadd.f32 %v1738, %v1755
        %v1772 = vadd.f32 %v1739, %v1756
        %v1773 = vperm.slane %v1549, 0
        %v1774 = vmul.f32 %v1014, %v1773
        %v1775 = vmul.f32 %v1015, %v1773
        %v1776 = vmul.f32 %v1016, %v1773
        %v1777 = vmul.f32 %v1017, %v1773
        %v1778 = vmul.f32 %v1018, %v1773
        %v1779 = vmul.f32 %v1019, %v1773
        %v1780 = vmul.f32 %v1020, %v1773
        %v1781 = vmul.f32 %v1021, %v1773
        %v1782 = vmul.f32 %v1022, %v1773
        %v1783 = vmul.f32 %v1023, %v1773
        %v1784 = vmul.f32 %v1024, %v1773
        %v1785 = vmul.f32 %v1025, %v1773
        %v1786 = vmul.f32 %v1026, %v1773
        %v1787 = vmul.f32 %v1027, %v1773
        %v1788 = vmul.f32 %v1028, %v1773
        %v1789 = vmul.f32 %v1029, %v1773
        %v1790 = vadd.f32 %v1757, %v1774
        %v1791 = vadd.f32 %v1758, %v1775
        %v1792 = vadd.f32 %v1759, %v1776
        %v1793 = vadd.f32 %v1760, %v1777
        %v1794 = vadd.f32 %v1761, %v1778
        %v1795 = vadd.f32 %v1762, %v1779
        %v1796 = vadd.f32 %v1763, %v1780
        %v1797 = vadd.f32 %v1764, %v1781
        %v1798 = vadd.f32 %v1765, %v1782
        %v1799 = vadd.f32 %v1766, %v1783
        %v1800 = vadd.f32 %v1767, %v1784
        %v1801 = vadd.f32 %v1768, %v1785
        %v1802 = vadd.f32 %v1769, %v1786
        %v1803 = vadd.f32 %v1770, %v1787
        %v1804 = vadd.f32 %v1771, %v1788
        %v1805 = vadd.f32 %v1772, %v1789
        %v1806 = vperm.slane %v1557, 0
        %v1807 = vmul.f32 %v1790, %v1806
        %v1808 = vmul.f32 %v1791, %v1806
        %v1809 = vmul.f32 %v1792, %v1806
        %v1810 = vmul.f32 %v1793, %v1806
        %v1811 = vmul.f32 %v1794, %v1806
        %v1812 = vmul.f32 %v1795, %v1806
        %v1813 = vmul.f32 %v1796, %v1806
        %v1814 = vmul.f32 %v1797, %v1806
        %v1815 = vmul.f32 %v1798, %v1806
        %v1816 = vmul.f32 %v1799, %v1806
        %v1817 = vmul.f32 %v1800, %v1806
        %v1818 = vmul.f32 %v1801, %v1806
        %v1819 = vmul.f32 %v1802, %v1806
        %v1820 = vmul.f32 %v1803, %v1806
        %v1821 = vmul.f32 %v1804, %v1806
        %v1822 = vmul.f32 %v1805, %v1806
        %v1823 = vperm.slane %v1528, 1
        %v1824 = vmul.f32 %v902, %v1823
        %v1825 = vmul.f32 %v903, %v1823
        %v1826 = vmul.f32 %v904, %v1823
        %v1827 = vmul.f32 %v905, %v1823
        %v1828 = vmul.f32 %v906, %v1823
        %v1829 = vmul.f32 %v907, %v1823
        %v1830 = vmul.f32 %v908, %v1823
        %v1831 = vmul.f32 %v909, %v1823
        %v1832 = vmul.f32 %v910, %v1823
        %v1833 = vmul.f32 %v911, %v1823
        %v1834 = vmul.f32 %v912, %v1823
        %v1835 = vmul.f32 %v913, %v1823
        %v1836 = vmul.f32 %v914, %v1823
        %v1837 = vmul.f32 %v915, %v1823
        %v1838 = vmul.f32 %v916, %v1823
        %v1839 = vmul.f32 %v917, %v1823
        %v1840 = vperm.slane %v1531, 1
        %v1841 = vmul.f32 %v918, %v1840
        %v1842 = vmul.f32 %v919, %v1840
        %v1843 = vmul.f32 %v920, %v1840
        %v1844 = vmul.f32 %v921, %v1840
        %v1845 = vmul.f32 %v922, %v1840
        %v1846 = vmul.f32 %v923, %v1840
        %v1847 = vmul.f32 %v924, %v1840
        %v1848 = vmul.f32 %v925, %v1840
        %v1849 = vmul.f32 %v926, %v1840
        %v1850 = vmul.f32 %v927, %v1840
        %v1851 = vmul.f32 %v928, %v1840
        %v1852 = vmul.f32 %v929, %v1840
        %v1853 = vmul.f32 %v930, %v1840
        %v1854 = vmul.f32 %v931, %v1840
        %v1855 = vmul.f32 %v932, %v1840
        %v1856 = vmul.f32 %v933, %v1840
        %v1857 = vadd.f32 %v1824, %v1841
        %v1858 = vadd.f32 %v1825, %v1842
        %v1859 = vadd.f32 %v1826, %v1843
        %v1860 = vadd.f32 %v1827, %v1844
        %v1861 = vadd.f32 %v1828, %v1845
        %v1862 = vadd.f32 %v1829, %v1846
        %v1863 = vadd.f32 %v1830, %v1847
        %v1864 = vadd.f32 %v1831, %v1848
        %v1865 = vadd.f32 %v1832, %v1849
        %v1866 = vadd.f32 %v1833, %v1850
        %v1867 = vadd.f32 %v1834, %v1851
        %v1868 = vadd.f32 %v1835, %v1852
        %v1869 = vadd.f32 %v1836, %v1853
        %v1870 = vadd.f32 %v1837, %v1854
        %v1871 = vadd.f32 %v1838, %v1855
        %v1872 = vadd.f32 %v1839, %v1856
        %v1873 = vperm.slane %v1534, 1
        %v1874 = vmul.f32 %v934, %v1873
        %v1875 = vmul.f32 %v935, %v1873
        %v1876 = vmul.f32 %v936, %v1873
        %v1877 = vmul.f32 %v937, %v1873
        %v1878 = vmul.f32 %v938, %v1873
        %v1879 = vmul.f32 %v939, %v1873
        %v1880 = vmul.f32 %v940, %v1873
        %v1881 = vmul.f32 %v941, %v1873
        %v1882 = vmul.f32 %v942, %v1873
        %v1883 = vmul.f32 %v943, %v1873
        %v1884 = vmul.f32 %v944, %v1873
        %v1885 = vmul.f32 %v945, %v1873
        %v1886 = vmul.f32 %v946, %v1873
        %v1887 = vmul.f32 %v947, %v1873
        %v1888 = vmul.f32 %v948, %v1873
        %v1889 = vmul.f32 %v949, %v1873
        %v1890 = vadd.f32 %v1857, %v1874
        %v1891 = vadd.f32 %v1858, %v1875
        %v1892 = vadd.f32 %v1859, %v1876
        %v1893 = vadd.f32 %v1860, %v1877
        %v1894 = vadd.f32 %v1861, %v1878
        %v1895 = vadd.f32 %v1862, %v1879
        %v1896 = vadd.f32 %v1863, %v1880
        %v1897 = vadd.f32 %v1864, %v1881
        %v1898 = vadd.f32 %v1865, %v1882
        %v1899 = vadd.f32 %v1866, %v1883
        %v1900 = vadd.f32 %v1867, %v1884
        %v1901 = vadd.f32 %v1868, %v1885
        %v1902 = vadd.f32 %v1869, %v1886
        %v1903 = vadd.f32 %v1870, %v1887
        %v1904 = vadd.f32 %v1871, %v1888
        %v1905 = vadd.f32 %v1872, %v1889
        %v1906 = vperm.slane %v1537, 1
        %v1907 = vmul.f32 %v950, %v1906
        %v1908 = vmul.f32 %v951, %v1906
        %v1909 = vmul.f32 %v952, %v1906
        %v1910 = vmul.f32 %v953, %v1906
        %v1911 = vmul.f32 %v954, %v1906
        %v1912 = vmul.f32 %v955, %v1906
        %v1913 = vmul.f32 %v956, %v1906
        %v1914 = vmul.f32 %v957, %v1906
        %v1915 = vmul.f32 %v958, %v1906
        %v1916 = vmul.f32 %v959, %v1906
        %v1917 = vmul.f32 %v960, %v1906
        %v1918 = vmul.f32 %v961, %v1906
        %v1919 = vmul.f32 %v962, %v1906
        %v1920 = vmul.f32 %v963, %v1906
        %v1921 = vmul.f32 %v964, %v1906
        %v1922 = vmul.f32 %v965, %v1906
        %v1923 = vadd.f32 %v1890, %v1907
        %v1924 = vadd.f32 %v1891, %v1908
        %v1925 = vadd.f32 %v1892, %v1909
        %v1926 = vadd.f32 %v1893, %v1910
        %v1927 = vadd.f32 %v1894, %v1911
        %v1928 = vadd.f32 %v1895, %v1912
        %v1929 = vadd.f32 %v1896, %v1913
        %v1930 = vadd.f32 %v1897, %v1914
        %v1931 = vadd.f32 %v1898, %v1915
        %v1932 = vadd.f32 %v1899, %v1916
        %v1933 = vadd.f32 %v1900, %v1917
        %v1934 = vadd.f32 %v1901, %v1918
        %v1935 = vadd.f32 %v1902, %v1919
        %v1936 = vadd.f32 %v1903, %v1920
        %v1937 = vadd.f32 %v1904, %v1921
        %v1938 = vadd.f32 %v1905, %v1922
        %v1939 = vperm.slane %v1540, 1
        %v1940 = vmul.f32 %v966, %v1939
        %v1941 = vmul.f32 %v967, %v1939
        %v1942 = vmul.f32 %v968, %v1939
        %v1943 = vmul.f32 %v969, %v1939
        %v1944 = vmul.f32 %v970, %v1939
        %v1945 = vmul.f32 %v971, %v1939
        %v1946 = vmul.f32 %v972, %v1939
        %v1947 = vmul.f32 %v973, %v1939
        %v1948 = vmul.f32 %v974, %v1939
        %v1949 = vmul.f32 %v975, %v1939
        %v1950 = vmul.f32 %v976, %v1939
        %v1951 = vmul.f32 %v977, %v1939
        %v1952 = vmul.f32 %v978, %v1939
        %v1953 = vmul.f32 %v979, %v1939
        %v1954 = vmul.f32 %v980, %v1939
        %v1955 = vmul.f32 %v981, %v1939
        %v1956 = vadd.f32 %v1923, %v1940
        %v1957 = vadd.f32 %v1924, %v1941
        %v1958 = vadd.f32 %v1925, %v1942
        %v1959 = vadd.f32 %v1926, %v1943
        %v1960 = vadd.f32 %v1927, %v1944
        %v1961 = vadd.f32 %v1928, %v1945
        %v1962 = vadd.f32 %v1929, %v1946
        %v1963 = vadd.f32 %v1930, %v1947
        %v1964 = vadd.f32 %v1931, %v1948
        %v1965 = vadd.f32 %v1932, %v1949
        %v1966 = vadd.f32 %v1933, %v1950
        %v1967 = vadd.f32 %v1934, %v1951
        %v1968 = vadd.f32 %v1935, %v1952
        %v1969 = vadd.f32 %v1936, %v1953
        %v1970 = vadd.f32 %v1937, %v1954
        %v1971 = vadd.f32 %v1938, %v1955
        %v1972 = vperm.slane %v1543, 1
        %v1973 = vmul.f32 %v982, %v1972
        %v1974 = vmul.f32 %v983, %v1972
        %v1975 = vmul.f32 %v984, %v1972
        %v1976 = vmul.f32 %v985, %v1972
        %v1977 = vmul.f32 %v986, %v1972
        %v1978 = vmul.f32 %v987, %v1972
        %v1979 = vmul.f32 %v988, %v1972
        %v1980 = vmul.f32 %v989, %v1972
        %v1981 = vmul.f32 %v990, %v1972
        %v1982 = vmul.f32 %v991, %v1972
        %v1983 = vmul.f32 %v992, %v1972
        %v1984 = vmul.f32 %v993, %v1972
        %v1985 = vmul.f32 %v994, %v1972
        %v1986 = vmul.f32 %v995, %v1972
        %v1987 = vmul.f32 %v996, %v1972
        %v1988 = vmul.f32 %v997, %v1972
        %v1989 = vadd.f32 %v1956, %v1973
        %v1990 = vadd.f32 %v1957, %v1974
        %v1991 = vadd.f32 %v1958, %v1975
        %v1992 = vadd.f32 %v1959, %v1976
        %v1993 = vadd.f32 %v1960, %v1977
        %v1994 = vadd.f32 %v1961, %v1978
        %v1995 = vadd.f32 %v1962, %v1979
        %v1996 = vadd.f32 %v1963, %v1980
        %v1997 = vadd.f32 %v1964, %v1981
        %v1998 = vadd.f32 %v1965, %v1982
        %v1999 = vadd.f32 %v1966, %v1983
        %v2000 = vadd.f32 %v1967, %v1984
        %v2001 = vadd.f32 %v1968, %v1985
        %v2002 = vadd.f32 %v1969, %v1986
        %v2003 = vadd.f32 %v1970, %v1987
        %v2004 = vadd.f32 %v1971, %v1988
        %v2005 = vperm.slane %v1546, 1
        %v2006 = vmul.f32 %v998, %v2005
        %v2007 = vmul.f32 %v999, %v2005
        %v2008 = vmul.f32 %v1000, %v2005
        %v2009 = vmul.f32 %v1001, %v2005
        %v2010 = vmul.f32 %v1002, %v2005
        %v2011 = vmul.f32 %v1003, %v2005
        %v2012 = vmul.f32 %v1004, %v2005
        %v2013 = vmul.f32 %v1005, %v2005
        %v2014 = vmul.f32 %v1006, %v2005
        %v2015 = vmul.f32 %v1007, %v2005
        %v2016 = vmul.f32 %v1008, %v2005
        %v2017 = vmul.f32 %v1009, %v2005
        %v2018 = vmul.f32 %v1010, %v2005
        %v2019 = vmul.f32 %v1011, %v2005
        %v2020 = vmul.f32 %v1012, %v2005
        %v2021 = vmul.f32 %v1013, %v2005
        %v2022 = vadd.f32 %v1989, %v2006
        %v2023 = vadd.f32 %v1990, %v2007
        %v2024 = vadd.f32 %v1991, %v2008
        %v2025 = vadd.f32 %v1992, %v2009
        %v2026 = vadd.f32 %v1993, %v2010
        %v2027 = vadd.f32 %v1994, %v2011
        %v2028 = vadd.f32 %v1995, %v2012
        %v2029 = vadd.f32 %v1996, %v2013
        %v2030 = vadd.f32 %v1997, %v2014
        %v2031 = vadd.f32 %v1998, %v2015
        %v2032 = vadd.f32 %v1999, %v2016
        %v2033 = vadd.f32 %v2000, %v2017
        %v2034 = vadd.f32 %v2001, %v2018
        %v2035 = vadd.f32 %v2002, %v2019
        %v2036 = vadd.f32 %v2003, %v2020
        %v2037 = vadd.f32 %v2004, %v2021
        %v2038 = vperm.slane %v1549, 1
        %v2039 = vmul.f32 %v1014, %v2038
        %v2040 = vmul.f32 %v1015, %v2038
        %v2041 = vmul.f32 %v1016, %v2038
        %v2042 = vmul.f32 %v1017, %v2038
        %v2043 = vmul.f32 %v1018, %v2038
        %v2044 = vmul.f32 %v1019, %v2038
        %v2045 = vmul.f32 %v1020, %v2038
        %v2046 = vmul.f32 %v1021, %v2038
        %v2047 = vmul.f32 %v1022, %v2038
        %v2048 = vmul.f32 %v1023, %v2038
        %v2049 = vmul.f32 %v1024, %v2038
        %v2050 = vmul.f32 %v1025, %v2038
        %v2051 = vmul.f32 %v1026, %v2038
        %v2052 = vmul.f32 %v1027, %v2038
        %v2053 = vmul.f32 %v1028, %v2038
        %v2054 = vmul.f32 %v1029, %v2038
        %v2055 = vadd.f32 %v2022, %v2039
        %v2056 = vadd.f32 %v2023, %v2040
        %v2057 = vadd.f32 %v2024, %v2041
        %v2058 = vadd.f32 %v2025, %v2042
        %v2059 = vadd.f32 %v2026, %v2043
        %v2060 = vadd.f32 %v2027, %v2044
        %v2061 = vadd.f32 %v2028, %v2045
        %v2062 = vadd.f32 %v2029, %v2046
        %v2063 = vadd.f32 %v2030, %v2047
        %v2064 = vadd.f32 %v2031, %v2048
        %v2065 = vadd.f32 %v2032, %v2049
        %v2066 = vadd.f32 %v2033, %v2050
        %v2067 = vadd.f32 %v2034, %v2051
        %v2068 = vadd.f32 %v2035, %v2052
        %v2069 = vadd.f32 %v2036, %v2053
        %v2070 = vadd.f32 %v2037, %v2054
        %v2071 = vperm.slane %v1557, 1
        %v2072 = vmul.f32 %v2055, %v2071
        %v2073 = vmul.f32 %v2056, %v2071
        %v2074 = vmul.f32 %v2057, %v2071
        %v2075 = vmul.f32 %v2058, %v2071
        %v2076 = vmul.f32 %v2059, %v2071
        %v2077 = vmul.f32 %v2060, %v2071
        %v2078 = vmul.f32 %v2061, %v2071
        %v2079 = vmul.f32 %v2062, %v2071
        %v2080 = vmul.f32 %v2063, %v2071
        %v2081 = vmul.f32 %v2064, %v2071
        %v2082 = vmul.f32 %v2065, %v2071
        %v2083 = vmul.f32 %v2066, %v2071
        %v2084 = vmul.f32 %v2067, %v2071
        %v2085 = vmul.f32 %v2068, %v2071
        %v2086 = vmul.f32 %v2069, %v2071
        %v2087 = vmul.f32 %v2070, %v2071
        %v2088 = vperm.slane %v1528, 2
        %v2089 = vmul.f32 %v902, %v2088
        %v2090 = vmul.f32 %v903, %v2088
        %v2091 = vmul.f32 %v904, %v2088
        %v2092 = vmul.f32 %v905, %v2088
        %v2093 = vmul.f32 %v906, %v2088
        %v2094 = vmul.f32 %v907, %v2088
        %v2095 = vmul.f32 %v908, %v2088
        %v2096 = vmul.f32 %v909, %v2088
        %v2097 = vmul.f32 %v910, %v2088
        %v2098 = vmul.f32 %v911, %v2088
        %v2099 = vmul.f32 %v912, %v2088
        %v2100 = vmul.f32 %v913, %v2088
        %v2101 = vmul.f32 %v914, %v2088
        %v2102 = vmul.f32 %v915, %v2088
        %v2103 = vmul.f32 %v916, %v2088
        %v2104 = vmul.f32 %v917, %v2088
        %v2105 = vperm.slane %v1531, 2
        %v2106 = vmul.f32 %v918, %v2105
        %v2107 = vmul.f32 %v919, %v2105
        %v2108 = vmul.f32 %v920, %v2105
        %v2109 = vmul.f32 %v921, %v2105
        %v2110 = vmul.f32 %v922, %v2105
        %v2111 = vmul.f32 %v923, %v2105
        %v2112 = vmul.f32 %v924, %v2105
        %v2113 = vmul.f32 %v925, %v2105
        %v2114 = vmul.f32 %v926, %v2105
        %v2115 = vmul.f32 %v927, %v2105
        %v2116 = vmul.f32 %v928, %v2105
        %v2117 = vmul.f32 %v929, %v2105
        %v2118 = vmul.f32 %v930, %v2105
        %v2119 = vmul.f32 %v931, %v2105
        %v2120 = vmul.f32 %v932, %v2105
        %v2121 = vmul.f32 %v933, %v2105
        %v2122 = vadd.f32 %v2089, %v2106
        %v2123 = vadd.f32 %v2090, %v2107
        %v2124 = vadd.f32 %v2091, %v2108
        %v2125 = vadd.f32 %v2092, %v2109
        %v2126 = vadd.f32 %v2093, %v2110
        %v2127 = vadd.f32 %v2094, %v2111
        %v2128 = vadd.f32 %v2095, %v2112
        %v2129 = vadd.f32 %v2096, %v2113
        %v2130 = vadd.f32 %v2097, %v2114
        %v2131 = vadd.f32 %v2098, %v2115
        %v2132 = vadd.f32 %v2099, %v2116
        %v2133 = vadd.f32 %v2100, %v2117
        %v2134 = vadd.f32 %v2101, %v2118
        %v2135 = vadd.f32 %v2102, %v2119
        %v2136 = vadd.f32 %v2103, %v2120
        %v2137 = vadd.f32 %v2104, %v2121
        %v2138 = vperm.slane %v1534, 2
        %v2139 = vmul.f32 %v934, %v2138
        %v2140 = vmul.f32 %v935, %v2138
        %v2141 = vmul.f32 %v936, %v2138
        %v2142 = vmul.f32 %v937, %v2138
        %v2143 = vmul.f32 %v938, %v2138
        %v2144 = vmul.f32 %v939, %v2138
        %v2145 = vmul.f32 %v940, %v2138
        %v2146 = vmul.f32 %v941, %v2138
        %v2147 = vmul.f32 %v942, %v2138
        %v2148 = vmul.f32 %v943, %v2138
        %v2149 = vmul.f32 %v944, %v2138
        %v2150 = vmul.f32 %v945, %v2138
        %v2151 = vmul.f32 %v946, %v2138
        %v2152 = vmul.f32 %v947, %v2138
        %v2153 = vmul.f32 %v948, %v2138
        %v2154 = vmul.f32 %v949, %v2138
        %v2155 = vadd.f32 %v2122, %v2139
        %v2156 = vadd.f32 %v2123, %v2140
        %v2157 = vadd.f32 %v2124, %v2141
        %v2158 = vadd.f32 %v2125, %v2142
        %v2159 = vadd.f32 %v2126, %v2143
        %v2160 = vadd.f32 %v2127, %v2144
        %v2161 = vadd.f32 %v2128, %v2145
        %v2162 = vadd.f32 %v2129, %v2146
        %v2163 = vadd.f32 %v2130, %v2147
        %v2164 = vadd.f32 %v2131, %v2148
        %v2165 = vadd.f32 %v2132, %v2149
        %v2166 = vadd.f32 %v2133, %v2150
        %v2167 = vadd.f32 %v2134, %v2151
        %v2168 = vadd.f32 %v2135, %v2152
        %v2169 = vadd.f32 %v2136, %v2153
        %v2170 = vadd.f32 %v2137, %v2154
        %v2171 = vperm.slane %v1537, 2
        %v2172 = vmul.f32 %v950, %v2171
        %v2173 = vmul.f32 %v951, %v2171
        %v2174 = vmul.f32 %v952, %v2171
        %v2175 = vmul.f32 %v953, %v2171
        %v2176 = vmul.f32 %v954, %v2171
        %v2177 = vmul.f32 %v955, %v2171
        %v2178 = vmul.f32 %v956, %v2171
        %v2179 = vmul.f32 %v957, %v2171
        %v2180 = vmul.f32 %v958, %v2171
        %v2181 = vmul.f32 %v959, %v2171
        %v2182 = vmul.f32 %v960, %v2171
        %v2183 = vmul.f32 %v961, %v2171
        %v2184 = vmul.f32 %v962, %v2171
        %v2185 = vmul.f32 %v963, %v2171
        %v2186 = vmul.f32 %v964, %v2171
        %v2187 = vmul.f32 %v965, %v2171
        %v2188 = vadd.f32 %v2155, %v2172
        %v2189 = vadd.f32 %v2156, %v2173
        %v2190 = vadd.f32 %v2157, %v2174
        %v2191 = vadd.f32 %v2158, %v2175
        %v2192 = vadd.f32 %v2159, %v2176
        %v2193 = vadd.f32 %v2160, %v2177
        %v2194 = vadd.f32 %v2161, %v2178
        %v2195 = vadd.f32 %v2162, %v2179
        %v2196 = vadd.f32 %v2163, %v2180
        %v2197 = vadd.f32 %v2164, %v2181
        %v2198 = vadd.f32 %v2165, %v2182
        %v2199 = vadd.f32 %v2166, %v2183
        %v2200 = vadd.f32 %v2167, %v2184
        %v2201 = vadd.f32 %v2168, %v2185
        %v2202 = vadd.f32 %v2169, %v2186
        %v2203 = vadd.f32 %v2170, %v2187
        %v2204 = vperm.slane %v1540, 2
        %v2205 = vmul.f32 %v966, %v2204
        %v2206 = vmul.f32 %v967, %v2204
        %v2207 = vmul.f32 %v968, %v2204
        %v2208 = vmul.f32 %v969, %v2204
        %v2209 = vmul.f32 %v970, %v2204
        %v2210 = vmul.f32 %v971, %v2204
        %v2211 = vmul.f32 %v972, %v2204
        %v2212 = vmul.f32 %v973, %v2204
        %v2213 = vmul.f32 %v974, %v2204
        %v2214 = vmul.f32 %v975, %v2204
        %v2215 = vmul.f32 %v976, %v2204
        %v2216 = vmul.f32 %v977, %v2204
        %v2217 = vmul.f32 %v978, %v2204
        %v2218 = vmul.f32 %v979, %v2204
        %v2219 = vmul.f32 %v980, %v2204
        %v2220 = vmul.f32 %v981, %v2204
        %v2221 = vadd.f32 %v2188, %v2205
        %v2222 = vadd.f32 %v2189, %v2206
        %v2223 = vadd.f32 %v2190, %v2207
        %v2224 = vadd.f32 %v2191, %v2208
        %v2225 = vadd.f32 %v2192, %v2209
        %v2226 = vadd.f32 %v2193, %v2210
        %v2227 = vadd.f32 %v2194, %v2211
        %v2228 = vadd.f32 %v2195, %v2212
        %v2229 = vadd.f32 %v2196, %v2213
        %v2230 = vadd.f32 %v2197, %v2214
        %v2231 = vadd.f32 %v2198, %v2215
        %v2232 = vadd.f32 %v2199, %v2216
        %v2233 = vadd.f32 %v2200, %v2217
        %v2234 = vadd.f32 %v2201, %v2218
        %v2235 = vadd.f32 %v2202, %v2219
        %v2236 = vadd.f32 %v2203, %v2220
        %v2237 = vperm.slane %v1543, 2
        %v2238 = vmul.f32 %v982, %v2237
        %v2239 = vmul.f32 %v983, %v2237
        %v2240 = vmul.f32 %v984, %v2237
        %v2241 = vmul.f32 %v985, %v2237
        %v2242 = vmul.f32 %v986, %v2237
        %v2243 = vmul.f32 %v987, %v2237
        %v2244 = vmul.f32 %v988, %v2237
        %v2245 = vmul.f32 %v989, %v2237
        %v2246 = vmul.f32 %v990, %v2237
        %v2247 = vmul.f32 %v991, %v2237
        %v2248 = vmul.f32 %v992, %v2237
        %v2249 = vmul.f32 %v993, %v2237
        %v2250 = vmul.f32 %v994, %v2237
        %v2251 = vmul.f32 %v995, %v2237
        %v2252 = vmul.f32 %v996, %v2237
        %v2253 = vmul.f32 %v997, %v2237
        %v2254 = vadd.f32 %v2221, %v2238
        %v2255 = vadd.f32 %v2222, %v2239
        %v2256 = vadd.f32 %v2223, %v2240
        %v2257 = vadd.f32 %v2224, %v2241
        %v2258 = vadd.f32 %v2225, %v2242
        %v2259 = vadd.f32 %v2226, %v2243
        %v2260 = vadd.f32 %v2227, %v2244
        %v2261 = vadd.f32 %v2228, %v2245
        %v2262 = vadd.f32 %v2229, %v2246
        %v2263 = vadd.f32 %v2230, %v2247
        %v2264 = vadd.f32 %v2231, %v2248
        %v2265 = vadd.f32 %v2232, %v2249
        %v2266 = vadd.f32 %v2233, %v2250
        %v2267 = vadd.f32 %v2234, %v2251
        %v2268 = vadd.f32 %v2235, %v2252
        %v2269 = vadd.f32 %v2236, %v2253
        %v2270 = vperm.slane %v1546, 2
        %v2271 = vmul.f32 %v998, %v2270
        %v2272 = vmul.f32 %v999, %v2270
        %v2273 = vmul.f32 %v1000, %v2270
        %v2274 = vmul.f32 %v1001, %v2270
        %v2275 = vmul.f32 %v1002, %v2270
        %v2276 = vmul.f32 %v1003, %v2270
        %v2277 = vmul.f32 %v1004, %v2270
        %v2278 = vmul.f32 %v1005, %v2270
        %v2279 = vmul.f32 %v1006, %v2270
        %v2280 = vmul.f32 %v1007, %v2270
        %v2281 = vmul.f32 %v1008, %v2270
        %v2282 = vmul.f32 %v1009, %v2270
        %v2283 = vmul.f32 %v1010, %v2270
        %v2284 = vmul.f32 %v1011, %v2270
        %v2285 = vmul.f32 %v1012, %v2270
        %v2286 = vmul.f32 %v1013, %v2270
        %v2287 = vadd.f32 %v2254, %v2271
        %v2288 = vadd.f32 %v2255, %v2272
        %v2289 = vadd.f32 %v2256, %v2273
        %v2290 = vadd.f32 %v2257, %v2274
        %v2291 = vadd.f32 %v2258, %v2275
        %v2292 = vadd.f32 %v2259, %v2276
        %v2293 = vadd.f32 %v2260, %v2277
        %v2294 = vadd.f32 %v2261, %v2278
        %v2295 = vadd.f32 %v2262, %v2279
        %v2296 = vadd.f32 %v2263, %v2280
        %v2297 = vadd.f32 %v2264, %v2281
        %v2298 = vadd.f32 %v2265, %v2282
        %v2299 = vadd.f32 %v2266, %v2283
        %v2300 = vadd.f32 %v2267, %v2284
        %v2301 = vadd.f32 %v2268, %v2285
        %v2302 = vadd.f32 %v2269, %v2286
        %v2303 = vperm.slane %v1549, 2
        %v2304 = vmul.f32 %v1014, %v2303
        %v2305 = vmul.f32 %v1015, %v2303
        %v2306 = vmul.f32 %v1016, %v2303
        %v2307 = vmul.f32 %v1017, %v2303
        %v2308 = vmul.f32 %v1018, %v2303
        %v2309 = vmul.f32 %v1019, %v2303
        %v2310 = vmul.f32 %v1020, %v2303
        %v2311 = vmul.f32 %v1021, %v2303
        %v2312 = vmul.f32 %v1022, %v2303
        %v2313 = vmul.f32 %v1023, %v2303
        %v2314 = vmul.f32 %v1024, %v2303
        %v2315 = vmul.f32 %v1025, %v2303
        %v2316 = vmul.f32 %v1026, %v2303
        %v2317 = vmul.f32 %v1027, %v2303
        %v2318 = vmul.f32 %v1028, %v2303
        %v2319 = vmul.f32 %v1029, %v2303
        %v2320 = vadd.f32 %v2287, %v2304
        %v2321 = vadd.f32 %v2288, %v2305
        %v2322 = vadd.f32 %v2289, %v2306
        %v2323 = vadd.f32 %v2290, %v2307
        %v2324 = vadd.f32 %v2291, %v2308
        %v2325 = vadd.f32 %v2292, %v2309
        %v2326 = vadd.f32 %v2293, %v2310
        %v2327 = vadd.f32 %v2294, %v2311
        %v2328 = vadd.f32 %v2295, %v2312
        %v2329 = vadd.f32 %v2296, %v2313
        %v2330 = vadd.f32 %v2297, %v2314
        %v2331 = vadd.f32 %v2298, %v2315
        %v2332 = vadd.f32 %v2299, %v2316
        %v2333 = vadd.f32 %v2300, %v2317
        %v2334 = vadd.f32 %v2301, %v2318
        %v2335 = vadd.f32 %v2302, %v2319
        %v2336 = vperm.slane %v1557, 2
        %v2337 = vmul.f32 %v2320, %v2336
        %v2338 = vmul.f32 %v2321, %v2336
        %v2339 = vmul.f32 %v2322, %v2336
        %v2340 = vmul.f32 %v2323, %v2336
        %v2341 = vmul.f32 %v2324, %v2336
        %v2342 = vmul.f32 %v2325, %v2336
        %v2343 = vmul.f32 %v2326, %v2336
        %v2344 = vmul.f32 %v2327, %v2336
        %v2345 = vmul.f32 %v2328, %v2336
        %v2346 = vmul.f32 %v2329, %v2336
        %v2347 = vmul.f32 %v2330, %v2336
        %v2348 = vmul.f32 %v2331, %v2336
        %v2349 = vmul.f32 %v2332, %v2336
        %v2350 = vmul.f32 %v2333, %v2336
        %v2351 = vmul.f32 %v2334, %v2336
        %v2352 = vmul.f32 %v2335, %v2336
        %v2353 = vperm.slane %v1528, 3
        %v2354 = vmul.f32 %v902, %v2353
        %v2355 = vmul.f32 %v903, %v2353
        %v2356 = vmul.f32 %v904, %v2353
        %v2357 = vmul.f32 %v905, %v2353
        %v2358 = vmul.f32 %v906, %v2353
        %v2359 = vmul.f32 %v907, %v2353
        %v2360 = vmul.f32 %v908, %v2353
        %v2361 = vmul.f32 %v909, %v2353
        %v2362 = vmul.f32 %v910, %v2353
        %v2363 = vmul.f32 %v911, %v2353
        %v2364 = vmul.f32 %v912, %v2353
        %v2365 = vmul.f32 %v913, %v2353
        %v2366 = vmul.f32 %v914, %v2353
        %v2367 = vmul.f32 %v915, %v2353
        %v2368 = vmul.f32 %v916, %v2353
        %v2369 = vmul.f32 %v917, %v2353
        %v2370 = vperm.slane %v1531, 3
        %v2371 = vmul.f32 %v918, %v2370
        %v2372 = vmul.f32 %v919, %v2370
        %v2373 = vmul.f32 %v920, %v2370
        %v2374 = vmul.f32 %v921, %v2370
        %v2375 = vmul.f32 %v922, %v2370
        %v2376 = vmul.f32 %v923, %v2370
        %v2377 = vmul.f32 %v924, %v2370
        %v2378 = vmul.f32 %v925, %v2370
        %v2379 = vmul.f32 %v926, %v2370
        %v2380 = vmul.f32 %v927, %v2370
        %v2381 = vmul.f32 %v928, %v2370
        %v2382 = vmul.f32 %v929, %v2370
        %v2383 = vmul.f32 %v930, %v2370
        %v2384 = vmul.f32 %v931, %v2370
        %v2385 = vmul.f32 %v932, %v2370
        %v2386 = vmul.f32 %v933, %v2370
        %v2387 = vadd.f32 %v2354, %v2371
        %v2388 = vadd.f32 %v2355, %v2372
        %v2389 = vadd.f32 %v2356, %v2373
        %v2390 = vadd.f32 %v2357, %v2374
        %v2391 = vadd.f32 %v2358, %v2375
        %v2392 = vadd.f32 %v2359, %v2376
        %v2393 = vadd.f32 %v2360, %v2377
        %v2394 = vadd.f32 %v2361, %v2378
        %v2395 = vadd.f32 %v2362, %v2379
        %v2396 = vadd.f32 %v2363, %v2380
        %v2397 = vadd.f32 %v2364, %v2381
        %v2398 = vadd.f32 %v2365, %v2382
        %v2399 = vadd.f32 %v2366, %v2383
        %v2400 = vadd.f32 %v2367, %v2384
        %v2401 = vadd.f32 %v2368, %v2385
        %v2402 = vadd.f32 %v2369, %v2386
        %v2403 = vperm.slane %v1534, 3
        %v2404 = vmul.f32 %v934, %v2403
        %v2405 = vmul.f32 %v935, %v2403
        %v2406 = vmul.f32 %v936, %v2403
        %v2407 = vmul.f32 %v937, %v2403
        %v2408 = vmul.f32 %v938, %v2403
        %v2409 = vmul.f32 %v939, %v2403
        %v2410 = vmul.f32 %v940, %v2403
        %v2411 = vmul.f32 %v941, %v2403
        %v2412 = vmul.f32 %v942, %v2403
        %v2413 = vmul.f32 %v943, %v2403
        %v2414 = vmul.f32 %v944, %v2403
        %v2415 = vmul.f32 %v945, %v2403
        %v2416 = vmul.f32 %v946, %v2403
        %v2417 = vmul.f32 %v947, %v2403
        %v2418 = vmul.f32 %v948, %v2403
        %v2419 = vmul.f32 %v949, %v2403
        %v2420 = vadd.f32 %v2387, %v2404
        %v2421 = vadd.f32 %v2388, %v2405
        %v2422 = vadd.f32 %v2389, %v2406
        %v2423 = vadd.f32 %v2390, %v2407
        %v2424 = vadd.f32 %v2391, %v2408
        %v2425 = vadd.f32 %v2392, %v2409
        %v2426 = vadd.f32 %v2393, %v2410
        %v2427 = vadd.f32 %v2394, %v2411
        %v2428 = vadd.f32 %v2395, %v2412
        %v2429 = vadd.f32 %v2396, %v2413
        %v2430 = vadd.f32 %v2397, %v2414
        %v2431 = vadd.f32 %v2398, %v2415
        %v2432 = vadd.f32 %v2399, %v2416
        %v2433 = vadd.f32 %v2400, %v2417
        %v2434 = vadd.f32 %v2401, %v2418
        %v2435 = vadd.f32 %v2402, %v2419
        %v2436 = vperm.slane %v1537, 3
        %v2437 = vmul.f32 %v950, %v2436
        %v2438 = vmul.f32 %v951, %v2436
        %v2439 = vmul.f32 %v952, %v2436
        %v2440 = vmul.f32 %v953, %v2436
        %v2441 = vmul.f32 %v954, %v2436
        %v2442 = vmul.f32 %v955, %v2436
        %v2443 = vmul.f32 %v956, %v2436
        %v2444 = vmul.f32 %v957, %v2436
        %v2445 = vmul.f32 %v958, %v2436
        %v2446 = vmul.f32 %v959, %v2436
        %v2447 = vmul.f32 %v960, %v2436
        %v2448 = vmul.f32 %v961, %v2436
        %v2449 = vmul.f32 %v962, %v2436
        %v2450 = vmul.f32 %v963, %v2436
        %v2451 = vmul.f32 %v964, %v2436
        %v2452 = vmul.f32 %v965, %v2436
        %v2453 = vadd.f32 %v2420, %v2437
        %v2454 = vadd.f32 %v2421, %v2438
        %v2455 = vadd.f32 %v2422, %v2439
        %v2456 = vadd.f32 %v2423, %v2440
        %v2457 = vadd.f32 %v2424, %v2441
        %v2458 = vadd.f32 %v2425, %v2442
        %v2459 = vadd.f32 %v2426, %v2443
        %v2460 = vadd.f32 %v2427, %v2444
        %v2461 = vadd.f32 %v2428, %v2445
        %v2462 = vadd.f32 %v2429, %v2446
        %v2463 = vadd.f32 %v2430, %v2447
        %v2464 = vadd.f32 %v2431, %v2448
        %v2465 = vadd.f32 %v2432, %v2449
        %v2466 = vadd.f32 %v2433, %v2450
        %v2467 = vadd.f32 %v2434, %v2451
        %v2468 = vadd.f32 %v2435, %v2452
        %v2469 = vperm.slane %v1540, 3
        %v2470 = vmul.f32 %v966, %v2469
        %v2471 = vmul.f32 %v967, %v2469
        %v2472 = vmul.f32 %v968, %v2469
        %v2473 = vmul.f32 %v969, %v2469
        %v2474 = vmul.f32 %v970, %v2469
        %v2475 = vmul.f32 %v971, %v2469
        %v2476 = vmul.f32 %v972, %v2469
        %v2477 = vmul.f32 %v973, %v2469
        %v2478 = vmul.f32 %v974, %v2469
        %v2479 = vmul.f32 %v975, %v2469
        %v2480 = vmul.f32 %v976, %v2469
        %v2481 = vmul.f32 %v977, %v2469
        %v2482 = vmul.f32 %v978, %v2469
        %v2483 = vmul.f32 %v979, %v2469
        %v2484 = vmul.f32 %v980, %v2469
        %v2485 = vmul.f32 %v981, %v2469
        %v2486 = vadd.f32 %v2453, %v2470
        %v2487 = vadd.f32 %v2454, %v2471
        %v2488 = vadd.f32 %v2455, %v2472
        %v2489 = vadd.f32 %v2456, %v2473
        %v2490 = vadd.f32 %v2457, %v2474
        %v2491 = vadd.f32 %v2458, %v2475
        %v2492 = vadd.f32 %v2459, %v2476
        %v2493 = vadd.f32 %v2460, %v2477
        %v2494 = vadd.f32 %v2461, %v2478
        %v2495 = vadd.f32 %v2462, %v2479
        %v2496 = vadd.f32 %v2463, %v2480
        %v2497 = vadd.f32 %v2464, %v2481
        %v2498 = vadd.f32 %v2465, %v2482
        %v2499 = vadd.f32 %v2466, %v2483
        %v2500 = vadd.f32 %v2467, %v2484
        %v2501 = vadd.f32 %v2468, %v2485
        %v2502 = vperm.slane %v1543, 3
        %v2503 = vmul.f32 %v982, %v2502
        %v2504 = vmul.f32 %v983, %v2502
        %v2505 = vmul.f32 %v984, %v2502
        %v2506 = vmul.f32 %v985, %v2502
        %v2507 = vmul.f32 %v986, %v2502
        %v2508 = vmul.f32 %v987, %v2502
        %v2509 = vmul.f32 %v988, %v2502
        %v2510 = vmul.f32 %v989, %v2502
        %v2511 = vmul.f32 %v990, %v2502
        %v2512 = vmul.f32 %v991, %v2502
        %v2513 = vmul.f32 %v992, %v2502
        %v2514 = vmul.f32 %v993, %v2502
        %v2515 = vmul.f32 %v994, %v2502
        %v2516 = vmul.f32 %v995, %v2502
        %v2517 = vmul.f32 %v996, %v2502
        %v2518 = vmul.f32 %v997, %v2502
        %v2519 = vadd.f32 %v2486, %v2503
        %v2520 = vadd.f32 %v2487, %v2504
        %v2521 = vadd.f32 %v2488, %v2505
        %v2522 = vadd.f32 %v2489, %v2506
        %v2523 = vadd.f32 %v2490, %v2507
        %v2524 = vadd.f32 %v2491, %v2508
        %v2525 = vadd.f32 %v2492, %v2509
        %v2526 = vadd.f32 %v2493, %v2510
        %v2527 = vadd.f32 %v2494, %v2511
        %v2528 = vadd.f32 %v2495, %v2512
        %v2529 = vadd.f32 %v2496, %v2513
        %v2530 = vadd.f32 %v2497, %v2514
        %v2531 = vadd.f32 %v2498, %v2515
        %v2532 = vadd.f32 %v2499, %v2516
        %v2533 = vadd.f32 %v2500, %v2517
        %v2534 = vadd.f32 %v2501, %v2518
        %v2535 = vperm.slane %v1546, 3
        %v2536 = vmul.f32 %v998, %v2535
        %v2537 = vmul.f32 %v999, %v2535
        %v2538 = vmul.f32 %v1000, %v2535
        %v2539 = vmul.f32 %v1001, %v2535
        %v2540 = vmul.f32 %v1002, %v2535
        %v2541 = vmul.f32 %v1003, %v2535
        %v2542 = vmul.f32 %v1004, %v2535
        %v2543 = vmul.f32 %v1005, %v2535
        %v2544 = vmul.f32 %v1006, %v2535
        %v2545 = vmul.f32 %v1007, %v2535
        %v2546 = vmul.f32 %v1008, %v2535
        %v2547 = vmul.f32 %v1009, %v2535
        %v2548 = vmul.f32 %v1010, %v2535
        %v2549 = vmul.f32 %v1011, %v2535
        %v2550 = vmul.f32 %v1012, %v2535
        %v2551 = vmul.f32 %v1013, %v2535
        %v2552 = vadd.f32 %v2519, %v2536
        %v2553 = vadd.f32 %v2520, %v2537
        %v2554 = vadd.f32 %v2521, %v2538
        %v2555 = vadd.f32 %v2522, %v2539
        %v2556 = vadd.f32 %v2523, %v2540
        %v2557 = vadd.f32 %v2524, %v2541
        %v2558 = vadd.f32 %v2525, %v2542
        %v2559 = vadd.f32 %v2526, %v2543
        %v2560 = vadd.f32 %v2527, %v2544
        %v2561 = vadd.f32 %v2528, %v2545
        %v2562 = vadd.f32 %v2529, %v2546
        %v2563 = vadd.f32 %v2530, %v2547
        %v2564 = vadd.f32 %v2531, %v2548
        %v2565 = vadd.f32 %v2532, %v2549
        %v2566 = vadd.f32 %v2533, %v2550
        %v2567 = vadd.f32 %v2534, %v2551
        %v2568 = vperm.slane %v1549, 3
        %v2569 = vmul.f32 %v1014, %v2568
        %v2570 = vmul.f32 %v1015, %v2568
        %v2571 = vmul.f32 %v1016, %v2568
        %v2572 = vmul.f32 %v1017, %v2568
        %v2573 = vmul.f32 %v1018, %v2568
        %v2574 = vmul.f32 %v1019, %v2568
        %v2575 = vmul.f32 %v1020, %v2568
        %v2576 = vmul.f32 %v1021, %v2568
        %v2577 = vmul.f32 %v1022, %v2568
        %v2578 = vmul.f32 %v1023, %v2568
        %v2579 = vmul.f32 %v1024, %v2568
        %v2580 = vmul.f32 %v1025, %v2568
        %v2581 = vmul.f32 %v1026, %v2568
        %v2582 = vmul.f32 %v1027, %v2568
        %v2583 = vmul.f32 %v1028, %v2568
        %v2584 = vmul.f32 %v1029, %v2568
        %v2585 = vadd.f32 %v2552, %v2569
        %v2586 = vadd.f32 %v2553, %v2570
        %v2587 = vadd.f32 %v2554, %v2571
        %v2588 = vadd.f32 %v2555, %v2572
        %v2589 = vadd.f32 %v2556, %v2573
        %v2590 = vadd.f32 %v2557, %v2574
        %v2591 = vadd.f32 %v2558, %v2575
        %v2592 = vadd.f32 %v2559, %v2576
        %v2593 = vadd.f32 %v2560, %v2577
        %v2594 = vadd.f32 %v2561, %v2578
        %v2595 = vadd.f32 %v2562, %v2579
        %v2596 = vadd.f32 %v2563, %v2580
        %v2597 = vadd.f32 %v2564, %v2581
        %v2598 = vadd.f32 %v2565, %v2582
        %v2599 = vadd.f32 %v2566, %v2583
        %v2600 = vadd.f32 %v2567, %v2584
        %v2601 = vperm.slane %v1557, 3
        %v2602 = vmul.f32 %v2585, %v2601
        %v2603 = vmul.f32 %v2586, %v2601
        %v2604 = vmul.f32 %v2587, %v2601
        %v2605 = vmul.f32 %v2588, %v2601
        %v2606 = vmul.f32 %v2589, %v2601
        %v2607 = vmul.f32 %v2590, %v2601
        %v2608 = vmul.f32 %v2591, %v2601
        %v2609 = vmul.f32 %v2592, %v2601
        %v2610 = vmul.f32 %v2593, %v2601
        %v2611 = vmul.f32 %v2594, %v2601
        %v2612 = vmul.f32 %v2595, %v2601
        %v2613 = vmul.f32 %v2596, %v2601
        %v2614 = vmul.f32 %v2597, %v2601
        %v2615 = vmul.f32 %v2598, %v2601
        %v2616 = vmul.f32 %v2599, %v2601
        %v2617 = vmul.f32 %v2600, %v2601
        %v2618 = vld [vmem:[%s2] sm:$0xff]
        %v2619 = vld [vmem:[%s2 + $0x8] sm:$0xff]
        %v2620 = vld [vmem:[%s2 + $0x10] sm:$0xff]
        %v2621 = vld [vmem:[%s2 + $0x18] sm:$0xff]
        %v2622 = vld [vmem:[%s2 + $0x20] sm:$0xff]
        %v2623 = vld [vmem:[%s2 + $0x28] sm:$0xff]
        %v2624 = vld [vmem:[%s2 + $0x30] sm:$0xff]
        %v2625 = vld [vmem:[%s2 + $0x38] sm:$0xff]
        %v2626 = vld [vmem:[%s2 + $0x40] sm:$0xff]
        %v2627 = vld [vmem:[%s2 + $0x48] sm:$0xff]
        %v2628 = vld [vmem:[%s2 + $0x50] sm:$0xff]
        %v2629 = vld [vmem:[%s2 + $0x58] sm:$0xff]
        %v2630 = vld [vmem:[%s2 + $0x60] sm:$0xff]
        %v2631 = vld [vmem:[%s2 + $0x68] sm:$0xff]
        %v2632 = vld [vmem:[%s2 + $0x70] sm:$0xff]
        %v2633 = vld [vmem:[%s2 + $0x78] sm:$0xff]
        %v2634 = vld [vmem:[%s2 + $0x80] sm:$0xff]
        %v2635 = vld [vmem:[%s2 + $0x88] sm:$0xff]
        %v2636 = vld [vmem:[%s2 + $0x90] sm:$0xff]
        %v2637 = vld [vmem:[%s2 + $0x98] sm:$0xff]
        %v2638 = vld [vmem:[%s2 + $0xa0] sm:$0xff]
        %v2639 = vld [vmem:[%s2 + $0xa8] sm:$0xff]
        %v2640 = vld [vmem:[%s2 + $0xb0] sm:$0xff]
        %v2641 = vld [vmem:[%s2 + $0xb8] sm:$0xff]
        %v2642 = vld [vmem:[%s2 + $0xc0] sm:$0xff]
        %v2643 = vld [vmem:[%s2 + $0xc8] sm:$0xff]
        %v2644 = vld [vmem:[%s2 + $0xd0] sm:$0xff]
        %v2645 = vld [vmem:[%s2 + $0xd8] sm:$0xff]
        %v2646 = vld [vmem:[%s2 + $0xe0] sm:$0xff]
        %v2647 = vld [vmem:[%s2 + $0xe8] sm:$0xff]
        %v2648 = vld [vmem:[%s2 + $0xf0] sm:$0xff]
        %v2649 = vld [vmem:[%s2 + $0xf8] sm:$0xff]
        %v2650 = vld [vmem:[%s2 + $0x100] sm:$0xff]
        %v2651 = vld [vmem:[%s2 + $0x108] sm:$0xff]
        %v2652 = vld [vmem:[%s2 + $0x110] sm:$0xff]
        %v2653 = vld [vmem:[%s2 + $0x118] sm:$0xff]
        %v2654 = vld [vmem:[%s2 + $0x120] sm:$0xff]
        %v2655 = vld [vmem:[%s2 + $0x128] sm:$0xff]
        %v2656 = vld [vmem:[%s2 + $0x130] sm:$0xff]
        %v2657 = vld [vmem:[%s2 + $0x138] sm:$0xff]
        %v2658 = vld [vmem:[%s2 + $0x140] sm:$0xff]
        %v2659 = vld [vmem:[%s2 + $0x148] sm:$0xff]
        %v2660 = vld [vmem:[%s2 + $0x150] sm:$0xff]
        %v2661 = vld [vmem:[%s2 + $0x158] sm:$0xff]
        %v2662 = vld [vmem:[%s2 + $0x160] sm:$0xff]
        %v2663 = vld [vmem:[%s2 + $0x168] sm:$0xff]
        %v2664 = vld [vmem:[%s2 + $0x170] sm:$0xff]
        %v2665 = vld [vmem:[%s2 + $0x178] sm:$0xff]
        %v2666 = vld [vmem:[%s2 + $0x180] sm:$0xff]
        %v2667 = vld [vmem:[%s2 + $0x188] sm:$0xff]
        %v2668 = vld [vmem:[%s2 + $0x190] sm:$0xff]
        %v2669 = vld [vmem:[%s2 + $0x198] sm:$0xff]
        %v2670 = vld [vmem:[%s2 + $0x1a0] sm:$0xff]
        %v2671 = vld [vmem:[%s2 + $0x1a8] sm:$0xff]
        %v2672 = vld [vmem:[%s2 + $0x1b0] sm:$0xff]
        %v2673 = vld [vmem:[%s2 + $0x1b8] sm:$0xff]
        %v2674 = vld [vmem:[%s2 + $0x1c0] sm:$0xff]
        %v2675 = vld [vmem:[%s2 + $0x1c8] sm:$0xff]
        %v2676 = vld [vmem:[%s2 + $0x1d0] sm:$0xff]
        %v2677 = vld [vmem:[%s2 + $0x1d8] sm:$0xff]
        %v2678 = vld [vmem:[%s2 + $0x1e0] sm:$0xff]
        %v2679 = vld [vmem:[%s2 + $0x1e8] sm:$0xff]
        %v2680 = vld [vmem:[%s2 + $0x1f0] sm:$0xff]
        %v2681 = vld [vmem:[%s2 + $0x1f8] sm:$0xff]
        %v2682 = vld [vmem:[%s3] sm:$0xff]
        %v2683 = vld [vmem:[%s3 + $0x8] sm:$0xff]
        %v2684 = vld [vmem:[%s3 + $0x10] sm:$0xff]
        %v2685 = vld [vmem:[%s3 + $0x18] sm:$0xff]
        %v2686 = vld [vmem:[%s3 + $0x20] sm:$0xff]
        %v2687 = vld [vmem:[%s3 + $0x28] sm:$0xff]
        %v2688 = vld [vmem:[%s3 + $0x30] sm:$0xff]
        %v2689 = vld [vmem:[%s3 + $0x38] sm:$0xff]
        %v2690 = vld [vmem:[%s3 + $0x40] sm:$0xff]
        %v2691 = vld [vmem:[%s3 + $0x48] sm:$0xff]
        %v2692 = vld [vmem:[%s3 + $0x50] sm:$0xff]
        %v2693 = vld [vmem:[%s3 + $0x58] sm:$0xff]
        %v2694 = vld [vmem:[%s3 + $0x60] sm:$0xff]
        %v2695 = vld [vmem:[%s3 + $0x68] sm:$0xff]
        %v2696 = vld [vmem:[%s3 + $0x70] sm:$0xff]
        %v2697 = vld [vmem:[%s3 + $0x78] sm:$0xff]
        %2699 = vset.pattern.permute.xlu0 0
        %2700 = vperm.xlu0 %2699, %v2682
        %v2701 = vpop.permute.xlu0 %2700
        %2704 = vset.pattern.permute.xlu0 0
        %2705 = vperm.xlu0 %2704, %v2683
        %v2706 = vpop.permute.xlu0 %2705
        %2709 = vset.pattern.permute.xlu0 0
        %2710 = vperm.xlu0 %2709, %v2684
        %v2711 = vpop.permute.xlu0 %2710
        %2714 = vset.pattern.permute.xlu0 0
        %2715 = vperm.xlu0 %2714, %v2685
        %v2716 = vpop.permute.xlu0 %2715
        %2719 = vset.pattern.permute.xlu0 0
        %2720 = vperm.xlu0 %2719, %v2686
        %v2721 = vpop.permute.xlu0 %2720
        %2724 = vset.pattern.permute.xlu0 0
        %2725 = vperm.xlu0 %2724, %v2687
        %v2726 = vpop.permute.xlu0 %2725
        %2729 = vset.pattern.permute.xlu0 0
        %2730 = vperm.xlu0 %2729, %v2688
        %v2731 = vpop.permute.xlu0 %2730
        %2734 = vset.pattern.permute.xlu0 0
        %2735 = vperm.xlu0 %2734, %v2689
        %v2736 = vpop.permute.xlu0 %2735
        %2739 = vset.pattern.permute.xlu0 0
        %2740 = vperm.xlu0 %2739, %v2690
        %v2741 = vpop.permute.xlu0 %2740
        %2744 = vset.pattern.permute.xlu0 0
        %2745 = vperm.xlu0 %2744, %v2691
        %v2746 = vpop.permute.xlu0 %2745
        %2749 = vset.pattern.permute.xlu0 0
        %2750 = vperm.xlu0 %2749, %v2692
        %v2751 = vpop.permute.xlu0 %2750
        %2754 = vset.pattern.permute.xlu0 0
        %2755 = vperm.xlu0 %2754, %v2693
        %v2756 = vpop.permute.xlu0 %2755
        %2759 = vset.pattern.permute.xlu0 0
        %2760 = vperm.xlu0 %2759, %v2694
        %v2761 = vpop.permute.xlu0 %2760
        %2764 = vset.pattern.permute.xlu0 0
        %2765 = vperm.xlu0 %2764, %v2695
        %v2766 = vpop.permute.xlu0 %2765
        %2769 = vset.pattern.permute.xlu0 0
        %2770 = vperm.xlu0 %2769, %v2696
        %v2771 = vpop.permute.xlu0 %2770
        %2774 = vset.pattern.permute.xlu0 0
        %2775 = vperm.xlu0 %2774, %v2697
        %v2776 = vpop.permute.xlu0 %2775
        %2778 = vmatpush.msra.mxu0 %v1822
        %2779 = vmatpush.msra.mxu0 %v1821
        %2780 = vmatpush.msra.mxu0 %v1820
        %2781 = vmatpush.msra.mxu0 %v1819
        %2782 = vmatpush.msra.mxu0 %v1818
        %2783 = vmatpush.msra.mxu0 %v1817
        %2784 = vmatpush.msra.mxu0 %v1816
        %2785 = vmatpush.msra.mxu0 %v1815
        %2786 = vmatpush.msra.mxu0 %v1814
        %2787 = vmatpush.msra.mxu0 %v1813
        %2788 = vmatpush.msra.mxu0 %v1812
        %2789 = vmatpush.msra.mxu0 %v1811
        %2790 = vmatpush.msra.mxu0 %v1810
        %2791 = vmatpush.msra.mxu0 %v1809
        %2792 = vmatpush.msra.mxu0 %v1808
        %2793 = vmatpush.msra.mxu0 %v1807
        %2794 = vmatmul.f32.gmra.mxu0 %v2618
        %v2795 = vpop.f32.mrf.mxu0
        %v2796 = vadd.f32 %v2701, %v2795
        %2797 = vmatmul.f32.gmra.mxu0 %v2622
        %v2798 = vpop.f32.mrf.mxu0
        %v2799 = vadd.f32 %v2706, %v2798
        %2800 = vmatmul.f32.gmra.mxu0 %v2626
        %v2801 = vpop.f32.mrf.mxu0
        %v2802 = vadd.f32 %v2711, %v2801
        %2803 = vmatmul.f32.gmra.mxu0 %v2630
        %v2804 = vpop.f32.mrf.mxu0
        %v2805 = vadd.f32 %v2716, %v2804
        %2806 = vmatmul.f32.gmra.mxu0 %v2634
        %v2807 = vpop.f32.mrf.mxu0
        %v2808 = vadd.f32 %v2721, %v2807
        %2809 = vmatmul.f32.gmra.mxu0 %v2638
        %v2810 = vpop.f32.mrf.mxu0
        %v2811 = vadd.f32 %v2726, %v2810
        %2812 = vmatmul.f32.gmra.mxu0 %v2642
        %v2813 = vpop.f32.mrf.mxu0
        %v2814 = vadd.f32 %v2731, %v2813
        %2815 = vmatmul.f32.gmra.mxu0 %v2646
        %v2816 = vpop.f32.mrf.mxu0
        %v2817 = vadd.f32 %v2736, %v2816
        %2818 = vmatmul.f32.gmra.mxu0 %v2650
        %v2819 = vpop.f32.mrf.mxu0
        %v2820 = vadd.f32 %v2741, %v2819
        %2821 = vmatmul.f32.gmra.mxu0 %v2654
        %v2822 = vpop.f32.mrf.mxu0
        %v2823 = vadd.f32 %v2746, %v2822
        %2824 = vmatmul.f32.gmra.mxu0 %v2658
        %v2825 = vpop.f32.mrf.mxu0
        %v2826 = vadd.f32 %v2751, %v2825
        %2827 = vmatmul.f32.gmra.mxu0 %v2662
        %v2828 = vpop.f32.mrf.mxu0
        %v2829 = vadd.f32 %v2756, %v2828
        %2830 = vmatmul.f32.gmra.mxu0 %v2666
        %v2831 = vpop.f32.mrf.mxu0
        %v2832 = vadd.f32 %v2761, %v2831
        %2833 = vmatmul.f32.gmra.mxu0 %v2670
        %v2834 = vpop.f32.mrf.mxu0
        %v2835 = vadd.f32 %v2766, %v2834
        %2836 = vmatmul.f32.gmra.mxu0 %v2674
        %v2837 = vpop.f32.mrf.mxu0
        %v2838 = vadd.f32 %v2771, %v2837
        %2839 = vmatmul.f32.gmra.mxu0 %v2678
        %v2840 = vpop.f32.mrf.mxu0
        %v2841 = vadd.f32 %v2776, %v2840
        %2842 = vdwg.mxu0
        %2843 = vmatpush.msra.mxu0 %v2087
        %2844 = vmatpush.msra.mxu0 %v2086
        %2845 = vmatpush.msra.mxu0 %v2085
        %2846 = vmatpush.msra.mxu0 %v2084
        %2847 = vmatpush.msra.mxu0 %v2083
        %2848 = vmatpush.msra.mxu0 %v2082
        %2849 = vmatpush.msra.mxu0 %v2081
        %2850 = vmatpush.msra.mxu0 %v2080
        %2851 = vmatpush.msra.mxu0 %v2079
        %2852 = vmatpush.msra.mxu0 %v2078
        %2853 = vmatpush.msra.mxu0 %v2077
        %2854 = vmatpush.msra.mxu0 %v2076
        %2855 = vmatpush.msra.mxu0 %v2075
        %2856 = vmatpush.msra.mxu0 %v2074
        %2857 = vmatpush.msra.mxu0 %v2073
        %2858 = vmatpush.msra.mxu0 %v2072
        %2859 = vmatmul.f32.gmra.mxu0 %v2619
        %v2860 = vpop.f32.mrf.mxu0
        %v2861 = vadd.f32 %v2796, %v2860
        %2862 = vmatmul.f32.gmra.mxu0 %v2623
        %v2863 = vpop.f32.mrf.mxu0
        %v2864 = vadd.f32 %v2799, %v2863
        %2865 = vmatmul.f32.gmra.mxu0 %v2627
        %v2866 = vpop.f32.mrf.mxu0
        %v2867 = vadd.f32 %v2802, %v2866
        %2868 = vmatmul.f32.gmra.mxu0 %v2631
        %v2869 = vpop.f32.mrf.mxu0
        %v2870 = vadd.f32 %v2805, %v2869
        %2871 = vmatmul.f32.gmra.mxu0 %v2635
        %v2872 = vpop.f32.mrf.mxu0
        %v2873 = vadd.f32 %v2808, %v2872
        %2874 = vmatmul.f32.gmra.mxu0 %v2639
        %v2875 = vpop.f32.mrf.mxu0
        %v2876 = vadd.f32 %v2811, %v2875
        %2877 = vmatmul.f32.gmra.mxu0 %v2643
        %v2878 = vpop.f32.mrf.mxu0
        %v2879 = vadd.f32 %v2814, %v2878
        %2880 = vmatmul.f32.gmra.mxu0 %v2647
        %v2881 = vpop.f32.mrf.mxu0
        %v2882 = vadd.f32 %v2817, %v2881
        %2883 = vmatmul.f32.gmra.mxu0 %v2651
        %v2884 = vpop.f32.mrf.mxu0
        %v2885 = vadd.f32 %v2820, %v2884
        %2886 = vmatmul.f32.gmra.mxu0 %v2655
        %v2887 = vpop.f32.mrf.mxu0
        %v2888 = vadd.f32 %v2823, %v2887
        %2889 = vmatmul.f32.gmra.mxu0 %v2659
        %v2890 = vpop.f32.mrf.mxu0
        %v2891 = vadd.f32 %v2826, %v2890
        %2892 = vmatmul.f32.gmra.mxu0 %v2663
        %v2893 = vpop.f32.mrf.mxu0
        %v2894 = vadd.f32 %v2829, %v2893
        %2895 = vmatmul.f32.gmra.mxu0 %v2667
        %v2896 = vpop.f32.mrf.mxu0
        %v2897 = vadd.f32 %v2832, %v2896
        %2898 = vmatmul.f32.gmra.mxu0 %v2671
        %v2899 = vpop.f32.mrf.mxu0
        %v2900 = vadd.f32 %v2835, %v2899
        %2901 = vmatmul.f32.gmra.mxu0 %v2675
        %v2902 = vpop.f32.mrf.mxu0
        %v2903 = vadd.f32 %v2838, %v2902
        %2904 = vmatmul.f32.gmra.mxu0 %v2679
        %v2905 = vpop.f32.mrf.mxu0
        %v2906 = vadd.f32 %v2841, %v2905
        %2907 = vdwg.mxu0
        %2908 = vmatpush.msra.mxu0 %v2352
        %2909 = vmatpush.msra.mxu0 %v2351
        %2910 = vmatpush.msra.mxu0 %v2350
        %2911 = vmatpush.msra.mxu0 %v2349
        %2912 = vmatpush.msra.mxu0 %v2348
        %2913 = vmatpush.msra.mxu0 %v2347
        %2914 = vmatpush.msra.mxu0 %v2346
        %2915 = vmatpush.msra.mxu0 %v2345
        %2916 = vmatpush.msra.mxu0 %v2344
        %2917 = vmatpush.msra.mxu0 %v2343
        %2918 = vmatpush.msra.mxu0 %v2342
        %2919 = vmatpush.msra.mxu0 %v2341
        %2920 = vmatpush.msra.mxu0 %v2340
        %2921 = vmatpush.msra.mxu0 %v2339
        %2922 = vmatpush.msra.mxu0 %v2338
        %2923 = vmatpush.msra.mxu0 %v2337
        %2924 = vmatmul.f32.gmra.mxu0 %v2620
        %v2925 = vpop.f32.mrf.mxu0
        %v2926 = vadd.f32 %v2861, %v2925
        %2927 = vmatmul.f32.gmra.mxu0 %v2624
        %v2928 = vpop.f32.mrf.mxu0
        %v2929 = vadd.f32 %v2864, %v2928
        %2930 = vmatmul.f32.gmra.mxu0 %v2628
        %v2931 = vpop.f32.mrf.mxu0
        %v2932 = vadd.f32 %v2867, %v2931
        %2933 = vmatmul.f32.gmra.mxu0 %v2632
        %v2934 = vpop.f32.mrf.mxu0
        %v2935 = vadd.f32 %v2870, %v2934
        %2936 = vmatmul.f32.gmra.mxu0 %v2636
        %v2937 = vpop.f32.mrf.mxu0
        %v2938 = vadd.f32 %v2873, %v2937
        %2939 = vmatmul.f32.gmra.mxu0 %v2640
        %v2940 = vpop.f32.mrf.mxu0
        %v2941 = vadd.f32 %v2876, %v2940
        %2942 = vmatmul.f32.gmra.mxu0 %v2644
        %v2943 = vpop.f32.mrf.mxu0
        %v2944 = vadd.f32 %v2879, %v2943
        %2945 = vmatmul.f32.gmra.mxu0 %v2648
        %v2946 = vpop.f32.mrf.mxu0
        %v2947 = vadd.f32 %v2882, %v2946
        %2948 = vmatmul.f32.gmra.mxu0 %v2652
        %v2949 = vpop.f32.mrf.mxu0
        %v2950 = vadd.f32 %v2885, %v2949
        %2951 = vmatmul.f32.gmra.mxu0 %v2656
        %v2952 = vpop.f32.mrf.mxu0
        %v2953 = vadd.f32 %v2888, %v2952
        %2954 = vmatmul.f32.gmra.mxu0 %v2660
        %v2955 = vpop.f32.mrf.mxu0
        %v2956 = vadd.f32 %v2891, %v2955
        %2957 = vmatmul.f32.gmra.mxu0 %v2664
        %v2958 = vpop.f32.mrf.mxu0
        %v2959 = vadd.f32 %v2894, %v2958
        %2960 = vmatmul.f32.gmra.mxu0 %v2668
        %v2961 = vpop.f32.mrf.mxu0
        %v2962 = vadd.f32 %v2897, %v2961
        %2963 = vmatmul.f32.gmra.mxu0 %v2672
        %v2964 = vpop.f32.mrf.mxu0
        %v2965 = vadd.f32 %v2900, %v2964
        %2966 = vmatmul.f32.gmra.mxu0 %v2676
        %v2967 = vpop.f32.mrf.mxu0
        %v2968 = vadd.f32 %v2903, %v2967
        %2969 = vmatmul.f32.gmra.mxu0 %v2680
        %v2970 = vpop.f32.mrf.mxu0
        %v2971 = vadd.f32 %v2906, %v2970
        %2972 = vdwg.mxu0
        %2973 = vmatpush.msra.mxu0 %v2617
        %2974 = vmatpush.msra.mxu0 %v2616
        %2975 = vmatpush.msra.mxu0 %v2615
        %2976 = vmatpush.msra.mxu0 %v2614
        %2977 = vmatpush.msra.mxu0 %v2613
        %2978 = vmatpush.msra.mxu0 %v2612
        %2979 = vmatpush.msra.mxu0 %v2611
        %2980 = vmatpush.msra.mxu0 %v2610
        %2981 = vmatpush.msra.mxu0 %v2609
        %2982 = vmatpush.msra.mxu0 %v2608
        %2983 = vmatpush.msra.mxu0 %v2607
        %2984 = vmatpush.msra.mxu0 %v2606
        %2985 = vmatpush.msra.mxu0 %v2605
        %2986 = vmatpush.msra.mxu0 %v2604
        %2987 = vmatpush.msra.mxu0 %v2603
        %2988 = vmatpush.msra.mxu0 %v2602
        %2989 = vmatmul.f32.gmra.mxu0 %v2621
        %v2990 = vpop.f32.mrf.mxu0
        %v2991 = vadd.f32 %v2926, %v2990
        %2992 = vmatmul.f32.gmra.mxu0 %v2625
        %v2993 = vpop.f32.mrf.mxu0
        %v2994 = vadd.f32 %v2929, %v2993
        %2995 = vmatmul.f32.gmra.mxu0 %v2629
        %v2996 = vpop.f32.mrf.mxu0
        %v2997 = vadd.f32 %v2932, %v2996
        %2998 = vmatmul.f32.gmra.mxu0 %v2633
        %v2999 = vpop.f32.mrf.mxu0
        %v3000 = vadd.f32 %v2935, %v2999
        %3001 = vmatmul.f32.gmra.mxu0 %v2637
        %v3002 = vpop.f32.mrf.mxu0
        %v3003 = vadd.f32 %v2938, %v3002
        %3004 = vmatmul.f32.gmra.mxu0 %v2641
        %v3005 = vpop.f32.mrf.mxu0
        %v3006 = vadd.f32 %v2941, %v3005
        %3007 = vmatmul.f32.gmra.mxu0 %v2645
        %v3008 = vpop.f32.mrf.mxu0
        %v3009 = vadd.f32 %v2944, %v3008
        %3010 = vmatmul.f32.gmra.mxu0 %v2649
        %v3011 = vpop.f32.mrf.mxu0
        %v3012 = vadd.f32 %v2947, %v3011
        %3013 = vmatmul.f32.gmra.mxu0 %v2653
        %v3014 = vpop.f32.mrf.mxu0
        %v3015 = vadd.f32 %v2950, %v3014
        %3016 = vmatmul.f32.gmra.mxu0 %v2657
        %v3017 = vpop.f32.mrf.mxu0
        %v3018 = vadd.f32 %v2953, %v3017
        %3019 = vmatmul.f32.gmra.mxu0 %v2661
        %v3020 = vpop.f32.mrf.mxu0
        %v3021 = vadd.f32 %v2956, %v3020
        %3022 = vmatmul.f32.gmra.mxu0 %v2665
        %v3023 = vpop.f32.mrf.mxu0
        %v3024 = vadd.f32 %v2959, %v3023
        %3025 = vmatmul.f32.gmra.mxu0 %v2669
        %v3026 = vpop.f32.mrf.mxu0
        %v3027 = vadd.f32 %v2962, %v3026
        %3028 = vmatmul.f32.gmra.mxu0 %v2673
        %v3029 = vpop.f32.mrf.mxu0
        %v3030 = vadd.f32 %v2965, %v3029
        %3031 = vmatmul.f32.gmra.mxu0 %v2677
        %v3032 = vpop.f32.mrf.mxu0
        %v3033 = vadd.f32 %v2968, %v3032
        %3034 = vmatmul.f32.gmra.mxu0 %v2681
        %v3035 = vpop.f32.mrf.mxu0
        %v3036 = vadd.f32 %v2971, %v3035
        %3037 = vdwg.mxu0
        %v3038 = vld [vmem:[%s4] sm:$0xff]
        %3039 = vmatpush.msra.mxu0 %v3036
        %3040 = vmatpush.msra.mxu0 %v3033
        %3041 = vmatpush.msra.mxu0 %v3030
        %3042 = vmatpush.msra.mxu0 %v3027
        %3043 = vmatpush.msra.mxu0 %v3024
        %3044 = vmatpush.msra.mxu0 %v3021
        %3045 = vmatpush.msra.mxu0 %v3018
        %3046 = vmatpush.msra.mxu0 %v3015
        %3047 = vmatpush.msra.mxu0 %v3012
        %3048 = vmatpush.msra.mxu0 %v3009
        %3049 = vmatpush.msra.mxu0 %v3006
        %3050 = vmatpush.msra.mxu0 %v3003
        %3051 = vmatpush.msra.mxu0 %v3000
        %3052 = vmatpush.msra.mxu0 %v2997
        %3053 = vmatpush.msra.mxu0 %v2994
        %3054 = vmatpush.msra.mxu0 %v2991
        %3055 = vmatmul.f32.gmra.mxu0 %v3038
        %v3056 = vpop.f32.mrf.mxu0
        %v3057 = vadd.f32 0.0, %v3056
        %3058 = vdwg.mxu0
        %3059 = vst [vmem:[%s773] sm:$0xff] %v3057
        %s3060 = sand.u32 %s137, 1
        %s3061 = scalar_lea.sflag [#allocation4], %s3060
        %s3062 = sand.u32 %s137, 1
        %s3063 = smul.addr %s3062, 8
        %s3064 = scalar_lea.vmem [#allocation3], %s3063
        // Predicated region
        $region82: #{zsl_forward.1} parent=76 // pred_check
          %p3065 = pneg %p147
        $region83: #{zsl_forward.1} parent=76 // pred_check_branch
          %3067 = sbr.rel (%p3065) target = $region85
        $region84: #{zsl_forward.1} parent=76 // pred_region
          %3069 = vsyncadd %s3061, 0
          %s3070 = smul.addr %s19, 8
          %s3071 = scalar_lea.hbm %s5, %s3070
          %s3073 = sshll.u32 %s3064, 4
          %s3074 = int_to_ptr.vmem [resolvable:$true] %s3073
          %s3075 = sshll.u32 %s3071, 4
          %s3076 = int_to_ptr.hbm [resolvable:$true] %s3075
          %3078 = dma.vmem_to_hbm [thread:$0]  %s3074, 128, %s3076, %s3061
        $region85: #{zsl_forward.1} parent=76 // pred_fallthru
          _
      $region77: #{zsl_forward.1} parent=5 // pred_fallthru
        _
      %p3079 = scmp.le.s32.totalorder 2, %s14
      // Predicated region
      $region86: #{zsl_forward.1} parent=5 // pred_check
        %p3080 = pneg %p3079
      $region87: #{zsl_forward.1} parent=5 // pred_check_branch
        %3082 = sbr.rel (%p3080) target = $region89
      $region88: #{zsl_forward.1} parent=5 // pred_region
        %s3083 = ssub.s32 %s14, 2
        // Predicated region
        $region90: #{zsl_forward.1} parent=88 // pred_check
          %p3084 = pneg %p153
        $region91: #{zsl_forward.1} parent=88 // pred_check_branch
          %3086 = sbr.rel (%p3084) target = $region93
        $region92: #{zsl_forward.1} parent=88 // pred_region
          %s3087 = sand.u32 %s138, 1
          %s3088 = scalar_lea.sflag [#allocation4], %s3087
          %s3089 = sand.u32 %s138, 1
          %s3090 = smul.addr %s3089, 8
          %s3091 = scalar_lea.vmem [#allocation3], %s3090
          %3093 = dma.done %s3088, 128
        $region93: #{zsl_forward.1} parent=88 // pred_fallthru
          _
      $region89: #{zsl_forward.1} parent=5 // pred_fallthru
        _
    $region6: #{zsl_forward.1} parent=1 // loop_footer
      %s18 = sadd.s32 1, %s14
    $region7: #{zsl_forward.1} parent=1 // loop_footer_branch
      %13 = sbr.rel target = $region3
    $region8: #{zsl_forward.1} parent=1 // loop_exit
      _
    %3094 = vsyncpa [#allocation4], 1
    %s3095 = scalar_lea.sflag [#allocation4], 1
    %3096 = vsyncpa %s3095, 1

</llo_original>
